<compile_context>
chip_gen: v6e
topology: v6e:2x2x1
jax: 0.10.0
libtpu: 0.0.40
codegen_flags: <defaults>
</compile_context>

<pallas_src>
import functools
import math

import jax
import jax.numpy as jnp
from jax.experimental import pallas as pl
from jax.experimental.pallas import tpu as pltpu


_SQRT1_2 = 1.0 / math.sqrt(2.0)
_GN_EPS = 1e-6
_LN_EPS = 1e-5
_NUM_GROUPS = 32

# Column indices into the packed (C, 11) parameter-column array.
_V_BCI = 0
_V_LN1G, _V_LN1B, _V_BO1 = 1, 2, 3
_V_LN2G, _V_LN2B, _V_BO2 = 4, 5, 6
_V_LN3G, _V_LN3B = 7, 8
_V_B2, _V_BCO = 9, 10

# Slabs in the packed (4, C, C) square-weight array (already transposed: W^T).
_W_CI, _W_O1, _W_O2, _W_CO = 0, 1, 2, 3


def _erf_gelu(g):
    # exact GELU (matches torch.nn.functional.gelu default)
    return 0.5 * g * (1.0 + jax.lax.erf(g * _SQRT1_2))


def _layer_norm_cm(h, gamma, beta):
    """LayerNorm over channels for channel-major (C, T) activations.
    gamma/beta are (C, 1) columns; the reduction is sublane-direction."""
    mu = jnp.mean(h, axis=0, keepdims=True)                     # (1, T)
    var = jnp.mean(jnp.square(h - mu), axis=0, keepdims=True)   # (1, T)
    return (h - mu) * jax.lax.rsqrt(var + _LN_EPS) * gamma + beta


def _block_kernel(
    x_ref,      # (1, C, HW)  f32   one batch element, channel-major (NCHW flat)
    gmat_ref,   # (C, C)      f32   GN group membership / (HW * group_size)
    vec_ref,    # (C, 11)     f32   packed per-channel affine/bias columns
    ffnb_ref,   # (4C, 2)     f32   linear_1 bias split into [a | gate] columns
    wsq_ref,    # (4, C, C)   bf16  W^T: conv_input(+GN affine), out1, out2, conv_out
    w1s_ref,    # (2, 4C, C)  bf16  linear_1^T split into GeGLU halves
    w2t_ref,    # (C, 4C)     bf16  linear_2^T
    out_ref,    # (1, C, TT)  f32   one token tile of the output
    stat_ref,   # (C, 2)      f32   scratch: GroupNorm [mean | rstd] columns
):
    _, C, HW = x_ref.shape
    TT = out_ref.shape[2]
    t = pl.program_id(1)

    def vcol(i):                           # (C, 1) parameter column
        return vec_ref[:, pl.ds(i, 1)]

    def mm(w_t, a):                        # channel-major matmul: bf16 MXU, f32 acc
        return jnp.dot(w_t, a.astype(jnp.bfloat16),
                       preferred_element_type=jnp.float32)

    # ---- GroupNorm(32, C) statistics: once per batch element (token tile 0),
    #      over the full HW extent; stored in scratch for the remaining tiles.
    @pl.when(t == 0)
    def _():
        x_full = x_ref[0]                                           # (C, HW)
        ch_sum = jnp.sum(x_full, axis=1, keepdims=True)             # (C, 1)
        ch_sq = jnp.sum(x_full * x_full, axis=1, keepdims=True)     # (C, 1)
        stats = jnp.concatenate([ch_sum, ch_sq], axis=1)            # (C, 2)
        # Host-precomputed group-membership matrix broadcasts group mean /
        # E[x^2] back to channels (no per-step iota/compare/select).
        gstats = jnp.dot(gmat_ref[...], stats,
                         preferred_element_type=jnp.float32)        # (C, 2)
        mean = gstats[:, 0:1]
        # E[x^2] - mean^2 can cancel for large-mean inputs; clamp for robustness.
        var = jnp.maximum(gstats[:, 1:2] - mean * mean, 0.0)
        stat_ref[...] = jnp.concatenate(
            [mean, jax.lax.rsqrt(var + _GN_EPS)], axis=1)

    mean = stat_ref[:, 0:1]
    rstd = stat_ref[:, 1:2]

    # ---- per-token-tile pipeline, channel-major end-to-end (no transposes).
    start = pl.multiple_of(t * TT, TT)
    x_in = x_ref[0, :, pl.ds(start, TT)]                            # (C, TT)
    xhat = (x_in - mean) * rstd     # GN affine folded into conv_input weights

    # conv_input: 1x1 conv == per-channel linear.
    x = mm(wsq_ref[_W_CI], xhat) + vcol(_V_BCI)

    # "self-attention" branch (MHA output is dead code in the reference).
    h = _layer_norm_cm(x, vcol(_V_LN1G), vcol(_V_LN1B))
    x = mm(wsq_ref[_W_O1], h) + vcol(_V_BO1) + x

    # "cross-attention" branch (context unused by the reference math).
    h = _layer_norm_cm(x, vcol(_V_LN2G), vcol(_V_LN2B))
    x = mm(wsq_ref[_W_O2], h) + vcol(_V_BO2) + x

    # GeGLU feed-forward; linear_1 pre-split so the (8C, TT) intermediate is
    # never materialized, and intermediates are bounded by the token tile.
    h = _layer_norm_cm(x, vcol(_V_LN3G), vcol(_V_LN3B))
    hb = h.astype(jnp.bfloat16)
    a = jnp.dot(w1s_ref[0], hb, preferred_element_type=jnp.float32) \
        + ffnb_ref[:, pl.ds(0, 1)]                                  # (4C, TT)
    g = jnp.dot(w1s_ref[1], hb, preferred_element_type=jnp.float32) \
        + ffnb_ref[:, pl.ds(1, 1)]
    # Exact erf-GELU kept in f32 (v5e has no bf16 VPU; bf16 gate is a
    # v6e/v7x-only micro-opt with looser fidelity).
    a = a * _erf_gelu(g)
    x = mm(w2t_ref[...], a) + vcol(_V_B2) + x

    # conv_output (1x1) + long residual; output already channel-major / lane-dense.
    out_ref[0] = mm(wsq_ref[_W_CO], x) + vcol(_V_BCO) + x_in


@functools.partial(jax.jit, static_argnames=("token_tile",))
def contextual_attention_block(x_nchw, context, params, token_tile=None):
    """x_nchw: (B, C, H, W) f32. context: unused by the reference math."""
    del context  # dead in the reference: the MHA output is discarded
    B, C, H, W = x_nchw.shape
    HW = H * W
    if token_tile is None:
        token_tile = next((tt for tt in (512, 256, 128) if HW % tt == 0), HW)
    assert HW % token_tile == 0, (HW, token_tile)
    T = HW // token_tile
    x_flat = x_nchw.reshape(B, C, HW)               # metadata reshape only

    p = params
    # Fold the GroupNorm affine into conv_input (channel-major / transposed):
    #   (diag(g) W)^T = W^T diag(g)  ->  scale columns of W^T by g
    wci_eff_t = p["w_ci"].T * p["gn_g"]                            # (C, C)
    bci_eff = p["b_ci"] + p["gn_b"] @ p["w_ci"]                    # (1, C)

    vecs = jnp.concatenate(
        [bci_eff.T,
         p["ln1_g"].T, p["ln1_b"].T, p["bo1"].T,
         p["ln2_g"].T, p["ln2_b"].T, p["bo2"].T,
         p["ln3_g"].T, p["ln3_b"].T,
         p["b2"].T, p["b_co"].T], axis=1).astype(jnp.float32)      # (C, 11)
    ffn_b = p["b1"].reshape(2, 4 * C).T.astype(jnp.float32)        # (4C, 2) [a|gate]
    wsq = jnp.stack([wci_eff_t, p["wo1"].T, p["wo2"].T, p["w_co"].T],
                    axis=0).astype(jnp.bfloat16)                   # (4, C, C)
    w1s = jnp.stack([p["w1"][:, :4 * C].T, p["w1"][:, 4 * C:].T],
                    axis=0).astype(jnp.bfloat16)                   # (2, 4C, C)
    w2t = p["w2"].T.astype(jnp.bfloat16)                           # (C, 4C)

    # GroupNorm group-membership matrix, precomputed with the mean scale folded in.
    gs = C // _NUM_GROUPS
    grp = jnp.arange(C, dtype=jnp.int32) // gs
    gmat = (grp[:, None] == grp[None, :]).astype(jnp.float32) / float(HW * gs)

    # Parameters: full-array blocks, constant index maps (one DMA for the whole
    # grid), single-buffered so they are not double-allocated in VMEM.
    wspec = dict(pipeline_mode=pl.Buffered(1))
    in_specs = [
        pl.BlockSpec((1, C, HW), lambda b, t: (b, 0, 0)),          # revisited per b
        pl.BlockSpec(gmat.shape, lambda b, t: (0, 0), **wspec),
        pl.BlockSpec(vecs.shape, lambda b, t: (0, 0), **wspec),
        pl.BlockSpec(ffn_b.shape, lambda b, t: (0, 0), **wspec),
        pl.BlockSpec(wsq.shape, lambda b, t: (0, 0, 0), **wspec),
        pl.BlockSpec(w1s.shape, lambda b, t: (0, 0, 0), **wspec),
        pl.BlockSpec(w2t.shape, lambda b, t: (0, 0), **wspec),
    ]

    out_flat = pl.pallas_call(
        _block_kernel,
        out_shape=jax.ShapeDtypeStruct((B, C, HW), jnp.float32),
        grid=(B, T),
        in_specs=in_specs,
        out_specs=pl.BlockSpec((1, C, token_tile), lambda b, t: (b, 0, t)),
        scratch_shapes=[pltpu.VMEM((C, 2), jnp.float32)],          # GN [mean|rstd]
        compiler_params=pltpu.CompilerParams(
            dimension_semantics=("parallel", "arbitrary"),  # megacore over batch
            vmem_limit_bytes=48 * 1024 * 1024),
    )(x_flat, gmat, vecs, ffn_b, wsq, w1s, w2t)

    return out_flat.reshape(B, C, H, W)


def init_params(key, C):
    """Deterministic synthetic parameters. Weight matrices are stored as
    (in_features, out_features) so the reference math is x @ W + b."""
    ks = jax.random.split(key, 20)

    def lin(k, fan_in, fan_out):
        return jax.random.normal(k, (fan_in, fan_out), jnp.float32) / math.sqrt(fan_in)

    def vec(k, n, scale=0.05, offset=0.0):
        return offset + scale * jax.random.normal(k, (1, n), jnp.float32)

    return dict(
        gn_g=vec(ks[0], C, offset=1.0), gn_b=vec(ks[1], C),
        w_ci=lin(ks[2], C, C), b_ci=vec(ks[3], C),
        ln1_g=vec(ks[4], C, offset=1.0), ln1_b=vec(ks[5], C),
        wo1=lin(ks[6], C, C), bo1=vec(ks[7], C),
        ln2_g=vec(ks[8], C, offset=1.0), ln2_b=vec(ks[9], C),
        wo2=lin(ks[10], C, C), bo2=vec(ks[11], C),
        ln3_g=vec(ks[12], C, offset=1.0), ln3_b=vec(ks[13], C),
        w1=lin(ks[14], C, 8 * C), b1=vec(ks[15], 8 * C),
        w2=lin(ks[16], 4 * C, C), b2=vec(ks[17], C),
        w_co=lin(ks[18], C, C), b_co=vec(ks[19], C),
    )


def _reference(x_nchw, params):
    """Pure-JAX f32 reference of the (effective) forward pass for validation."""
    p = params
    B, C, H, W = x_nchw.shape
    HW = H * W
    xi = jnp.transpose(x_nchw.reshape(B, C, HW), (0, 2, 1))        # (B, HW, C)

    gs = C // _NUM_GROUPS
    xg = xi.reshape(B, HW, _NUM_GROUPS, gs)
    mu = xg.mean(axis=(1, 3), keepdims=True)
    var = ((xg - mu) ** 2).mean(axis=(1, 3), keepdims=True)
    h = ((xg - mu) / jnp.sqrt(var + _GN_EPS)).reshape(B, HW, C)
    h = h * p["gn_g"] + p["gn_b"]

    def ln(a, g, b):
        m = a.mean(axis=-1, keepdims=True)
        v = ((a - m) ** 2).mean(axis=-1, keepdims=True)
        return (a - m) / jnp.sqrt(v + _LN_EPS) * g + b

    h = h @ p["w_ci"] + p["b_ci"]
    res = h
    h = ln(h, p["ln1_g"], p["ln1_b"]) @ p["wo1"] + p["bo1"] + res
    res = h
    h = ln(h, p["ln2_g"], p["ln2_b"]) @ p["wo2"] + p["bo2"] + res
    res = h
    hh = ln(h, p["ln3_g"], p["ln3_b"]) @ p["w1"] + p["b1"]
    a, g = hh[..., :4 * C], hh[..., 4 * C:]
    h = (a * _erf_gelu(g)) @ p["w2"] + p["b2"] + res
    h = h @ p["w_co"] + p["b_co"] + xi
    return jnp.transpose(h, (0, 2, 1)).reshape(B, C, H, W)


if __name__ == "__main__":
    num_heads, n_embed = 4, 32
    C = num_heads * n_embed          # 128 channels (divisible by 32 groups, lane-aligned)
    B, H, W = 2, 16, 16              # HW = 256 tokens per batch element
    d_context, seq_ctx = 96, 10

    key = jax.random.PRNGKey(0)
    kx, kc, kp = jax.random.split(key, 3)
    x = jax.random.normal(kx, (B, C, H, W), jnp.float32)
    context = jax.random.normal(kc, (B, seq_ctx, d_context), jnp.float32)
    params = init_params(kp, C)

    # token_tile=128 -> 2 token tiles per batch element (exercises the tiled path).
    out = contextual_attention_block(x, context, params, token_tile=128)
    out = jax.block_until_ready(out)

    assert out.shape == (B, C, H, W), out.shape
    ref = _reference(x, params)
    err = float(jnp.max(jnp.abs(out - ref)))
    scale = float(jnp.max(jnp.abs(ref)))
    # bf16 MXU operands (f32 accumulation) => loosened tolerance vs f32 reference.
    assert err <= 5e-2 * scale + 1e-3, (err, scale)
    print("KERNEL_OK")
</pallas_src>

<mosaic_0001>
module attributes {stable_mosaic.version = 11 : i64} {
  func.func @_block_kernel(%arg0: i32, %arg1: i32, %arg2: memref<1x128x256xf32, #tpu.memory_space<vmem>>, %arg3: memref<128x128xf32, #tpu.memory_space<vmem>>, %arg4: memref<128x11xf32, #tpu.memory_space<vmem>>, %arg5: memref<512x2xf32, #tpu.memory_space<vmem>>, %arg6: memref<4x128x128xbf16, #tpu.memory_space<vmem>>, %arg7: memref<2x512x128xbf16, #tpu.memory_space<vmem>>, %arg8: memref<128x512xbf16, #tpu.memory_space<vmem>>, %arg9: memref<1x128x128xf32, #tpu.memory_space<vmem>>, %arg10: memref<128x2xf32, #tpu.memory_space<vmem>>) attributes {dimension_semantics = [#tpu.dimension_semantics<parallel>, #tpu.dimension_semantics<arbitrary>], iteration_bounds = array<i64: 2, 2>, scalar_prefetch = 0 : i64, scratch_operands = 1 : i64, tpu.core_type = #tpu.core_type<tc>, window_params = [{transform_indices = @transform_0, window_bounds = array<i64: 1, 128, 256>}, {pipeline_mode = #tpu.pipeline_mode<synchronous>, transform_indices = @transform_1, window_bounds = array<i64: 128, 128>}, {pipeline_mode = #tpu.pipeline_mode<synchronous>, transform_indices = @transform_2, window_bounds = array<i64: 128, 11>}, {pipeline_mode = #tpu.pipeline_mode<synchronous>, transform_indices = @transform_3, window_bounds = array<i64: 512, 2>}, {pipeline_mode = #tpu.pipeline_mode<synchronous>, transform_indices = @transform_4, window_bounds = array<i64: 4, 128, 128>}, {pipeline_mode = #tpu.pipeline_mode<synchronous>, transform_indices = @transform_5, window_bounds = array<i64: 2, 512, 128>}, {pipeline_mode = #tpu.pipeline_mode<synchronous>, transform_indices = @transform_6, window_bounds = array<i64: 128, 512>}, {transform_indices = @transform_7, window_bounds = array<i64: 1, 128, 128>}]} {
    %c0_i32 = arith.constant 0 : i32
    %0 = arith.cmpi eq, %arg1, %c0_i32 : i32
    %1 = arith.extui %0 : i1 to i32
    %c0_i32_0 = arith.constant 0 : i32
    %2 = arith.cmpi ne, %1, %c0_i32_0 : i32
    scf.if %2 {
      %c0_69 = arith.constant 0 : index
      %c0_70 = arith.constant 0 : index
      %c0_71 = arith.constant 0 : index
      %149 = vector.load %arg2[%c0_69, %c0_70, %c0_71] : memref<1x128x256xf32, #tpu.memory_space<vmem>>, vector<1x128x256xf32>
      %150 = vector.shape_cast %149 : vector<1x128x256xf32> to vector<128x256xf32>
      %cst_72 = arith.constant dense<0.000000e+00> : vector<128xf32>
      %151 = vector.multi_reduction <add>, %150, %cst_72 [1] : vector<128x256xf32> to vector<128xf32>
      %152 = vector.shape_cast %151 : vector<128xf32> to vector<128x1xf32>
      %153 = arith.mulf %150, %150 : vector<128x256xf32>
      %cst_73 = arith.constant dense<0.000000e+00> : vector<128xf32>
      %154 = vector.multi_reduction <add>, %153, %cst_73 [1] : vector<128x256xf32> to vector<128xf32>
      %155 = vector.shape_cast %154 : vector<128xf32> to vector<128x1xf32>
      %156 = tpu.concatenate %152, %155 in 1 : vector<128x1xf32>, vector<128x1xf32> -> vector<128x2xf32>
      %c0_74 = arith.constant 0 : index
      %c0_75 = arith.constant 0 : index
      %157 = vector.load %arg3[%c0_74, %c0_75] : memref<128x128xf32, #tpu.memory_space<vmem>>, vector<128x128xf32>
      %cst_76 = arith.constant dense<0.000000e+00> : vector<128x2xf32>
      %158 = tpu.matmul %157, %156, %cst_76 {dimension_numbers = #tpu.dot_dimension_numbers<[1], [0], [0], [1], [0, 0, 1, 1], [], []>} : vector<128x128xf32>, vector<128x2xf32>, vector<128x2xf32> -> vector<128x2xf32>
      %159 = vector.extract_strided_slice %158 {offsets = [0, 0], sizes = [128, 1], strides = [1, 1]} : vector<128x2xf32> to vector<128x1xf32>
      %160 = vector.extract_strided_slice %158 {offsets = [0, 1], sizes = [128, 1], strides = [1, 1]} : vector<128x2xf32> to vector<128x1xf32>
      %161 = arith.mulf %159, %159 : vector<128x1xf32>
      %162 = arith.subf %160, %161 : vector<128x1xf32>
      %cst_77 = arith.constant 0.000000e+00 : f32
      %163 = vector.broadcast %cst_77 : f32 to vector<128x1xf32>
      %164 = arith.maximumf %162, %163 : vector<128x1xf32>
      %cst_78 = arith.constant 9.99999997E-7 : f32
      %165 = vector.broadcast %cst_78 : f32 to vector<128x1xf32>
      %166 = arith.addf %164, %165 : vector<128x1xf32>
      %167 = math.rsqrt %166 : vector<128x1xf32>
      %168 = tpu.concatenate %159, %167 in 1 : vector<128x1xf32>, vector<128x1xf32> -> vector<128x2xf32>
      %c0_79 = arith.constant 0 : index
      %c0_80 = arith.constant 0 : index
      %169 = vector.load %arg10[%c0_79, %c0_80] : memref<128x2xf32, #tpu.memory_space<vmem>>, vector<128x2xf32>
      tpu.vector_store %arg10[%c0_79, %c0_80], %168 {strides = array<i32>} : memref<128x2xf32, #tpu.memory_space<vmem>>, vector<128x2xf32>,
    } else {
    }
    %c0 = arith.constant 0 : index
    %c0_1 = arith.constant 0 : index
    %3 = vector.load %arg10[%c0, %c0_1] : memref<128x2xf32, #tpu.memory_space<vmem>>, vector<128x1xf32>
    %c0_2 = arith.constant 0 : index
    %c1 = arith.constant 1 : index
    %4 = vector.load %arg10[%c0_2, %c1] : memref<128x2xf32, #tpu.memory_space<vmem>>, vector<128x1xf32>
    %c128_i32 = arith.constant 128 : i32
    %5 = arith.muli %arg1, %c128_i32 : i32
    %6 = tpu.assume_multiple %5, 128 : i32
    %c0_3 = arith.constant 0 : index
    %c0_4 = arith.constant 0 : index
    %7 = arith.index_cast %6 : i32 to index
    %8 = vector.load %arg2[%c0_3, %c0_4, %7] : memref<1x128x256xf32, #tpu.memory_space<vmem>>, vector<1x128x128xf32>
    %9 = vector.shape_cast %8 : vector<1x128x128xf32> to vector<128x128xf32>
    %10 = vector.broadcast %3 : vector<128x1xf32> to vector<128x128xf32>
    %11 = arith.subf %9, %10 : vector<128x128xf32>
    %12 = vector.broadcast %4 : vector<128x1xf32> to vector<128x128xf32>
    %13 = arith.mulf %11, %12 : vector<128x128xf32>
    %c0_5 = arith.constant 0 : index
    %c0_6 = arith.constant 0 : index
    %c0_7 = arith.constant 0 : index
    %14 = vector.load %arg6[%c0_5, %c0_6, %c0_7] : memref<4x128x128xbf16, #tpu.memory_space<vmem>>, vector<1x128x128xbf16>
    %15 = vector.shape_cast %14 : vector<1x128x128xbf16> to vector<128x128xbf16>
    %16 = arith.truncf %13 : vector<128x128xf32> to vector<128x128xbf16>
    %cst = arith.constant dense<0.000000e+00> : vector<128x128xf32>
    %17 = tpu.matmul %15, %16, %cst {dimension_numbers = #tpu.dot_dimension_numbers<[1], [0], [0], [1], [0, 0, 1, 1], [], []>} : vector<128x128xbf16>, vector<128x128xbf16>, vector<128x128xf32> -> vector<128x128xf32>
    %c0_8 = arith.constant 0 : index
    %c0_9 = arith.constant 0 : index
    %18 = vector.load %arg4[%c0_8, %c0_9] : memref<128x11xf32, #tpu.memory_space<vmem>>, vector<128x1xf32>
    %19 = vector.broadcast %18 : vector<128x1xf32> to vector<128x128xf32>
    %20 = arith.addf %17, %19 : vector<128x128xf32>
    %c0_10 = arith.constant 0 : index
    %c1_11 = arith.constant 1 : index
    %21 = vector.load %arg4[%c0_10, %c1_11] : memref<128x11xf32, #tpu.memory_space<vmem>>, vector<128x1xf32>
    %c0_12 = arith.constant 0 : index
    %c2 = arith.constant 2 : index
    %22 = vector.load %arg4[%c0_12, %c2] : memref<128x11xf32, #tpu.memory_space<vmem>>, vector<128x1xf32>
    %cst_13 = arith.constant dense<0.000000e+00> : vector<128xf32>
    %23 = vector.multi_reduction <add>, %20, %cst_13 [0] : vector<128x128xf32> to vector<128xf32>
    %24 = vector.shape_cast %23 : vector<128xf32> to vector<1x128xf32>
    %cst_14 = arith.constant 1.280000e+02 : f32
    %25 = vector.broadcast %cst_14 : f32 to vector<1x128xf32>
    %26 = arith.divf %24, %25 : vector<1x128xf32>
    %27 = vector.broadcast %26 : vector<1x128xf32> to vector<128x128xf32>
    %28 = arith.subf %20, %27 : vector<128x128xf32>
    %29 = arith.mulf %28, %28 : vector<128x128xf32>
    %cst_15 = arith.constant dense<0.000000e+00> : vector<128xf32>
    %30 = vector.multi_reduction <add>, %29, %cst_15 [0] : vector<128x128xf32> to vector<128xf32>
    %31 = vector.shape_cast %30 : vector<128xf32> to vector<1x128xf32>
    %cst_16 = arith.constant 1.280000e+02 : f32
    %32 = vector.broadcast %cst_16 : f32 to vector<1x128xf32>
    %33 = arith.divf %31, %32 : vector<1x128xf32>
    %34 = vector.broadcast %26 : vector<1x128xf32> to vector<128x128xf32>
    %35 = arith.subf %20, %34 : vector<128x128xf32>
    %cst_17 = arith.constant 9.99999974E-6 : f32
    %36 = vector.broadcast %cst_17 : f32 to vector<1x128xf32>
    %37 = arith.addf %33, %36 : vector<1x128xf32>
    %38 = math.rsqrt %37 : vector<1x128xf32>
    %39 = vector.broadcast %38 : vector<1x128xf32> to vector<128x128xf32>
    %40 = arith.mulf %35, %39 : vector<128x128xf32>
    %41 = vector.broadcast %21 : vector<128x1xf32> to vector<128x128xf32>
    %42 = arith.mulf %40, %41 : vector<128x128xf32>
    %43 = vector.broadcast %22 : vector<128x1xf32> to vector<128x128xf32>
    %44 = arith.addf %42, %43 : vector<128x128xf32>
    %c1_18 = arith.constant 1 : index
    %c0_19 = arith.constant 0 : index
    %c0_20 = arith.constant 0 : index
    %45 = vector.load %arg6[%c1_18, %c0_19, %c0_20] : memref<4x128x128xbf16, #tpu.memory_space<vmem>>, vector<1x128x128xbf16>
    %46 = vector.shape_cast %45 : vector<1x128x128xbf16> to vector<128x128xbf16>
    %47 = arith.truncf %44 : vector<128x128xf32> to vector<128x128xbf16>
    %cst_21 = arith.constant dense<0.000000e+00> : vector<128x128xf32>
    %48 = tpu.matmul %46, %47, %cst_21 {dimension_numbers = #tpu.dot_dimension_numbers<[1], [0], [0], [1], [0, 0, 1, 1], [], []>} : vector<128x128xbf16>, vector<128x128xbf16>, vector<128x128xf32> -> vector<128x128xf32>
    %c0_22 = arith.constant 0 : index
    %c3 = arith.constant 3 : index
    %49 = vector.load %arg4[%c0_22, %c3] : memref<128x11xf32, #tpu.memory_space<vmem>>, vector<128x1xf32>
    %50 = vector.broadcast %49 : vector<128x1xf32> to vector<128x128xf32>
    %51 = arith.addf %48, %50 : vector<128x128xf32>
    %52 = arith.addf %51, %20 : vector<128x128xf32>
    %c0_23 = arith.constant 0 : index
    %c4 = arith.constant 4 : index
    %53 = vector.load %arg4[%c0_23, %c4] : memref<128x11xf32, #tpu.memory_space<vmem>>, vector<128x1xf32>
    %c0_24 = arith.constant 0 : index
    %c5 = arith.constant 5 : index
    %54 = vector.load %arg4[%c0_24, %c5] : memref<128x11xf32, #tpu.memory_space<vmem>>, vector<128x1xf32>
    %cst_25 = arith.constant dense<0.000000e+00> : vector<128xf32>
    %55 = vector.multi_reduction <add>, %52, %cst_25 [0] : vector<128x128xf32> to vector<128xf32>
    %56 = vector.shape_cast %55 : vector<128xf32> to vector<1x128xf32>
    %cst_26 = arith.constant 1.280000e+02 : f32
    %57 = vector.broadcast %cst_26 : f32 to vector<1x128xf32>
    %58 = arith.divf %56, %57 : vector<1x128xf32>
    %59 = vector.broadcast %58 : vector<1x128xf32> to vector<128x128xf32>
    %60 = arith.subf %52, %59 : vector<128x128xf32>
    %61 = arith.mulf %60, %60 : vector<128x128xf32>
    %cst_27 = arith.constant dense<0.000000e+00> : vector<128xf32>
    %62 = vector.multi_reduction <add>, %61, %cst_27 [0] : vector<128x128xf32> to vector<128xf32>
    %63 = vector.shape_cast %62 : vector<128xf32> to vector<1x128xf32>
    %cst_28 = arith.constant 1.280000e+02 : f32
    %64 = vector.broadcast %cst_28 : f32 to vector<1x128xf32>
    %65 = arith.divf %63, %64 : vector<1x128xf32>
    %66 = vector.broadcast %58 : vector<1x128xf32> to vector<128x128xf32>
    %67 = arith.subf %52, %66 : vector<128x128xf32>
    %cst_29 = arith.constant 9.99999974E-6 : f32
    %68 = vector.broadcast %cst_29 : f32 to vector<1x128xf32>
    %69 = arith.addf %65, %68 : vector<1x128xf32>
    %70 = math.rsqrt %69 : vector<1x128xf32>
    %71 = vector.broadcast %70 : vector<1x128xf32> to vector<128x128xf32>
    %72 = arith.mulf %67, %71 : vector<128x128xf32>
    %73 = vector.broadcast %53 : vector<128x1xf32> to vector<128x128xf32>
    %74 = arith.mulf %72, %73 : vector<128x128xf32>
    %75 = vector.broadcast %54 : vector<128x1xf32> to vector<128x128xf32>
    %76 = arith.addf %74, %75 : vector<128x128xf32>
    %c2_30 = arith.constant 2 : index
    %c0_31 = arith.constant 0 : index
    %c0_32 = arith.constant 0 : index
    %77 = vector.load %arg6[%c2_30, %c0_31, %c0_32] : memref<4x128x128xbf16, #tpu.memory_space<vmem>>, vector<1x128x128xbf16>
    %78 = vector.shape_cast %77 : vector<1x128x128xbf16> to vector<128x128xbf16>
    %79 = arith.truncf %76 : vector<128x128xf32> to vector<128x128xbf16>
    %cst_33 = arith.constant dense<0.000000e+00> : vector<128x128xf32>
    %80 = tpu.matmul %78, %79, %cst_33 {dimension_numbers = #tpu.dot_dimension_numbers<[1], [0], [0], [1], [0, 0, 1, 1], [], []>} : vector<128x128xbf16>, vector<128x128xbf16>, vector<128x128xf32> -> vector<128x128xf32>
    %c0_34 = arith.constant 0 : index
    %c6 = arith.constant 6 : index
    %81 = vector.load %arg4[%c0_34, %c6] : memref<128x11xf32, #tpu.memory_space<vmem>>, vector<128x1xf32>
    %82 = vector.broadcast %81 : vector<128x1xf32> to vector<128x128xf32>
    %83 = arith.addf %80, %82 : vector<128x128xf32>
    %84 = arith.addf %83, %52 : vector<128x128xf32>
    %c0_35 = arith.constant 0 : index
    %c7 = arith.constant 7 : index
    %85 = vector.load %arg4[%c0_35, %c7] : memref<128x11xf32, #tpu.memory_space<vmem>>, vector<128x1xf32>
    %c0_36 = arith.constant 0 : index
    %c8 = arith.constant 8 : index
    %86 = vector.load %arg4[%c0_36, %c8] : memref<128x11xf32, #tpu.memory_space<vmem>>, vector<128x1xf32>
    %cst_37 = arith.constant dense<0.000000e+00> : vector<128xf32>
    %87 = vector.multi_reduction <add>, %84, %cst_37 [0] : vector<128x128xf32> to vector<128xf32>
    %88 = vector.shape_cast %87 : vector<128xf32> to vector<1x128xf32>
    %cst_38 = arith.constant 1.280000e+02 : f32
    %89 = vector.broadcast %cst_38 : f32 to vector<1x128xf32>
    %90 = arith.divf %88, %89 : vector<1x128xf32>
    %91 = vector.broadcast %90 : vector<1x128xf32> to vector<128x128xf32>
    %92 = arith.subf %84, %91 : vector<128x128xf32>
    %93 = arith.mulf %92, %92 : vector<128x128xf32>
    %cst_39 = arith.constant dense<0.000000e+00> : vector<128xf32>
    %94 = vector.multi_reduction <add>, %93, %cst_39 [0] : vector<128x128xf32> to vector<128xf32>
    %95 = vector.shape_cast %94 : vector<128xf32> to vector<1x128xf32>
    %cst_40 = arith.constant 1.280000e+02 : f32
    %96 = vector.broadcast %cst_40 : f32 to vector<1x128xf32>
    %97 = arith.divf %95, %96 : vector<1x128xf32>
    %98 = vector.broadcast %90 : vector<1x128xf32> to vector<128x128xf32>
    %99 = arith.subf %84, %98 : vector<128x128xf32>
    %cst_41 = arith.constant 9.99999974E-6 : f32
    %100 = vector.broadcast %cst_41 : f32 to vector<1x128xf32>
    %101 = arith.addf %97, %100 : vector<1x128xf32>
    %102 = math.rsqrt %101 : vector<1x128xf32>
    %103 = vector.broadcast %102 : vector<1x128xf32> to vector<128x128xf32>
    %104 = arith.mulf %99, %103 : vector<128x128xf32>
    %105 = vector.broadcast %85 : vector<128x1xf32> to vector<128x128xf32>
    %106 = arith.mulf %104, %105 : vector<128x128xf32>
    %107 = vector.broadcast %86 : vector<128x1xf32> to vector<128x128xf32>
    %108 = arith.addf %106, %107 : vector<128x128xf32>
    %109 = arith.truncf %108 : vector<128x128xf32> to vector<128x128xbf16>
    %c0_42 = arith.constant 0 : index
    %c0_43 = arith.constant 0 : index
    %c0_44 = arith.constant 0 : index
    %110 = vector.load %arg7[%c0_42, %c0_43, %c0_44] : memref<2x512x128xbf16, #tpu.memory_space<vmem>>, vector<1x512x128xbf16>
    %111 = vector.shape_cast %110 : vector<1x512x128xbf16> to vector<512x128xbf16>
    %cst_45 = arith.constant dense<0.000000e+00> : vector<512x128xf32>
    %112 = tpu.matmul %111, %109, %cst_45 {dimension_numbers = #tpu.dot_dimension_numbers<[1], [0], [0], [1], [0, 0, 1, 1], [], []>} : vector<512x128xbf16>, vector<128x128xbf16>, vector<512x128xf32> -> vector<512x128xf32>
    %c0_46 = arith.constant 0 : index
    %c0_47 = arith.constant 0 : index
    %113 = vector.load %arg5[%c0_46, %c0_47] : memref<512x2xf32, #tpu.memory_space<vmem>>, vector<512x1xf32>
    %114 = vector.broadcast %113 : vector<512x1xf32> to vector<512x128xf32>
    %115 = arith.addf %112, %114 : vector<512x128xf32>
    %c1_48 = arith.constant 1 : index
    %c0_49 = arith.constant 0 : index
    %c0_50 = arith.constant 0 : index
    %116 = vector.load %arg7[%c1_48, %c0_49, %c0_50] : memref<2x512x128xbf16, #tpu.memory_space<vmem>>, vector<1x512x128xbf16>
    %117 = vector.shape_cast %116 : vector<1x512x128xbf16> to vector<512x128xbf16>
    %cst_51 = arith.constant dense<0.000000e+00> : vector<512x128xf32>
    %118 = tpu.matmul %117, %109, %cst_51 {dimension_numbers = #tpu.dot_dimension_numbers<[1], [0], [0], [1], [0, 0, 1, 1], [], []>} : vector<512x128xbf16>, vector<128x128xbf16>, vector<512x128xf32> -> vector<512x128xf32>
    %c0_52 = arith.constant 0 : index
    %c1_53 = arith.constant 1 : index
    %119 = vector.load %arg5[%c0_52, %c1_53] : memref<512x2xf32, #tpu.memory_space<vmem>>, vector<512x1xf32>
    %120 = vector.broadcast %119 : vector<512x1xf32> to vector<512x128xf32>
    %121 = arith.addf %118, %120 : vector<512x128xf32>
    %cst_54 = arith.constant 5.000000e-01 : f32
    %122 = vector.broadcast %cst_54 : f32 to vector<512x128xf32>
    %123 = arith.mulf %122, %121 : vector<512x128xf32>
    %cst_55 = arith.constant 0.707106769 : f32
    %124 = vector.broadcast %cst_55 : f32 to vector<512x128xf32>
    %125 = arith.mulf %121, %124 : vector<512x128xf32>
    %126 = math.erf %125 : vector<512x128xf32>
    %cst_56 = arith.constant 1.000000e+00 : f32
    %127 = vector.broadcast %cst_56 : f32 to vector<512x128xf32>
    %128 = arith.addf %127, %126 : vector<512x128xf32>
    %129 = arith.mulf %123, %128 : vector<512x128xf32>
    %130 = arith.mulf %115, %129 : vector<512x128xf32>
    %c0_57 = arith.constant 0 : index
    %c0_58 = arith.constant 0 : index
    %131 = vector.load %arg8[%c0_57, %c0_58] : memref<128x512xbf16, #tpu.memory_space<vmem>>, vector<128x512xbf16>
    %132 = arith.truncf %130 : vector<512x128xf32> to vector<512x128xbf16>
    %cst_59 = arith.constant dense<0.000000e+00> : vector<128x128xf32>
    %133 = tpu.matmul %131, %132, %cst_59 {dimension_numbers = #tpu.dot_dimension_numbers<[1], [0], [0], [1], [0, 0, 1, 1], [], []>} : vector<128x512xbf16>, vector<512x128xbf16>, vector<128x128xf32> -> vector<128x128xf32>
    %c0_60 = arith.constant 0 : index
    %c9 = arith.constant 9 : index
    %134 = vector.load %arg4[%c0_60, %c9] : memref<128x11xf32, #tpu.memory_space<vmem>>, vector<128x1xf32>
    %135 = vector.broadcast %134 : vector<128x1xf32> to vector<128x128xf32>
    %136 = arith.addf %133, %135 : vector<128x128xf32>
    %137 = arith.addf %136, %84 : vector<128x128xf32>
    %c3_61 = arith.constant 3 : index
    %c0_62 = arith.constant 0 : index
    %c0_63 = arith.constant 0 : index
    %138 = vector.load %arg6[%c3_61, %c0_62, %c0_63] : memref<4x128x128xbf16, #tpu.memory_space<vmem>>, vector<1x128x128xbf16>
    %139 = vector.shape_cast %138 : vector<1x128x128xbf16> to vector<128x128xbf16>
    %140 = arith.truncf %137 : vector<128x128xf32> to vector<128x128xbf16>
    %cst_64 = arith.constant dense<0.000000e+00> : vector<128x128xf32>
    %141 = tpu.matmul %139, %140, %cst_64 {dimension_numbers = #tpu.dot_dimension_numbers<[1], [0], [0], [1], [0, 0, 1, 1], [], []>} : vector<128x128xbf16>, vector<128x128xbf16>, vector<128x128xf32> -> vector<128x128xf32>
    %c0_65 = arith.constant 0 : index
    %c10 = arith.constant 10 : index
    %142 = vector.load %arg4[%c0_65, %c10] : memref<128x11xf32, #tpu.memory_space<vmem>>, vector<128x1xf32>
    %143 = vector.broadcast %142 : vector<128x1xf32> to vector<128x128xf32>
    %144 = arith.addf %141, %143 : vector<128x128xf32>
    %145 = arith.addf %144, %9 : vector<128x128xf32>
    %c0_66 = arith.constant 0 : index
    %c0_67 = arith.constant 0 : index
    %c0_68 = arith.constant 0 : index
    %146 = vector.load %arg9[%c0_66, %c0_67, %c0_68] : memref<1x128x128xf32, #tpu.memory_space<vmem>>, vector<1x128x128xf32>
    %147 = vector.shape_cast %146 : vector<1x128x128xf32> to vector<128x128xf32>
    %148 = vector.shape_cast %145 : vector<128x128xf32> to vector<1x128x128xf32>
    tpu.vector_store %arg9[%c0_66, %c0_67, %c0_68], %148 {strides = array<i32>} : memref<1x128x128xf32, #tpu.memory_space<vmem>>, vector<1x128x128xf32>,
    return
  }
  func.func @transform_0(%arg0: i32, %arg1: i32) -> (i32, i32, i32) {
    %c0_i32 = arith.constant 0 : i32
    %c0_i32_0 = arith.constant 0 : i32
    %c0_i32_1 = arith.constant 0 : i32
    return %arg0, %c0_i32, %c0_i32_0 : i32, i32, i32
  }
  func.func @transform_1(%arg0: i32, %arg1: i32) -> (i32, i32) {
    %c0_i32 = arith.constant 0 : i32
    %c0_i32_0 = arith.constant 0 : i32
    %c0_i32_1 = arith.constant 0 : i32
    return %c0_i32, %c0_i32_0 : i32, i32
  }
  func.func @transform_2(%arg0: i32, %arg1: i32) -> (i32, i32) {
    %c0_i32 = arith.constant 0 : i32
    %c0_i32_0 = arith.constant 0 : i32
    %c0_i32_1 = arith.constant 0 : i32
    return %c0_i32, %c0_i32_0 : i32, i32
  }
  func.func @transform_3(%arg0: i32, %arg1: i32) -> (i32, i32) {
    %c0_i32 = arith.constant 0 : i32
    %c0_i32_0 = arith.constant 0 : i32
    %c0_i32_1 = arith.constant 0 : i32
    return %c0_i32, %c0_i32_0 : i32, i32
  }
  func.func @transform_4(%arg0: i32, %arg1: i32) -> (i32, i32, i32) {
    %c0_i32 = arith.constant 0 : i32
    %c0_i32_0 = arith.constant 0 : i32
    %c0_i32_1 = arith.constant 0 : i32
    %c0_i32_2 = arith.constant 0 : i32
    return %c0_i32, %c0_i32_0, %c0_i32_1 : i32, i32, i32
  }
  func.func @transform_5(%arg0: i32, %arg1: i32) -> (i32, i32, i32) {
    %c0_i32 = arith.constant 0 : i32
    %c0_i32_0 = arith.constant 0 : i32
    %c0_i32_1 = arith.constant 0 : i32
    %c0_i32_2 = arith.constant 0 : i32
    return %c0_i32, %c0_i32_0, %c0_i32_1 : i32, i32, i32
  }
  func.func @transform_6(%arg0: i32, %arg1: i32) -> (i32, i32) {
    %c0_i32 = arith.constant 0 : i32
    %c0_i32_0 = arith.constant 0 : i32
    %c0_i32_1 = arith.constant 0 : i32
    return %c0_i32, %c0_i32_0 : i32, i32
  }
  func.func @transform_7(%arg0: i32, %arg1: i32) -> (i32, i32, i32) {
    %c0_i32 = arith.constant 0 : i32
    %c0_i32_0 = arith.constant 0 : i32
    return %arg0, %c0_i32, %arg1 : i32, i32, i32
  }
}

</mosaic_0001>

<llo_original>
// kernel: contextual_attention_block.1
$region0: #{contextual_attention_block.1}
  #allocation0 [shape = 'u32[]', space=smem, size = 0x4, offset = 0x4, fixed_abs, tag = 'smem constant byte address 0x4 - core index']
  #allocation1 [shape = 'u32[144,128]{1,0:T(1,128)}', space=vmem, size = 0x12000, scoped, tag = 'internal scratch']
  #allocation2 [shape = 'f32[128,2]{1,0:T(8,128)}', space=vmem, size = 0x10000, scoped, tag = 'scratch operand']
  %s0 = inlined_call_operand.vmem [shape: f32[2,128,256], index: 0, kind: input, shape index: {}]
  %s1 = inlined_call_operand.vmem [shape: f32[128,128], index: 1, kind: input, shape index: {}]
  %s2 = inlined_call_operand.vmem [shape: f32[128,11], index: 2, kind: input, shape index: {}]
  %s3 = inlined_call_operand.vmem [shape: f32[512,2], index: 3, kind: input, shape index: {}]
  %s4 = inlined_call_operand.vmem [shape: bf16[4,128,128], index: 4, kind: input, shape index: {}]
  %s5 = inlined_call_operand.vmem [shape: bf16[2,512,128], index: 5, kind: input, shape index: {}]
  %s6 = inlined_call_operand.vmem [shape: bf16[128,512], index: 6, kind: input, shape index: {}]
  %s7 = inlined_call_operand.vmem [shape: f32[2,128,256], index: 7, kind: output, shape index: {}]
  %s8 = sld [smem:[#allocation0]]
  $region99: #{contextual_attention_block.1} parent=0
    _
  %s10 = ssub.s32 1, %s8
  %s11 = scalar_select 0, %s10, %s8
  $region1: #{contextual_attention_block.1} parent=0
    #allocation3 [shape = 'u8[131072]{0}', space=vmem, size = 0x20000, scoped, tag = 'output window, operand 0']
    loop: start=0, step=1, limit=6
    $region2: #{contextual_attention_block.1} parent=1 // loop_pre_header
      _
    $region3: #{contextual_attention_block.1} parent=1 // loop_header
      %s13 = sphi 0, %s17
      %p14 = scmp.ge.s32.totalorder %s13, 6
      %s20 = sphi 0, %s32
      %s21 = sphi 0, %s28
      %s22 = sphi 0, %s20
      %s23 = sphi 0, %s21
      %s24 = sphi 0, %s22
      %s25 = sphi 0, %s23
      %s35 = sphi 0, %s37
      %s38 = sphi 0, %s35
      %s39 = sphi 0, %s38
      %s55 = sphi 0, %s39
      %s59 = sphi 0, %s59
      %s61 = sphi 0, %s59
      %s62 = sphi 0, %s61
      %s76 = sphi 0, %s62
      %s80 = sphi 0, %s80
      %s82 = sphi 0, %s80
      %s83 = sphi 0, %s82
      %s97 = sphi 0, %s83
      %s101 = sphi 0, %s101
      %s103 = sphi 0, %s101
      %s104 = sphi 0, %s103
      %s118 = sphi 0, %s104
      %s122 = sphi 0, %s122
      %s124 = sphi 0, %s122
      %s125 = sphi 0, %s124
      %s139 = sphi 0, %s125
      %s143 = sphi 0, %s143
      %s145 = sphi 0, %s143
      %s146 = sphi 0, %s145
      %s160 = sphi 0, %s146
      %s164 = sphi 0, %s164
      %s166 = sphi 0, %s164
      %s167 = sphi 0, %s166
      %s181 = sphi 0, %s167
      %s189 = sphi 0, %s191
      %s192 = sphi 0, %s189
      %s193 = sphi 0, %s192
      %s209 = sphi 0, %s193
    $region4: #{contextual_attention_block.1} parent=1 // loop_header_branch
      %16 = sbr.rel (%p14) target = $region8
    $region5: #{contextual_attention_block.1} parent=1 // loop_body
      %s18 = ssub.s32 %s13, 1
      %s19 = ssub.s32 %s13, 2
      %s26 = sadd.s32 1, %s21
      %p27 = scmp.ge.s32.totalorder %s26, 2
      %s28 = scalar_select %p27, 0, %s26
      %s29 = sadd.s32 1, %s20
      %s30 = scalar_select %p27, %s29, %s20
      %p31 = scmp.ge.s32.totalorder %s30, 2
      %s32 = scalar_select %p31, 0, %s30
      %s33 = ssub.s32 %s20, %s32
      %p34 = scmp.eq.s32.totalorder %s33, 0
      %s36 = sadd.s32 %s35, 1
      %s37 = scalar_select %p34, %s35, %s36
      %p40 = pneg %p34
      %p41 = scmp.eq.s32.totalorder %s13, 3
      %p42 = por %p40, %p41
      %p43 = scmp.ne.s32.totalorder %s35, %s38
      %p44 = scmp.eq.s32.totalorder %s13, 0
      %p45 = por %p43, %p44
      %p46 = scmp.ne.s32.totalorder %s35, %s38
      %p47 = scmp.eq.s32.totalorder %s18, 3
      %p48 = por %p46, %p47
      %p49 = scmp.ne.s32.totalorder %s38, %s39
      %p50 = scmp.eq.s32.totalorder %s18, 0
      %p51 = por %p49, %p50
      %p52 = scmp.ne.s32.totalorder %s38, %s39
      %p53 = scmp.eq.s32.totalorder %s19, 3
      %p54 = por %p52, %p53
      %p56 = scmp.ne.s32.totalorder %s39, %s55
      %p57 = scmp.eq.s32.totalorder %s19, 0
      %p58 = por %p56, %p57
      %s60 = sadd.s32 %s59, 1
      %p63 = scmp.eq.s32.totalorder %s13, 3
      %p64 = scmp.ne.s32.totalorder %s59, %s61
      %p65 = scmp.eq.s32.totalorder %s13, 0
      %p66 = por %p64, %p65
      %p67 = scmp.ne.s32.totalorder %s59, %s61
      %p68 = scmp.eq.s32.totalorder %s18, 3
      %p69 = por %p67, %p68
      %p70 = scmp.ne.s32.totalorder %s61, %s62
      %p71 = scmp.eq.s32.totalorder %s18, 0
      %p72 = por %p70, %p71
      %p73 = scmp.ne.s32.totalorder %s61, %s62
      %p74 = scmp.eq.s32.totalorder %s19, 3
      %p75 = por %p73, %p74
      %p77 = scmp.ne.s32.totalorder %s62, %s76
      %p78 = scmp.eq.s32.totalorder %s19, 0
      %p79 = por %p77, %p78
      %s81 = sadd.s32 %s80, 1
      %p84 = scmp.eq.s32.totalorder %s13, 3
      %p85 = scmp.ne.s32.totalorder %s80, %s82
      %p86 = scmp.eq.s32.totalorder %s13, 0
      %p87 = por %p85, %p86
      %p88 = scmp.ne.s32.totalorder %s80, %s82
      %p89 = scmp.eq.s32.totalorder %s18, 3
      %p90 = por %p88, %p89
      %p91 = scmp.ne.s32.totalorder %s82, %s83
      %p92 = scmp.eq.s32.totalorder %s18, 0
      %p93 = por %p91, %p92
      %p94 = scmp.ne.s32.totalorder %s82, %s83
      %p95 = scmp.eq.s32.totalorder %s19, 3
      %p96 = por %p94, %p95
      %p98 = scmp.ne.s32.totalorder %s83, %s97
      %p99 = scmp.eq.s32.totalorder %s19, 0
      %p100 = por %p98, %p99
      %s102 = sadd.s32 %s101, 1
      %p105 = scmp.eq.s32.totalorder %s13, 3
      %p106 = scmp.ne.s32.totalorder %s101, %s103
      %p107 = scmp.eq.s32.totalorder %s13, 0
      %p108 = por %p106, %p107
      %p109 = scmp.ne.s32.totalorder %s101, %s103
      %p110 = scmp.eq.s32.totalorder %s18, 3
      %p111 = por %p109, %p110
      %p112 = scmp.ne.s32.totalorder %s103, %s104
      %p113 = scmp.eq.s32.totalorder %s18, 0
      %p114 = por %p112, %p113
      %p115 = scmp.ne.s32.totalorder %s103, %s104
      %p116 = scmp.eq.s32.totalorder %s19, 3
      %p117 = por %p115, %p116
      %p119 = scmp.ne.s32.totalorder %s104, %s118
      %p120 = scmp.eq.s32.totalorder %s19, 0
      %p121 = por %p119, %p120
      %s123 = sadd.s32 %s122, 1
      %p126 = scmp.eq.s32.totalorder %s13, 3
      %p127 = scmp.ne.s32.totalorder %s122, %s124
      %p128 = scmp.eq.s32.totalorder %s13, 0
      %p129 = por %p127, %p128
      %p130 = scmp.ne.s32.totalorder %s122, %s124
      %p131 = scmp.eq.s32.totalorder %s18, 3
      %p132 = por %p130, %p131
      %p133 = scmp.ne.s32.totalorder %s124, %s125
      %p134 = scmp.eq.s32.totalorder %s18, 0
      %p135 = por %p133, %p134
      %p136 = scmp.ne.s32.totalorder %s124, %s125
      %p137 = scmp.eq.s32.totalorder %s19, 3
      %p138 = por %p136, %p137
      %p140 = scmp.ne.s32.totalorder %s125, %s139
      %p141 = scmp.eq.s32.totalorder %s19, 0
      %p142 = por %p140, %p141
      %s144 = sadd.s32 %s143, 1
      %p147 = scmp.eq.s32.totalorder %s13, 3
      %p148 = scmp.ne.s32.totalorder %s143, %s145
      %p149 = scmp.eq.s32.totalorder %s13, 0
      %p150 = por %p148, %p149
      %p151 = scmp.ne.s32.totalorder %s143, %s145
      %p152 = scmp.eq.s32.totalorder %s18, 3
      %p153 = por %p151, %p152
      %p154 = scmp.ne.s32.totalorder %s145, %s146
      %p155 = scmp.eq.s32.totalorder %s18, 0
      %p156 = por %p154, %p155
      %p157 = scmp.ne.s32.totalorder %s145, %s146
      %p158 = scmp.eq.s32.totalorder %s19, 3
      %p159 = por %p157, %p158
      %p161 = scmp.ne.s32.totalorder %s146, %s160
      %p162 = scmp.eq.s32.totalorder %s19, 0
      %p163 = por %p161, %p162
      %s165 = sadd.s32 %s164, 1
      %p168 = scmp.eq.s32.totalorder %s13, 3
      %p169 = scmp.ne.s32.totalorder %s164, %s166
      %p170 = scmp.eq.s32.totalorder %s13, 0
      %p171 = por %p169, %p170
      %p172 = scmp.ne.s32.totalorder %s164, %s166
      %p173 = scmp.eq.s32.totalorder %s18, 3
      %p174 = por %p172, %p173
      %p175 = scmp.ne.s32.totalorder %s166, %s167
      %p176 = scmp.eq.s32.totalorder %s18, 0
      %p177 = por %p175, %p176
      %p178 = scmp.ne.s32.totalorder %s166, %s167
      %p179 = scmp.eq.s32.totalorder %s19, 3
      %p180 = por %p178, %p179
      %p182 = scmp.ne.s32.totalorder %s167, %s181
      %p183 = scmp.eq.s32.totalorder %s19, 0
      %p184 = por %p182, %p183
      %s185 = ssub.s32 %s20, %s32
      %s186 = ssub.s32 %s21, %s28
      %s187 = sor.u32 %s185, %s186
      %p188 = scmp.eq.s32.totalorder %s187, 0
      %s190 = sadd.s32 %s189, 1
      %s191 = scalar_select %p188, %s189, %s190
      %p194 = pneg %p188
      %p195 = scmp.eq.s32.totalorder %s13, 3
      %p196 = por %p194, %p195
      %p197 = scmp.ne.s32.totalorder %s189, %s192
      %p198 = scmp.eq.s32.totalorder %s13, 0
      %p199 = por %p197, %p198
      %p200 = scmp.ne.s32.totalorder %s189, %s192
      %p201 = scmp.eq.s32.totalorder %s18, 3
      %p202 = por %p200, %p201
      %p203 = scmp.ne.s32.totalorder %s192, %s193
      %p204 = scmp.eq.s32.totalorder %s18, 0
      %p205 = por %p203, %p204
      %p206 = scmp.ne.s32.totalorder %s192, %s193
      %p207 = scmp.eq.s32.totalorder %s19, 3
      %p208 = por %p206, %p207
      %p210 = scmp.ne.s32.totalorder %s193, %s209
      %p211 = scmp.eq.s32.totalorder %s19, 0
      %p212 = por %p210, %p211
      %p213 = scmp.le.s32.totalorder 1, %s13
      %p214 = scmp.lt.s32.totalorder %s13, 5
      %p215 = pnand %p213, %p214
      %p216 = pneg %p215
      // Predicated region
      $region9: #{contextual_attention_block.1} parent=5 // pred_check
        _
      $region10: #{contextual_attention_block.1} parent=5 // pred_check_branch
        %218 = sbr.rel (%p215) target = $region12
      $region11: #{contextual_attention_block.1} parent=5 // pred_region
        %s219 = ssub.s32 %s13, 1
        // Predicated region
        $region13: #{contextual_attention_block.1} parent=11 // pred_check
          %p220 = pneg %p72
        $region14: #{contextual_attention_block.1} parent=11 // pred_check_branch
          %222 = sbr.rel (%p220) target = $region16
        $region15: #{contextual_attention_block.1} parent=11 // pred_region
          _
        $region16: #{contextual_attention_block.1} parent=11 // pred_fallthru
          _
        // Predicated region
        $region17: #{contextual_attention_block.1} parent=11 // pred_check
          %p223 = pneg %p93
        $region18: #{contextual_attention_block.1} parent=11 // pred_check_branch
          %225 = sbr.rel (%p223) target = $region20
        $region19: #{contextual_attention_block.1} parent=11 // pred_region
          _
        $region20: #{contextual_attention_block.1} parent=11 // pred_fallthru
          _
        // Predicated region
        $region21: #{contextual_attention_block.1} parent=11 // pred_check
          %p226 = pneg %p114
        $region22: #{contextual_attention_block.1} parent=11 // pred_check_branch
          %228 = sbr.rel (%p226) target = $region24
        $region23: #{contextual_attention_block.1} parent=11 // pred_region
          _
        $region24: #{contextual_attention_block.1} parent=11 // pred_fallthru
          _
        // Predicated region
        $region25: #{contextual_attention_block.1} parent=11 // pred_check
          %p229 = pneg %p135
        $region26: #{contextual_attention_block.1} parent=11 // pred_check_branch
          %231 = sbr.rel (%p229) target = $region28
        $region27: #{contextual_attention_block.1} parent=11 // pred_region
          _
        $region28: #{contextual_attention_block.1} parent=11 // pred_fallthru
          _
        // Predicated region
        $region29: #{contextual_attention_block.1} parent=11 // pred_check
          %p232 = pneg %p156
        $region30: #{contextual_attention_block.1} parent=11 // pred_check_branch
          %234 = sbr.rel (%p232) target = $region32
        $region31: #{contextual_attention_block.1} parent=11 // pred_region
          _
        $region32: #{contextual_attention_block.1} parent=11 // pred_fallthru
          _
        // Predicated region
        $region33: #{contextual_attention_block.1} parent=11 // pred_check
          %p235 = pneg %p177
        $region34: #{contextual_attention_block.1} parent=11 // pred_check_branch
          %237 = sbr.rel (%p235) target = $region36
        $region35: #{contextual_attention_block.1} parent=11 // pred_region
          _
        $region36: #{contextual_attention_block.1} parent=11 // pred_fallthru
          _
      $region12: #{contextual_attention_block.1} parent=5 // pred_fallthru
        _
      %p238 = scmp.lt.s32.totalorder %s13, 4
      // Predicated region
      $region37: #{contextual_attention_block.1} parent=5 // pred_check
        %p239 = pneg %p238
      $region38: #{contextual_attention_block.1} parent=5 // pred_check_branch
        %241 = sbr.rel (%p239) target = $region40
      $region39: #{contextual_attention_block.1} parent=5 // pred_region
        // Predicated region
        $region41: #{contextual_attention_block.1} parent=39 // pred_check
          %p242 = pneg %p45
        $region42: #{contextual_attention_block.1} parent=39 // pred_check_branch
          %244 = sbr.rel (%p242) target = $region44
        $region43: #{contextual_attention_block.1} parent=39 // pred_region
          %p245 = scmp.lt.s32.totalorder %s20, 1
          %s246 = scalar_select %p245, %s20, 1
          %s247 = smul.addr %s246, 32
          %s248 = smul.addr %s247, 8
          %s249 = scalar_lea.vmem %s0, %s248
        $region44: #{contextual_attention_block.1} parent=39 // pred_fallthru
          _
      $region40: #{contextual_attention_block.1} parent=5 // pred_fallthru
        _
      %p250 = scmp.le.s32.totalorder 1, %s13
      %p251 = scmp.lt.s32.totalorder %s13, 5
      %p252 = pnand %p250, %p251
      %p253 = pneg %p252
      // Predicated region
      $region45: #{contextual_attention_block.1} parent=5 // pred_check
        _
      $region46: #{contextual_attention_block.1} parent=5 // pred_check_branch
        %255 = sbr.rel (%p252) target = $region48
      $region47: #{contextual_attention_block.1} parent=5 // pred_region
        %s256 = ssub.s32 %s13, 1
        %p257 = scmp.lt.s32.totalorder %s22, 1
        %s258 = scalar_select %p257, %s22, 1
        %s259 = smul.addr %s258, 32
        %s260 = smul.addr %s259, 8
        %s261 = scalar_lea.vmem %s0, %s260
        %p262 = pneg %p51
        %p263 = pneg %p48
        %p264 = pneg %p72
        %p265 = pneg %p69
        %p266 = pneg %p93
        %p267 = pneg %p90
        %p268 = pneg %p114
        %p269 = pneg %p111
        %p270 = pneg %p135
        %p271 = pneg %p132
        %p272 = pneg %p156
        %p273 = pneg %p153
        %p274 = pneg %p177
        %p275 = pneg %p174
        %p276 = pneg %p205
        %p277 = pneg %p202
        %s278 = sand.u32 %s192, 1
        %s279 = sand.u32 %s192, 1
        %s280 = smul.addr %s279, 128
        %s281 = scalar_lea.vmem [#allocation3], %s280
        %p282 = scmp.lt.s32.totalorder %s22, 1
        %s283 = scalar_select %p282, %s22, 1
        %s284 = smul.addr %s283, 32
        %s285 = smul.addr %s284, 8
        %s286 = scalar_lea.vmem %s0, %s285
        %p288 = scmp.eq.s32.totalorder %s23, 0
        // Predicated region
        $region49: #{contextual_attention_block.1} parent=47 // pred_check
          %p289 = pneg %p288
        $region50: #{contextual_attention_block.1} parent=47 // pred_check_branch
          %291 = sbr.rel (%p289) target = $region52
        $region51: #{contextual_attention_block.1} parent=47 // pred_region
          %v292 = vld [vmem:[%s286] sm:$0xff]
          %v293 = vld [vmem:[%s286 + $0x8] sm:$0xff]
          %v294 = vld [vmem:[%s286 + $0x10] sm:$0xff]
          %v295 = vld [vmem:[%s286 + $0x18] sm:$0xff]
          %v296 = vld [vmem:[%s286 + $0x20] sm:$0xff]
          %v297 = vld [vmem:[%s286 + $0x28] sm:$0xff]
          %v298 = vld [vmem:[%s286 + $0x30] sm:$0xff]
          %v299 = vld [vmem:[%s286 + $0x38] sm:$0xff]
          %v300 = vld [vmem:[%s286 + $0x40] sm:$0xff]
          %v301 = vld [vmem:[%s286 + $0x48] sm:$0xff]
          %v302 = vld [vmem:[%s286 + $0x50] sm:$0xff]
          %v303 = vld [vmem:[%s286 + $0x58] sm:$0xff]
          %v304 = vld [vmem:[%s286 + $0x60] sm:$0xff]
          %v305 = vld [vmem:[%s286 + $0x68] sm:$0xff]
          %v306 = vld [vmem:[%s286 + $0x70] sm:$0xff]
          %v307 = vld [vmem:[%s286 + $0x78] sm:$0xff]
          %v308 = vld [vmem:[%s286 + $0x80] sm:$0xff]
          %v309 = vld [vmem:[%s286 + $0x88] sm:$0xff]
          %v310 = vld [vmem:[%s286 + $0x90] sm:$0xff]
          %v311 = vld [vmem:[%s286 + $0x98] sm:$0xff]
          %v312 = vld [vmem:[%s286 + $0xa0] sm:$0xff]
          %v313 = vld [vmem:[%s286 + $0xa8] sm:$0xff]
          %v314 = vld [vmem:[%s286 + $0xb0] sm:$0xff]
          %v315 = vld [vmem:[%s286 + $0xb8] sm:$0xff]
          %v316 = vld [vmem:[%s286 + $0xc0] sm:$0xff]
          %v317 = vld [vmem:[%s286 + $0xc8] sm:$0xff]
          %v318 = vld [vmem:[%s286 + $0xd0] sm:$0xff]
          %v319 = vld [vmem:[%s286 + $0xd8] sm:$0xff]
          %v320 = vld [vmem:[%s286 + $0xe0] sm:$0xff]
          %v321 = vld [vmem:[%s286 + $0xe8] sm:$0xff]
          %v322 = vld [vmem:[%s286 + $0xf0] sm:$0xff]
          %v323 = vld [vmem:[%s286 + $0xf8] sm:$0xff]
          %v324 = vadd.f32 %v292, %v293
          %325 = vadd.xlane.f32.xlu0 %v324
          %v326 = vpop.xlane.xlu0 %325
          %v327 = vadd.f32 %v294, %v295
          %328 = vadd.xlane.f32.xlu0 %v327
          %v329 = vpop.xlane.xlu0 %328
          %v330 = vadd.f32 %v296, %v297
          %331 = vadd.xlane.f32.xlu0 %v330
          %v332 = vpop.xlane.xlu0 %331
          %v333 = vadd.f32 %v298, %v299
          %334 = vadd.xlane.f32.xlu0 %v333
          %v335 = vpop.xlane.xlu0 %334
          %v336 = vadd.f32 %v300, %v301
          %337 = vadd.xlane.f32.xlu0 %v336
          %v338 = vpop.xlane.xlu0 %337
          %v339 = vadd.f32 %v302, %v303
          %340 = vadd.xlane.f32.xlu0 %v339
          %v341 = vpop.xlane.xlu0 %340
          %v342 = vadd.f32 %v304, %v305
          %343 = vadd.xlane.f32.xlu0 %v342
          %v344 = vpop.xlane.xlu0 %343
          %v345 = vadd.f32 %v306, %v307
          %346 = vadd.xlane.f32.xlu0 %v345
          %v347 = vpop.xlane.xlu0 %346
          %v348 = vadd.f32 %v308, %v309
          %349 = vadd.xlane.f32.xlu0 %v348
          %v350 = vpop.xlane.xlu0 %349
          %v351 = vadd.f32 %v310, %v311
          %352 = vadd.xlane.f32.xlu0 %v351
          %v353 = vpop.xlane.xlu0 %352
          %v354 = vadd.f32 %v312, %v313
          %355 = vadd.xlane.f32.xlu0 %v354
          %v356 = vpop.xlane.xlu0 %355
          %v357 = vadd.f32 %v314, %v315
          %358 = vadd.xlane.f32.xlu0 %v357
          %v359 = vpop.xlane.xlu0 %358
          %v360 = vadd.f32 %v316, %v317
          %361 = vadd.xlane.f32.xlu0 %v360
          %v362 = vpop.xlane.xlu0 %361
          %v363 = vadd.f32 %v318, %v319
          %364 = vadd.xlane.f32.xlu0 %v363
          %v365 = vpop.xlane.xlu0 %364
          %v366 = vadd.f32 %v320, %v321
          %367 = vadd.xlane.f32.xlu0 %v366
          %v368 = vpop.xlane.xlu0 %367
          %v369 = vadd.f32 %v322, %v323
          %370 = vadd.xlane.f32.xlu0 %v369
          %v371 = vpop.xlane.xlu0 %370
          %v372 = vmul.f32 %v292, %v292
          %v373 = vmul.f32 %v293, %v293
          %v374 = vmul.f32 %v294, %v294
          %v375 = vmul.f32 %v295, %v295
          %v376 = vmul.f32 %v296, %v296
          %v377 = vmul.f32 %v297, %v297
          %v378 = vmul.f32 %v298, %v298
          %v379 = vmul.f32 %v299, %v299
          %v380 = vmul.f32 %v300, %v300
          %v381 = vmul.f32 %v301, %v301
          %v382 = vmul.f32 %v302, %v302
          %v383 = vmul.f32 %v303, %v303
          %v384 = vmul.f32 %v304, %v304
          %v385 = vmul.f32 %v305, %v305
          %v386 = vmul.f32 %v306, %v306
          %v387 = vmul.f32 %v307, %v307
          %v388 = vmul.f32 %v308, %v308
          %v389 = vmul.f32 %v309, %v309
          %v390 = vmul.f32 %v310, %v310
          %v391 = vmul.f32 %v311, %v311
          %v392 = vmul.f32 %v312, %v312
          %v393 = vmul.f32 %v313, %v313
          %v394 = vmul.f32 %v314, %v314
          %v395 = vmul.f32 %v315, %v315
          %v396 = vmul.f32 %v316, %v316
          %v397 = vmul.f32 %v317, %v317
          %v398 = vmul.f32 %v318, %v318
          %v399 = vmul.f32 %v319, %v319
          %v400 = vmul.f32 %v320, %v320
          %v401 = vmul.f32 %v321, %v321
          %v402 = vmul.f32 %v322, %v322
          %v403 = vmul.f32 %v323, %v323
          %v404 = vadd.f32 %v372, %v373
          %405 = vadd.xlane.f32.xlu0 %v404
          %v406 = vpop.xlane.xlu0 %405
          %v407 = vadd.f32 %v374, %v375
          %408 = vadd.xlane.f32.xlu0 %v407
          %v409 = vpop.xlane.xlu0 %408
          %v410 = vadd.f32 %v376, %v377
          %411 = vadd.xlane.f32.xlu0 %v410
          %v412 = vpop.xlane.xlu0 %411
          %v413 = vadd.f32 %v378, %v379
          %414 = vadd.xlane.f32.xlu0 %v413
          %v415 = vpop.xlane.xlu0 %414
          %v416 = vadd.f32 %v380, %v381
          %417 = vadd.xlane.f32.xlu0 %v416
          %v418 = vpop.xlane.xlu0 %417
          %v419 = vadd.f32 %v382, %v383
          %420 = vadd.xlane.f32.xlu0 %v419
          %v421 = vpop.xlane.xlu0 %420
          %v422 = vadd.f32 %v384, %v385
          %423 = vadd.xlane.f32.xlu0 %v422
          %v424 = vpop.xlane.xlu0 %423
          %v425 = vadd.f32 %v386, %v387
          %426 = vadd.xlane.f32.xlu0 %v425
          %v427 = vpop.xlane.xlu0 %426
          %v428 = vadd.f32 %v388, %v389
          %429 = vadd.xlane.f32.xlu0 %v428
          %v430 = vpop.xlane.xlu0 %429
          %v431 = vadd.f32 %v390, %v391
          %432 = vadd.xlane.f32.xlu0 %v431
          %v433 = vpop.xlane.xlu0 %432
          %v434 = vadd.f32 %v392, %v393
          %435 = vadd.xlane.f32.xlu0 %v434
          %v436 = vpop.xlane.xlu0 %435
          %v437 = vadd.f32 %v394, %v395
          %438 = vadd.xlane.f32.xlu0 %v437
          %v439 = vpop.xlane.xlu0 %438
          %v440 = vadd.f32 %v396, %v397
          %441 = vadd.xlane.f32.xlu0 %v440
          %v442 = vpop.xlane.xlu0 %441
          %v443 = vadd.f32 %v398, %v399
          %444 = vadd.xlane.f32.xlu0 %v443
          %v445 = vpop.xlane.xlu0 %444
          %v446 = vadd.f32 %v400, %v401
          %447 = vadd.xlane.f32.xlu0 %v446
          %v448 = vpop.xlane.xlu0 %447
          %v449 = vadd.f32 %v402, %v403
          %450 = vadd.xlane.f32.xlu0 %v449
          %v451 = vpop.xlane.xlu0 %450
          %vm452 = vcmask 7168
          %v453 = vsel %vm452, %v326, %v406
          %v454 = vsel %vm452, %v329, %v409
          %v455 = vsel %vm452, %v332, %v412
          %v456 = vsel %vm452, %v335, %v415
          %v457 = vsel %vm452, %v338, %v418
          %v458 = vsel %vm452, %v341, %v421
          %v459 = vsel %vm452, %v344, %v424
          %v460 = vsel %vm452, %v347, %v427
          %v461 = vsel %vm452, %v350, %v430
          %v462 = vsel %vm452, %v353, %v433
          %v463 = vsel %vm452, %v356, %v436
          %v464 = vsel %vm452, %v359, %v439
          %v465 = vsel %vm452, %v362, %v442
          %v466 = vsel %vm452, %v365, %v445
          %v467 = vsel %vm452, %v368, %v448
          %v468 = vsel %vm452, %v371, %v451
          %v469 = vld [vmem:[%s1] sm:$0xff]
          %v470 = vld [vmem:[%s1 + $0x8] sm:$0xff]
          %v471 = vld [vmem:[%s1 + $0x10] sm:$0xff]
          %v472 = vld [vmem:[%s1 + $0x18] sm:$0xff]
          %v473 = vld [vmem:[%s1 + $0x20] sm:$0xff]
          %v474 = vld [vmem:[%s1 + $0x28] sm:$0xff]
          %v475 = vld [vmem:[%s1 + $0x30] sm:$0xff]
          %v476 = vld [vmem:[%s1 + $0x38] sm:$0xff]
          %v477 = vld [vmem:[%s1 + $0x40] sm:$0xff]
          %v478 = vld [vmem:[%s1 + $0x48] sm:$0xff]
          %v479 = vld [vmem:[%s1 + $0x50] sm:$0xff]
          %v480 = vld [vmem:[%s1 + $0x58] sm:$0xff]
          %v481 = vld [vmem:[%s1 + $0x60] sm:$0xff]
          %v482 = vld [vmem:[%s1 + $0x68] sm:$0xff]
          %v483 = vld [vmem:[%s1 + $0x70] sm:$0xff]
          %v484 = vld [vmem:[%s1 + $0x78] sm:$0xff]
          %485 = vmatprep.subr.mxu0 0.0
          %486 = vmatpush1.msra.mxu0 %v468
          %487 = vmatprep.subr.mxu0 0.0
          %488 = vmatpush1.msra.mxu0 %v467
          %489 = vmatprep.subr.mxu0 0.0
          %490 = vmatpush1.msra.mxu0 %v466
          %491 = vmatprep.subr.mxu0 0.0
          %492 = vmatpush1.msra.mxu0 %v465
          %493 = vmatprep.subr.mxu0 0.0
          %494 = vmatpush1.msra.mxu0 %v464
          %495 = vmatprep.subr.mxu0 0.0
          %496 = vmatpush1.msra.mxu0 %v463
          %497 = vmatprep.subr.mxu0 0.0
          %498 = vmatpush1.msra.mxu0 %v462
          %499 = vmatprep.subr.mxu0 0.0
          %500 = vmatpush1.msra.mxu0 %v461
          %501 = vmatprep.subr.mxu0 0.0
          %502 = vmatpush1.msra.mxu0 %v460
          %503 = vmatprep.subr.mxu0 0.0
          %504 = vmatpush1.msra.mxu0 %v459
          %505 = vmatprep.subr.mxu0 0.0
          %506 = vmatpush1.msra.mxu0 %v458
          %507 = vmatprep.subr.mxu0 0.0
          %508 = vmatpush1.msra.mxu0 %v457
          %509 = vmatprep.subr.mxu0 0.0
          %510 = vmatpush1.msra.mxu0 %v456
          %511 = vmatprep.subr.mxu0 0.0
          %512 = vmatpush1.msra.mxu0 %v455
          %513 = vmatprep.subr.mxu0 0.0
          %514 = vmatpush1.msra.mxu0 %v454
          %515 = vmatprep.subr.mxu0 0.0
          %516 = vmatpush1.msra.mxu0 %v453
          %517 = vmatprep.subr.mxu0 0.0
          %518 = vmatpush2.msra.mxu0 0.0
          %519 = vmatprep.subr.mxu0 0.0
          %520 = vmatpush2.msra.mxu0 0.0
          %521 = vmatprep.subr.mxu0 0.0
          %522 = vmatpush2.msra.mxu0 0.0
          %523 = vmatprep.subr.mxu0 0.0
          %524 = vmatpush2.msra.mxu0 0.0
          %525 = vmatprep.subr.mxu0 0.0
          %526 = vmatpush2.msra.mxu0 0.0
          %527 = vmatprep.subr.mxu0 0.0
          %528 = vmatpush2.msra.mxu0 0.0
          %529 = vmatprep.subr.mxu0 0.0
          %530 = vmatpush2.msra.mxu0 0.0
          %531 = vmatprep.subr.mxu0 0.0
          %532 = vmatpush2.msra.mxu0 0.0
          %533 = vmatprep.subr.mxu0 0.0
          %534 = vmatpush2.msra.mxu0 0.0
          %535 = vmatprep.subr.mxu0 0.0
          %536 = vmatpush2.msra.mxu0 0.0
          %537 = vmatprep.subr.mxu0 0.0
          %538 = vmatpush2.msra.mxu0 0.0
          %539 = vmatprep.subr.mxu0 0.0
          %540 = vmatpush2.msra.mxu0 0.0
          %541 = vmatprep.subr.mxu0 0.0
          %542 = vmatpush2.msra.mxu0 0.0
          %543 = vmatprep.subr.mxu0 0.0
          %544 = vmatpush2.msra.mxu0 0.0
          %545 = vmatprep.subr.mxu0 0.0
          %546 = vmatpush2.msra.mxu0 0.0
          %547 = vmatprep.subr.mxu0 0.0
          %548 = vmatpush2.msra.mxu0 0.0
          %549 = vmatprep.mubr.f32.mxu0 0.0
          %550 = vmatmul.mubr.f32.gmra.mxu0 %v469
          %v551 = vpop.f32.mrf.mxu0
          %v552 = vadd.f32 0.0, %v551
          %v553 = vpop.f32.mrf.mxu0
          %554 = vmatprep.mubr.f32.mxu0 0.0
          %555 = vmatmul.mubr.f32.gmra.mxu0 %v470
          %v556 = vpop.f32.mrf.mxu0
          %v557 = vadd.f32 0.0, %v556
          %v558 = vpop.f32.mrf.mxu0
          %559 = vmatprep.mubr.f32.mxu0 0.0
          %560 = vmatmul.mubr.f32.gmra.mxu0 %v471
          %v561 = vpop.f32.mrf.mxu0
          %v562 = vadd.f32 0.0, %v561
          %v563 = vpop.f32.mrf.mxu0
          %564 = vmatprep.mubr.f32.mxu0 0.0
          %565 = vmatmul.mubr.f32.gmra.mxu0 %v472
          %v566 = vpop.f32.mrf.mxu0
          %v567 = vadd.f32 0.0, %v566
          %v568 = vpop.f32.mrf.mxu0
          %569 = vmatprep.mubr.f32.mxu0 0.0
          %570 = vmatmul.mubr.f32.gmra.mxu0 %v473
          %v571 = vpop.f32.mrf.mxu0
          %v572 = vadd.f32 0.0, %v571
          %v573 = vpop.f32.mrf.mxu0
          %574 = vmatprep.mubr.f32.mxu0 0.0
          %575 = vmatmul.mubr.f32.gmra.mxu0 %v474
          %v576 = vpop.f32.mrf.mxu0
          %v577 = vadd.f32 0.0, %v576
          %v578 = vpop.f32.mrf.mxu0
          %579 = vmatprep.mubr.f32.mxu0 0.0
          %580 = vmatmul.mubr.f32.gmra.mxu0 %v475
          %v581 = vpop.f32.mrf.mxu0
          %v582 = vadd.f32 0.0, %v581
          %v583 = vpop.f32.mrf.mxu0
          %584 = vmatprep.mubr.f32.mxu0 0.0
          %585 = vmatmul.mubr.f32.gmra.mxu0 %v476
          %v586 = vpop.f32.mrf.mxu0
          %v587 = vadd.f32 0.0, %v586
          %v588 = vpop.f32.mrf.mxu0
          %589 = vmatprep.mubr.f32.mxu0 0.0
          %590 = vmatmul.mubr.f32.gmra.mxu0 %v477
          %v591 = vpop.f32.mrf.mxu0
          %v592 = vadd.f32 0.0, %v591
          %v593 = vpop.f32.mrf.mxu0
          %594 = vmatprep.mubr.f32.mxu0 0.0
          %595 = vmatmul.mubr.f32.gmra.mxu0 %v478
          %v596 = vpop.f32.mrf.mxu0
          %v597 = vadd.f32 0.0, %v596
          %v598 = vpop.f32.mrf.mxu0
          %599 = vmatprep.mubr.f32.mxu0 0.0
          %600 = vmatmul.mubr.f32.gmra.mxu0 %v479
          %v601 = vpop.f32.mrf.mxu0
          %v602 = vadd.f32 0.0, %v601
          %v603 = vpop.f32.mrf.mxu0
          %604 = vmatprep.mubr.f32.mxu0 0.0
          %605 = vmatmul.mubr.f32.gmra.mxu0 %v480
          %v606 = vpop.f32.mrf.mxu0
          %v607 = vadd.f32 0.0, %v606
          %v608 = vpop.f32.mrf.mxu0
          %609 = vmatprep.mubr.f32.mxu0 0.0
          %610 = vmatmul.mubr.f32.gmra.mxu0 %v481
          %v611 = vpop.f32.mrf.mxu0
          %v612 = vadd.f32 0.0, %v611
          %v613 = vpop.f32.mrf.mxu0
          %614 = vmatprep.mubr.f32.mxu0 0.0
          %615 = vmatmul.mubr.f32.gmra.mxu0 %v482
          %v616 = vpop.f32.mrf.mxu0
          %v617 = vadd.f32 0.0, %v616
          %v618 = vpop.f32.mrf.mxu0
          %619 = vmatprep.mubr.f32.mxu0 0.0
          %620 = vmatmul.mubr.f32.gmra.mxu0 %v483
          %v621 = vpop.f32.mrf.mxu0
          %v622 = vadd.f32 0.0, %v621
          %v623 = vpop.f32.mrf.mxu0
          %624 = vmatprep.mubr.f32.mxu0 0.0
          %625 = vmatmul.mubr.f32.gmra.mxu0 %v484
          %v626 = vpop.f32.mrf.mxu0
          %v627 = vadd.f32 0.0, %v626
          %v628 = vpop.f32.mrf.mxu0
          %629 = vdwg.mxu0
          %v630 = vmul.f32 %v552, %v552
          %v631 = vmul.f32 %v557, %v557
          %v632 = vmul.f32 %v562, %v562
          %v633 = vmul.f32 %v567, %v567
          %v634 = vmul.f32 %v572, %v572
          %v635 = vmul.f32 %v577, %v577
          %v636 = vmul.f32 %v582, %v582
          %v637 = vmul.f32 %v587, %v587
          %v638 = vmul.f32 %v592, %v592
          %v639 = vmul.f32 %v597, %v597
          %v640 = vmul.f32 %v602, %v602
          %v641 = vmul.f32 %v607, %v607
          %v642 = vmul.f32 %v612, %v612
          %v643 = vmul.f32 %v617, %v617
          %v644 = vmul.f32 %v622, %v622
          %v645 = vmul.f32 %v627, %v627
          %662 = vrot.lane.b32.xlu0 %v630, 1
          %v663 = vpop.permute.xlu0 %662
          %664 = vrot.lane.b32.xlu0 %v631, 1
          %v665 = vpop.permute.xlu0 %664
          %666 = vrot.lane.b32.xlu0 %v632, 1
          %v667 = vpop.permute.xlu0 %666
          %668 = vrot.lane.b32.xlu0 %v633, 1
          %v669 = vpop.permute.xlu0 %668
          %670 = vrot.lane.b32.xlu0 %v634, 1
          %v671 = vpop.permute.xlu0 %670
          %672 = vrot.lane.b32.xlu0 %v635, 1
          %v673 = vpop.permute.xlu0 %672
          %674 = vrot.lane.b32.xlu0 %v636, 1
          %v675 = vpop.permute.xlu0 %674
          %676 = vrot.lane.b32.xlu0 %v637, 1
          %v677 = vpop.permute.xlu0 %676
          %678 = vrot.lane.b32.xlu0 %v638, 1
          %v679 = vpop.permute.xlu0 %678
          %680 = vrot.lane.b32.xlu0 %v639, 1
          %v681 = vpop.permute.xlu0 %680
          %682 = vrot.lane.b32.xlu0 %v640, 1
          %v683 = vpop.permute.xlu0 %682
          %684 = vrot.lane.b32.xlu0 %v641, 1
          %v685 = vpop.permute.xlu0 %684
          %686 = vrot.lane.b32.xlu0 %v642, 1
          %v687 = vpop.permute.xlu0 %686
          %688 = vrot.lane.b32.xlu0 %v643, 1
          %v689 = vpop.permute.xlu0 %688
          %690 = vrot.lane.b32.xlu0 %v644, 1
          %v691 = vpop.permute.xlu0 %690
          %692 = vrot.lane.b32.xlu0 %v645, 1
          %v693 = vpop.permute.xlu0 %692
          %v710 = vsub.f32 %v552, %v663
          %v711 = vsub.f32 %v557, %v665
          %v712 = vsub.f32 %v562, %v667
          %v713 = vsub.f32 %v567, %v669
          %v714 = vsub.f32 %v572, %v671
          %v715 = vsub.f32 %v577, %v673
          %v716 = vsub.f32 %v582, %v675
          %v717 = vsub.f32 %v587, %v677
          %v718 = vsub.f32 %v592, %v679
          %v719 = vsub.f32 %v597, %v681
          %v720 = vsub.f32 %v602, %v683
          %v721 = vsub.f32 %v607, %v685
          %v722 = vsub.f32 %v612, %v687
          %v723 = vsub.f32 %v617, %v689
          %v724 = vsub.f32 %v622, %v691
          %v725 = vsub.f32 %v627, %v693
          %v726 = vmax.f32 %v710, 0.0
          %v727 = vmax.f32 %v711, 0.0
          %v728 = vmax.f32 %v712, 0.0
          %v729 = vmax.f32 %v713, 0.0
          %v730 = vmax.f32 %v714, 0.0
          %v731 = vmax.f32 %v715, 0.0
          %v732 = vmax.f32 %v716, 0.0
          %v733 = vmax.f32 %v717, 0.0
          %v734 = vmax.f32 %v718, 0.0
          %v735 = vmax.f32 %v719, 0.0
          %v736 = vmax.f32 %v720, 0.0
          %v737 = vmax.f32 %v721, 0.0
          %v738 = vmax.f32 %v722, 0.0
          %v739 = vmax.f32 %v723, 0.0
          %v740 = vmax.f32 %v724, 0.0
          %v741 = vmax.f32 %v725, 0.0
          %v742 = vadd.f32 %v726, 1e-06
          %v743 = vadd.f32 %v727, 1e-06
          %v744 = vadd.f32 %v728, 1e-06
          %v745 = vadd.f32 %v729, 1e-06
          %v746 = vadd.f32 %v730, 1e-06
          %v747 = vadd.f32 %v731, 1e-06
          %v748 = vadd.f32 %v732, 1e-06
          %v749 = vadd.f32 %v733, 1e-06
          %v750 = vadd.f32 %v734, 1e-06
          %v751 = vadd.f32 %v735, 1e-06
          %v752 = vadd.f32 %v736, 1e-06
          %v753 = vadd.f32 %v737, 1e-06
          %v754 = vadd.f32 %v738, 1e-06
          %v755 = vadd.f32 %v739, 1e-06
          %v756 = vadd.f32 %v740, 1e-06
          %v757 = vadd.f32 %v741, 1e-06
          %v758 = vrsqrt.pop %v742
          %v759 = vrsqrt.pop %v743
          %v760 = vrsqrt.pop %v744
          %v761 = vrsqrt.pop %v745
          %v762 = vrsqrt.pop %v746
          %v763 = vrsqrt.pop %v747
          %v764 = vrsqrt.pop %v748
          %v765 = vrsqrt.pop %v749
          %v766 = vrsqrt.pop %v750
          %v767 = vrsqrt.pop %v751
          %v768 = vrsqrt.pop %v752
          %v769 = vrsqrt.pop %v753
          %v770 = vrsqrt.pop %v754
          %v771 = vrsqrt.pop %v755
          %v772 = vrsqrt.pop %v756
          %v773 = vrsqrt.pop %v757
          %v774 = vsel %vm452, %v552, %v758
          %v775 = vsel %vm452, %v557, %v759
          %v776 = vsel %vm452, %v562, %v760
          %v777 = vsel %vm452, %v567, %v761
          %v778 = vsel %vm452, %v572, %v762
          %v779 = vsel %vm452, %v577, %v763
          %v780 = vsel %vm452, %v582, %v764
          %v781 = vsel %vm452, %v587, %v765
          %v782 = vsel %vm452, %v592, %v766
          %v783 = vsel %vm452, %v597, %v767
          %v784 = vsel %vm452, %v602, %v768
          %v785 = vsel %vm452, %v607, %v769
          %v786 = vsel %vm452, %v612, %v770
          %v787 = vsel %vm452, %v617, %v771
          %v788 = vsel %vm452, %v622, %v772
          %v789 = vsel %vm452, %v627, %v773
          %vm790 = vcmask 15360
          %791 = vst.msk [vmem:[#allocation2] sm:$0xff] %vm790, %v774
          %792 = vst.msk [vmem:[#allocation2 + $0x8] sm:$0xff] %vm790, %v775
          %793 = vst.msk [vmem:[#allocation2 + $0x10] sm:$0xff] %vm790, %v776
          %794 = vst.msk [vmem:[#allocation2 + $0x18] sm:$0xff] %vm790, %v777
          %795 = vst.msk [vmem:[#allocation2 + $0x20] sm:$0xff] %vm790, %v778
          %796 = vst.msk [vmem:[#allocation2 + $0x28] sm:$0xff] %vm790, %v779
          %797 = vst.msk [vmem:[#allocation2 + $0x30] sm:$0xff] %vm790, %v780
          %798 = vst.msk [vmem:[#allocation2 + $0x38] sm:$0xff] %vm790, %v781
          %799 = vst.msk [vmem:[#allocation2 + $0x40] sm:$0xff] %vm790, %v782
          %800 = vst.msk [vmem:[#allocation2 + $0x48] sm:$0xff] %vm790, %v783
          %801 = vst.msk [vmem:[#allocation2 + $0x50] sm:$0xff] %vm790, %v784
          %802 = vst.msk [vmem:[#allocation2 + $0x58] sm:$0xff] %vm790, %v785
          %803 = vst.msk [vmem:[#allocation2 + $0x60] sm:$0xff] %vm790, %v786
          %804 = vst.msk [vmem:[#allocation2 + $0x68] sm:$0xff] %vm790, %v787
          %805 = vst.msk [vmem:[#allocation2 + $0x70] sm:$0xff] %vm790, %v788
          %806 = vst.msk [vmem:[#allocation2 + $0x78] sm:$0xff] %vm790, %v789
        $region52: #{contextual_attention_block.1} parent=47 // pred_fallthru
          _
        %v807 = vld [vmem:[#allocation2] sm:$0xff]
        %v808 = vld [vmem:[#allocation2 + $0x8] sm:$0xff]
        %v809 = vld [vmem:[#allocation2 + $0x10] sm:$0xff]
        %v810 = vld [vmem:[#allocation2 + $0x18] sm:$0xff]
        %v811 = vld [vmem:[#allocation2 + $0x20] sm:$0xff]
        %v812 = vld [vmem:[#allocation2 + $0x28] sm:$0xff]
        %v813 = vld [vmem:[#allocation2 + $0x30] sm:$0xff]
        %v814 = vld [vmem:[#allocation2 + $0x38] sm:$0xff]
        %v815 = vld [vmem:[#allocation2 + $0x40] sm:$0xff]
        %v816 = vld [vmem:[#allocation2 + $0x48] sm:$0xff]
        %v817 = vld [vmem:[#allocation2 + $0x50] sm:$0xff]
        %v818 = vld [vmem:[#allocation2 + $0x58] sm:$0xff]
        %v819 = vld [vmem:[#allocation2 + $0x60] sm:$0xff]
        %v820 = vld [vmem:[#allocation2 + $0x68] sm:$0xff]
        %v821 = vld [vmem:[#allocation2 + $0x70] sm:$0xff]
        %v822 = vld [vmem:[#allocation2 + $0x78] sm:$0xff]
        %s823 = smul.u32 %s23, 128
        %s824 = sshra.s32 %s823, 7
        %s825 = sand.u32 %s823, 127
        %s826 = smul.addr %s824, 8
        %s827 = scalar_lea.vmem %s286, %s826
        %v828 = vld [vmem:[%s827] sm:$0xff]
        %v829 = vld [vmem:[%s827 + $0x10] sm:$0xff]
        %v830 = vld [vmem:[%s827 + $0x20] sm:$0xff]
        %v831 = vld [vmem:[%s827 + $0x30] sm:$0xff]
        %v832 = vld [vmem:[%s827 + $0x40] sm:$0xff]
        %v833 = vld [vmem:[%s827 + $0x50] sm:$0xff]
        %v834 = vld [vmem:[%s827 + $0x60] sm:$0xff]
        %v835 = vld [vmem:[%s827 + $0x70] sm:$0xff]
        %v836 = vld [vmem:[%s827 + $0x80] sm:$0xff]
        %v837 = vld [vmem:[%s827 + $0x90] sm:$0xff]
        %v838 = vld [vmem:[%s827 + $0xa0] sm:$0xff]
        %v839 = vld [vmem:[%s827 + $0xb0] sm:$0xff]
        %v840 = vld [vmem:[%s827 + $0xc0] sm:$0xff]
        %v841 = vld [vmem:[%s827 + $0xd0] sm:$0xff]
        %v842 = vld [vmem:[%s827 + $0xe0] sm:$0xff]
        %v843 = vld [vmem:[%s827 + $0xf0] sm:$0xff]
        %845 = vset.pattern.permute.xlu0 0
        %846 = vperm.xlu0 %845, %v807
        %v847 = vpop.permute.xlu0 %846
        %850 = vset.pattern.permute.xlu0 0
        %851 = vperm.xlu0 %850, %v808
        %v852 = vpop.permute.xlu0 %851
        %855 = vset.pattern.permute.xlu0 0
        %856 = vperm.xlu0 %855, %v809
        %v857 = vpop.permute.xlu0 %856
        %860 = vset.pattern.permute.xlu0 0
        %861 = vperm.xlu0 %860, %v810
        %v862 = vpop.permute.xlu0 %861
        %865 = vset.pattern.permute.xlu0 0
        %866 = vperm.xlu0 %865, %v811
        %v867 = vpop.permute.xlu0 %866
        %870 = vset.pattern.permute.xlu0 0
        %871 = vperm.xlu0 %870, %v812
        %v872 = vpop.permute.xlu0 %871
        %875 = vset.pattern.permute.xlu0 0
        %876 = vperm.xlu0 %875, %v813
        %v877 = vpop.permute.xlu0 %876
        %880 = vset.pattern.permute.xlu0 0
        %881 = vperm.xlu0 %880, %v814
        %v882 = vpop.permute.xlu0 %881
        %885 = vset.pattern.permute.xlu0 0
        %886 = vperm.xlu0 %885, %v815
        %v887 = vpop.permute.xlu0 %886
        %890 = vset.pattern.permute.xlu0 0
        %891 = vperm.xlu0 %890, %v816
        %v892 = vpop.permute.xlu0 %891
        %895 = vset.pattern.permute.xlu0 0
        %896 = vperm.xlu0 %895, %v817
        %v897 = vpop.permute.xlu0 %896
        %900 = vset.pattern.permute.xlu0 0
        %901 = vperm.xlu0 %900, %v818
        %v902 = vpop.permute.xlu0 %901
        %905 = vset.pattern.permute.xlu0 0
        %906 = vperm.xlu0 %905, %v819
        %v907 = vpop.permute.xlu0 %906
        %910 = vset.pattern.permute.xlu0 0
        %911 = vperm.xlu0 %910, %v820
        %v912 = vpop.permute.xlu0 %911
        %915 = vset.pattern.permute.xlu0 0
        %916 = vperm.xlu0 %915, %v821
        %v917 = vpop.permute.xlu0 %916
        %920 = vset.pattern.permute.xlu0 0
        %921 = vperm.xlu0 %920, %v822
        %v922 = vpop.permute.xlu0 %921
        %v924 = vsub.f32 %v828, %v847
        %v925 = vsub.f32 %v829, %v852
        %v926 = vsub.f32 %v830, %v857
        %v927 = vsub.f32 %v831, %v862
        %v928 = vsub.f32 %v832, %v867
        %v929 = vsub.f32 %v833, %v872
        %v930 = vsub.f32 %v834, %v877
        %v931 = vsub.f32 %v835, %v882
        %v932 = vsub.f32 %v836, %v887
        %v933 = vsub.f32 %v837, %v892
        %v934 = vsub.f32 %v838, %v897
        %v935 = vsub.f32 %v839, %v902
        %v936 = vsub.f32 %v840, %v907
        %v937 = vsub.f32 %v841, %v912
        %v938 = vsub.f32 %v842, %v917
        %v939 = vsub.f32 %v843, %v922
        %940 = vset.pattern.permute.xlu0 1
        %941 = vperm.xlu0 %940, %v807
        %v942 = vpop.permute.xlu0 %941
        %944 = vset.pattern.permute.xlu0 1
        %945 = vperm.xlu0 %944, %v808
        %v946 = vpop.permute.xlu0 %945
        %948 = vset.pattern.permute.xlu0 1
        %949 = vperm.xlu0 %948, %v809
        %v950 = vpop.permute.xlu0 %949
        %952 = vset.pattern.permute.xlu0 1
        %953 = vperm.xlu0 %952, %v810
        %v954 = vpop.permute.xlu0 %953
        %956 = vset.pattern.permute.xlu0 1
        %957 = vperm.xlu0 %956, %v811
        %v958 = vpop.permute.xlu0 %957
        %960 = vset.pattern.permute.xlu0 1
        %961 = vperm.xlu0 %960, %v812
        %v962 = vpop.permute.xlu0 %961
        %964 = vset.pattern.permute.xlu0 1
        %965 = vperm.xlu0 %964, %v813
        %v966 = vpop.permute.xlu0 %965
        %968 = vset.pattern.permute.xlu0 1
        %969 = vperm.xlu0 %968, %v814
        %v970 = vpop.permute.xlu0 %969
        %972 = vset.pattern.permute.xlu0 1
        %973 = vperm.xlu0 %972, %v815
        %v974 = vpop.permute.xlu0 %973
        %976 = vset.pattern.permute.xlu0 1
        %977 = vperm.xlu0 %976, %v816
        %v978 = vpop.permute.xlu0 %977
        %980 = vset.pattern.permute.xlu0 1
        %981 = vperm.xlu0 %980, %v817
        %v982 = vpop.permute.xlu0 %981
        %984 = vset.pattern.permute.xlu0 1
        %985 = vperm.xlu0 %984, %v818
        %v986 = vpop.permute.xlu0 %985
        %988 = vset.pattern.permute.xlu0 1
        %989 = vperm.xlu0 %988, %v819
        %v990 = vpop.permute.xlu0 %989
        %992 = vset.pattern.permute.xlu0 1
        %993 = vperm.xlu0 %992, %v820
        %v994 = vpop.permute.xlu0 %993
        %996 = vset.pattern.permute.xlu0 1
        %997 = vperm.xlu0 %996, %v821
        %v998 = vpop.permute.xlu0 %997
        %1000 = vset.pattern.permute.xlu0 1
        %1001 = vperm.xlu0 %1000, %v822
        %v1002 = vpop.permute.xlu0 %1001
        %v1004 = vmul.f32 %v924, %v942
        %v1005 = vmul.f32 %v925, %v946
        %v1006 = vmul.f32 %v926, %v950
        %v1007 = vmul.f32 %v927, %v954
        %v1008 = vmul.f32 %v928, %v958
        %v1009 = vmul.f32 %v929, %v962
        %v1010 = vmul.f32 %v930, %v966
        %v1011 = vmul.f32 %v931, %v970
        %v1012 = vmul.f32 %v932, %v974
        %v1013 = vmul.f32 %v933, %v978
        %v1014 = vmul.f32 %v934, %v982
        %v1015 = vmul.f32 %v935, %v986
        %v1016 = vmul.f32 %v936, %v990
        %v1017 = vmul.f32 %v937, %v994
        %v1018 = vmul.f32 %v938, %v998
        %v1019 = vmul.f32 %v939, %v1002
        %v1020 = vld [vmem:[%s4] sm:$0xf]
        %v1021 = vld [vmem:[%s4 + $0x4] sm:$0xf]
        %v1022 = vld [vmem:[%s4 + $0x8] sm:$0xf]
        %v1023 = vld [vmem:[%s4 + $0xc] sm:$0xf]
        %v1024 = vld [vmem:[%s4 + $0x10] sm:$0xf]
        %v1025 = vld [vmem:[%s4 + $0x14] sm:$0xf]
        %v1026 = vld [vmem:[%s4 + $0x18] sm:$0xf]
        %v1027 = vld [vmem:[%s4 + $0x1c] sm:$0xf]
        %v1028 = vld [vmem:[%s4 + $0x20] sm:$0xf]
        %v1029 = vld [vmem:[%s4 + $0x24] sm:$0xf]
        %v1030 = vld [vmem:[%s4 + $0x28] sm:$0xf]
        %v1031 = vld [vmem:[%s4 + $0x2c] sm:$0xf]
        %v1032 = vld [vmem:[%s4 + $0x30] sm:$0xf]
        %v1033 = vld [vmem:[%s4 + $0x34] sm:$0xf]
        %v1034 = vld [vmem:[%s4 + $0x38] sm:$0xf]
        %v1035 = vld [vmem:[%s4 + $0x3c] sm:$0xf]
        %v1036 = vpack.c.bf16 %v1005, %v1004
        %v1037 = vpack.c.bf16 %v1007, %v1006
        %v1038 = vpack.c.bf16 %v1009, %v1008
        %v1039 = vpack.c.bf16 %v1011, %v1010
        %v1040 = vpack.c.bf16 %v1013, %v1012
        %v1041 = vpack.c.bf16 %v1015, %v1014
        %v1042 = vpack.c.bf16 %v1017, %v1016
        %v1043 = vpack.c.bf16 %v1019, %v1018
        %v1044 = vld [vmem:[%s2] sm:$0xff]
        %v1045 = vld [vmem:[%s2 + $0x8] sm:$0xff]
        %v1046 = vld [vmem:[%s2 + $0x10] sm:$0xff]
        %v1047 = vld [vmem:[%s2 + $0x18] sm:$0xff]
        %v1048 = vld [vmem:[%s2 + $0x20] sm:$0xff]
        %v1049 = vld [vmem:[%s2 + $0x28] sm:$0xff]
        %v1050 = vld [vmem:[%s2 + $0x30] sm:$0xff]
        %v1051 = vld [vmem:[%s2 + $0x38] sm:$0xff]
        %v1052 = vld [vmem:[%s2 + $0x40] sm:$0xff]
        %v1053 = vld [vmem:[%s2 + $0x48] sm:$0xff]
        %v1054 = vld [vmem:[%s2 + $0x50] sm:$0xff]
        %v1055 = vld [vmem:[%s2 + $0x58] sm:$0xff]
        %v1056 = vld [vmem:[%s2 + $0x60] sm:$0xff]
        %v1057 = vld [vmem:[%s2 + $0x68] sm:$0xff]
        %v1058 = vld [vmem:[%s2 + $0x70] sm:$0xff]
        %v1059 = vld [vmem:[%s2 + $0x78] sm:$0xff]
        %1061 = vset.pattern.permute.xlu0 0
        %1062 = vperm.xlu0 %1061, %v1044
        %v1063 = vpop.permute.xlu0 %1062
        %1066 = vset.pattern.permute.xlu0 0
        %1067 = vperm.xlu0 %1066, %v1045
        %v1068 = vpop.permute.xlu0 %1067
        %1071 = vset.pattern.permute.xlu0 0
        %1072 = vperm.xlu0 %1071, %v1046
        %v1073 = vpop.permute.xlu0 %1072
        %1076 = vset.pattern.permute.xlu0 0
        %1077 = vperm.xlu0 %1076, %v1047
        %v1078 = vpop.permute.xlu0 %1077
        %1081 = vset.pattern.permute.xlu0 0
        %1082 = vperm.xlu0 %1081, %v1048
        %v1083 = vpop.permute.xlu0 %1082
        %1086 = vset.pattern.permute.xlu0 0
        %1087 = vperm.xlu0 %1086, %v1049
        %v1088 = vpop.permute.xlu0 %1087
        %1091 = vset.pattern.permute.xlu0 0
        %1092 = vperm.xlu0 %1091, %v1050
        %v1093 = vpop.permute.xlu0 %1092
        %1096 = vset.pattern.permute.xlu0 0
        %1097 = vperm.xlu0 %1096, %v1051
        %v1098 = vpop.permute.xlu0 %1097
        %1101 = vset.pattern.permute.xlu0 0
        %1102 = vperm.xlu0 %1101, %v1052
        %v1103 = vpop.permute.xlu0 %1102
        %1106 = vset.pattern.permute.xlu0 0
        %1107 = vperm.xlu0 %1106, %v1053
        %v1108 = vpop.permute.xlu0 %1107
        %1111 = vset.pattern.permute.xlu0 0
        %1112 = vperm.xlu0 %1111, %v1054
        %v1113 = vpop.permute.xlu0 %1112
        %1116 = vset.pattern.permute.xlu0 0
        %1117 = vperm.xlu0 %1116, %v1055
        %v1118 = vpop.permute.xlu0 %1117
        %1121 = vset.pattern.permute.xlu0 0
        %1122 = vperm.xlu0 %1121, %v1056
        %v1123 = vpop.permute.xlu0 %1122
        %1126 = vset.pattern.permute.xlu0 0
        %1127 = vperm.xlu0 %1126, %v1057
        %v1128 = vpop.permute.xlu0 %1127
        %1131 = vset.pattern.permute.xlu0 0
        %1132 = vperm.xlu0 %1131, %v1058
        %v1133 = vpop.permute.xlu0 %1132
        %1136 = vset.pattern.permute.xlu0 0
        %1137 = vperm.xlu0 %1136, %v1059
        %v1138 = vpop.permute.xlu0 %1137
        %v1156 = vunpack.c.l.b16 %v1020
        %v1157 = vunpack.c.l.b16 %v1021
        %v1158 = vunpack.c.l.b16 %v1022
        %v1159 = vunpack.c.l.b16 %v1023
        %v1160 = vunpack.c.l.b16 %v1024
        %v1161 = vunpack.c.l.b16 %v1025
        %v1162 = vunpack.c.l.b16 %v1026
        %v1163 = vunpack.c.l.b16 %v1027
        %v1164 = vunpack.c.l.b16 %v1028
        %v1165 = vunpack.c.l.b16 %v1029
        %v1166 = vunpack.c.l.b16 %v1030
        %v1167 = vunpack.c.l.b16 %v1031
        %v1168 = vunpack.c.l.b16 %v1032
        %v1169 = vunpack.c.l.b16 %v1033
        %v1170 = vunpack.c.l.b16 %v1034
        %v1171 = vunpack.c.l.b16 %v1035
        %v1172 = vpack.c.b16 %v1157, %v1156
        %v1173 = vpack.c.b16 %v1159, %v1158
        %v1174 = vpack.c.b16 %v1161, %v1160
        %v1175 = vpack.c.b16 %v1163, %v1162
        %v1176 = vpack.c.b16 %v1165, %v1164
        %v1177 = vpack.c.b16 %v1167, %v1166
        %v1178 = vpack.c.b16 %v1169, %v1168
        %v1179 = vpack.c.b16 %v1171, %v1170
        %1188 = vmatprep.subr.bf16.mxu0 0
        %1189 = vmatpush1.bf16.msra.mxu0 %v1043
        %1190 = vmatprep.subr.bf16.mxu0 0
        %1191 = vmatpush1.bf16.msra.mxu0 %v1042
        %1192 = vmatprep.subr.bf16.mxu0 0
        %1193 = vmatpush1.bf16.msra.mxu0 %v1041
        %1194 = vmatprep.subr.bf16.mxu0 0
        %1195 = vmatpush1.bf16.msra.mxu0 %v1040
        %1196 = vmatprep.subr.bf16.mxu0 0
        %1197 = vmatpush1.bf16.msra.mxu0 %v1039
        %1198 = vmatprep.subr.bf16.mxu0 0
        %1199 = vmatpush1.bf16.msra.mxu0 %v1038
        %1200 = vmatprep.subr.bf16.mxu0 0
        %1201 = vmatpush1.bf16.msra.mxu0 %v1037
        %1202 = vmatprep.subr.bf16.mxu0 0
        %1203 = vmatpush1.bf16.msra.mxu0 %v1036
        %1204 = vmatprep.subr.bf16.mxu0 0
        %1205 = vmatpush2.bf16.msra.mxu0 0
        %1206 = vmatprep.subr.bf16.mxu0 0
        %1207 = vmatpush2.bf16.msra.mxu0 0
        %1208 = vmatprep.subr.bf16.mxu0 0
        %1209 = vmatpush2.bf16.msra.mxu0 0
        %1210 = vmatprep.subr.bf16.mxu0 0
        %1211 = vmatpush2.bf16.msra.mxu0 0
        %1212 = vmatprep.subr.bf16.mxu0 0
        %1213 = vmatpush2.bf16.msra.mxu0 0
        %1214 = vmatprep.subr.bf16.mxu0 0
        %1215 = vmatpush2.bf16.msra.mxu0 0
        %1216 = vmatprep.subr.bf16.mxu0 0
        %1217 = vmatpush2.bf16.msra.mxu0 0
        %1218 = vmatprep.subr.bf16.mxu0 0
        %1219 = vmatpush2.bf16.msra.mxu0 0
        %1220 = vmatprep.mubr.bf16.mxu0 0
        %1221 = vmatmul.mubr.bf16.gmra.mxu0 %v1172
        %v1222 = vpop.f32.mrf.mxu0
        %v1223 = vadd.f32 %v1063, %v1222
        %v1224 = vpop.f32.mrf.mxu0
        %v1225 = vpop.f32.mrf.mxu0
        %v1226 = vadd.f32 %v1068, %v1225
        %v1227 = vpop.f32.mrf.mxu0
        %1228 = vmatprep.mubr.bf16.mxu0 0
        %1229 = vmatmul.mubr.bf16.gmra.mxu0 %v1173
        %v1230 = vpop.f32.mrf.mxu0
        %v1231 = vadd.f32 %v1073, %v1230
        %v1232 = vpop.f32.mrf.mxu0
        %v1233 = vpop.f32.mrf.mxu0
        %v1234 = vadd.f32 %v1078, %v1233
        %v1235 = vpop.f32.mrf.mxu0
        %1236 = vmatprep.mubr.bf16.mxu0 0
        %1237 = vmatmul.mubr.bf16.gmra.mxu0 %v1174
        %v1238 = vpop.f32.mrf.mxu0
        %v1239 = vadd.f32 %v1083, %v1238
        %v1240 = vpop.f32.mrf.mxu0
        %v1241 = vpop.f32.mrf.mxu0
        %v1242 = vadd.f32 %v1088, %v1241
        %v1243 = vpop.f32.mrf.mxu0
        %1244 = vmatprep.mubr.bf16.mxu0 0
        %1245 = vmatmul.mubr.bf16.gmra.mxu0 %v1175
        %v1246 = vpop.f32.mrf.mxu0
        %v1247 = vadd.f32 %v1093, %v1246
        %v1248 = vpop.f32.mrf.mxu0
        %v1249 = vpop.f32.mrf.mxu0
        %v1250 = vadd.f32 %v1098, %v1249
        %v1251 = vpop.f32.mrf.mxu0
        %1252 = vmatprep.mubr.bf16.mxu0 0
        %1253 = vmatmul.mubr.bf16.gmra.mxu0 %v1176
        %v1254 = vpop.f32.mrf.mxu0
        %v1255 = vadd.f32 %v1103, %v1254
        %v1256 = vpop.f32.mrf.mxu0
        %v1257 = vpop.f32.mrf.mxu0
        %v1258 = vadd.f32 %v1108, %v1257
        %v1259 = vpop.f32.mrf.mxu0
        %1260 = vmatprep.mubr.bf16.mxu0 0
        %1261 = vmatmul.mubr.bf16.gmra.mxu0 %v1177
        %v1262 = vpop.f32.mrf.mxu0
        %v1263 = vadd.f32 %v1113, %v1262
        %v1264 = vpop.f32.mrf.mxu0
        %v1265 = vpop.f32.mrf.mxu0
        %v1266 = vadd.f32 %v1118, %v1265
        %v1267 = vpop.f32.mrf.mxu0
        %1268 = vmatprep.mubr.bf16.mxu0 0
        %1269 = vmatmul.mubr.bf16.gmra.mxu0 %v1178
        %v1270 = vpop.f32.mrf.mxu0
        %v1271 = vadd.f32 %v1123, %v1270
        %v1272 = vpop.f32.mrf.mxu0
        %v1273 = vpop.f32.mrf.mxu0
        %v1274 = vadd.f32 %v1128, %v1273
        %v1275 = vpop.f32.mrf.mxu0
        %1276 = vmatprep.mubr.bf16.mxu0 0
        %1277 = vmatmul.mubr.bf16.gmra.mxu0 %v1179
        %v1278 = vpop.f32.mrf.mxu0
        %v1279 = vadd.f32 %v1133, %v1278
        %v1280 = vpop.f32.mrf.mxu0
        %v1281 = vpop.f32.mrf.mxu0
        %v1282 = vadd.f32 %v1138, %v1281
        %v1283 = vpop.f32.mrf.mxu0
        %1284 = vdwg.mxu0
        %v1285 = vadd.f32 %v1223, %v1226
        %v1286 = vadd.f32 %v1285, %v1231
        %v1287 = vadd.f32 %v1286, %v1234
        %v1288 = vadd.f32 %v1287, %v1239
        %v1289 = vadd.f32 %v1288, %v1242
        %v1290 = vadd.f32 %v1289, %v1247
        %v1291 = vadd.f32 %v1290, %v1250
        %v1292 = vadd.f32 %v1291, %v1255
        %v1293 = vadd.f32 %v1292, %v1258
        %v1294 = vadd.f32 %v1293, %v1263
        %v1295 = vadd.f32 %v1294, %v1266
        %v1296 = vadd.f32 %v1295, %v1271
        %v1297 = vadd.f32 %v1296, %v1274
        %v1298 = vadd.f32 %v1297, %v1279
        %v1299 = vadd.f32 %v1298, %v1282
        %v1300 = vrot.slane %v1299, 4
        %v1301 = vadd.f32 %v1299, %v1300
        %v1302 = vrot.slane %v1301, 2
        %v1303 = vadd.f32 %v1301, %v1302
        %v1304 = vrot.slane %v1303, 1
        %v1305 = vadd.f32 %v1303, %v1304
        %v1306 = vrcp.pop 128.0
        %v1307 = vmul.f32 %v1305, %v1306
        %v1308 = vsub.f32 %v1223, %v1307
        %v1309 = vsub.f32 %v1226, %v1307
        %v1310 = vsub.f32 %v1231, %v1307
        %v1311 = vsub.f32 %v1234, %v1307
        %v1312 = vsub.f32 %v1239, %v1307
        %v1313 = vsub.f32 %v1242, %v1307
        %v1314 = vsub.f32 %v1247, %v1307
        %v1315 = vsub.f32 %v1250, %v1307
        %v1316 = vsub.f32 %v1255, %v1307
        %v1317 = vsub.f32 %v1258, %v1307
        %v1318 = vsub.f32 %v1263, %v1307
        %v1319 = vsub.f32 %v1266, %v1307
        %v1320 = vsub.f32 %v1271, %v1307
        %v1321 = vsub.f32 %v1274, %v1307
        %v1322 = vsub.f32 %v1279, %v1307
        %v1323 = vsub.f32 %v1282, %v1307
        %v1324 = vmul.f32 %v1308, %v1308
        %v1325 = vmul.f32 %v1309, %v1309
        %v1326 = vmul.f32 %v1310, %v1310
        %v1327 = vmul.f32 %v1311, %v1311
        %v1328 = vmul.f32 %v1312, %v1312
        %v1329 = vmul.f32 %v1313, %v1313
        %v1330 = vmul.f32 %v1314, %v1314
        %v1331 = vmul.f32 %v1315, %v1315
        %v1332 = vmul.f32 %v1316, %v1316
        %v1333 = vmul.f32 %v1317, %v1317
        %v1334 = vmul.f32 %v1318, %v1318
        %v1335 = vmul.f32 %v1319, %v1319
        %v1336 = vmul.f32 %v1320, %v1320
        %v1337 = vmul.f32 %v1321, %v1321
        %v1338 = vmul.f32 %v1322, %v1322
        %v1339 = vmul.f32 %v1323, %v1323
        %v1340 = vadd.f32 %v1324, %v1325
        %v1341 = vadd.f32 %v1340, %v1326
        %v1342 = vadd.f32 %v1341, %v1327
        %v1343 = vadd.f32 %v1342, %v1328
        %v1344 = vadd.f32 %v1343, %v1329
        %v1345 = vadd.f32 %v1344, %v1330
        %v1346 = vadd.f32 %v1345, %v1331
        %v1347 = vadd.f32 %v1346, %v1332
        %v1348 = vadd.f32 %v1347, %v1333
        %v1349 = vadd.f32 %v1348, %v1334
        %v1350 = vadd.f32 %v1349, %v1335
        %v1351 = vadd.f32 %v1350, %v1336
        %v1352 = vadd.f32 %v1351, %v1337
        %v1353 = vadd.f32 %v1352, %v1338
        %v1354 = vadd.f32 %v1353, %v1339
        %v1355 = vrot.slane %v1354, 4
        %v1356 = vadd.f32 %v1354, %v1355
        %v1357 = vrot.slane %v1356, 2
        %v1358 = vadd.f32 %v1356, %v1357
        %v1359 = vrot.slane %v1358, 1
        %v1360 = vadd.f32 %v1358, %v1359
        %v1361 = vmul.f32 %v1360, %v1306
        %v1362 = vadd.f32 %v1361, 1e-05
        %v1363 = vrsqrt.pop %v1362
        %v1364 = vmul.f32 %v1308, %v1363
        %v1365 = vmul.f32 %v1309, %v1363
        %v1366 = vmul.f32 %v1310, %v1363
        %v1367 = vmul.f32 %v1311, %v1363
        %v1368 = vmul.f32 %v1312, %v1363
        %v1369 = vmul.f32 %v1313, %v1363
        %v1370 = vmul.f32 %v1314, %v1363
        %v1371 = vmul.f32 %v1315, %v1363
        %v1372 = vmul.f32 %v1316, %v1363
        %v1373 = vmul.f32 %v1317, %v1363
        %v1374 = vmul.f32 %v1318, %v1363
        %v1375 = vmul.f32 %v1319, %v1363
        %v1376 = vmul.f32 %v1320, %v1363
        %v1377 = vmul.f32 %v1321, %v1363
        %v1378 = vmul.f32 %v1322, %v1363
        %v1379 = vmul.f32 %v1323, %v1363
        %1380 = vset.pattern.permute.xlu0 1
        %1381 = vperm.xlu0 %1380, %v1044
        %v1382 = vpop.permute.xlu0 %1381
        %1384 = vset.pattern.permute.xlu0 1
        %1385 = vperm.xlu0 %1384, %v1045
        %v1386 = vpop.permute.xlu0 %1385
        %1388 = vset.pattern.permute.xlu0 1
        %1389 = vperm.xlu0 %1388, %v1046
        %v1390 = vpop.permute.xlu0 %1389
        %1392 = vset.pattern.permute.xlu0 1
        %1393 = vperm.xlu0 %1392, %v1047
        %v1394 = vpop.permute.xlu0 %1393
        %1396 = vset.pattern.permute.xlu0 1
        %1397 = vperm.xlu0 %1396, %v1048
        %v1398 = vpop.permute.xlu0 %1397
        %1400 = vset.pattern.permute.xlu0 1
        %1401 = vperm.xlu0 %1400, %v1049
        %v1402 = vpop.permute.xlu0 %1401
        %1404 = vset.pattern.permute.xlu0 1
        %1405 = vperm.xlu0 %1404, %v1050
        %v1406 = vpop.permute.xlu0 %1405
        %1408 = vset.pattern.permute.xlu0 1
        %1409 = vperm.xlu0 %1408, %v1051
        %v1410 = vpop.permute.xlu0 %1409
        %1412 = vset.pattern.permute.xlu0 1
        %1413 = vperm.xlu0 %1412, %v1052
        %v1414 = vpop.permute.xlu0 %1413
        %1416 = vset.pattern.permute.xlu0 1
        %1417 = vperm.xlu0 %1416, %v1053
        %v1418 = vpop.permute.xlu0 %1417
        %1420 = vset.pattern.permute.xlu0 1
        %1421 = vperm.xlu0 %1420, %v1054
        %v1422 = vpop.permute.xlu0 %1421
        %1424 = vset.pattern.permute.xlu0 1
        %1425 = vperm.xlu0 %1424, %v1055
        %v1426 = vpop.permute.xlu0 %1425
        %1428 = vset.pattern.permute.xlu0 1
        %1429 = vperm.xlu0 %1428, %v1056
        %v1430 = vpop.permute.xlu0 %1429
        %1432 = vset.pattern.permute.xlu0 1
        %1433 = vperm.xlu0 %1432, %v1057
        %v1434 = vpop.permute.xlu0 %1433
        %1436 = vset.pattern.permute.xlu0 1
        %1437 = vperm.xlu0 %1436, %v1058
        %v1438 = vpop.permute.xlu0 %1437
        %1440 = vset.pattern.permute.xlu0 1
        %1441 = vperm.xlu0 %1440, %v1059
        %v1442 = vpop.permute.xlu0 %1441
        %v1444 = vmul.f32 %v1364, %v1382
        %v1445 = vmul.f32 %v1365, %v1386
        %v1446 = vmul.f32 %v1366, %v1390
        %v1447 = vmul.f32 %v1367, %v1394
        %v1448 = vmul.f32 %v1368, %v1398
        %v1449 = vmul.f32 %v1369, %v1402
        %v1450 = vmul.f32 %v1370, %v1406
        %v1451 = vmul.f32 %v1371, %v1410
        %v1452 = vmul.f32 %v1372, %v1414
        %v1453 = vmul.f32 %v1373, %v1418
        %v1454 = vmul.f32 %v1374, %v1422
        %v1455 = vmul.f32 %v1375, %v1426
        %v1456 = vmul.f32 %v1376, %v1430
        %v1457 = vmul.f32 %v1377, %v1434
        %v1458 = vmul.f32 %v1378, %v1438
        %v1459 = vmul.f32 %v1379, %v1442
        %1460 = vset.pattern.permute.xlu0 2
        %1461 = vperm.xlu0 %1460, %v1044
        %v1462 = vpop.permute.xlu0 %1461
        %1464 = vset.pattern.permute.xlu0 2
        %1465 = vperm.xlu0 %1464, %v1045
        %v1466 = vpop.permute.xlu0 %1465
        %1468 = vset.pattern.permute.xlu0 2
        %1469 = vperm.xlu0 %1468, %v1046
        %v1470 = vpop.permute.xlu0 %1469
        %1472 = vset.pattern.permute.xlu0 2
        %1473 = vperm.xlu0 %1472, %v1047
        %v1474 = vpop.permute.xlu0 %1473
        %1476 = vset.pattern.permute.xlu0 2
        %1477 = vperm.xlu0 %1476, %v1048
        %v1478 = vpop.permute.xlu0 %1477
        %1480 = vset.pattern.permute.xlu0 2
        %1481 = vperm.xlu0 %1480, %v1049
        %v1482 = vpop.permute.xlu0 %1481
        %1484 = vset.pattern.permute.xlu0 2
        %1485 = vperm.xlu0 %1484, %v1050
        %v1486 = vpop.permute.xlu0 %1485
        %1488 = vset.pattern.permute.xlu0 2
        %1489 = vperm.xlu0 %1488, %v1051
        %v1490 = vpop.permute.xlu0 %1489
        %1492 = vset.pattern.permute.xlu0 2
        %1493 = vperm.xlu0 %1492, %v1052
        %v1494 = vpop.permute.xlu0 %1493
        %1496 = vset.pattern.permute.xlu0 2
        %1497 = vperm.xlu0 %1496, %v1053
        %v1498 = vpop.permute.xlu0 %1497
        %1500 = vset.pattern.permute.xlu0 2
        %1501 = vperm.xlu0 %1500, %v1054
        %v1502 = vpop.permute.xlu0 %1501
        %1504 = vset.pattern.permute.xlu0 2
        %1505 = vperm.xlu0 %1504, %v1055
        %v1506 = vpop.permute.xlu0 %1505
        %1508 = vset.pattern.permute.xlu0 2
        %1509 = vperm.xlu0 %1508, %v1056
        %v1510 = vpop.permute.xlu0 %1509
        %1512 = vset.pattern.permute.xlu0 2
        %1513 = vperm.xlu0 %1512, %v1057
        %v1514 = vpop.permute.xlu0 %1513
        %1516 = vset.pattern.permute.xlu0 2
        %1517 = vperm.xlu0 %1516, %v1058
        %v1518 = vpop.permute.xlu0 %1517
        %1520 = vset.pattern.permute.xlu0 2
        %1521 = vperm.xlu0 %1520, %v1059
        %v1522 = vpop.permute.xlu0 %1521
        %v1524 = vadd.f32 %v1444, %v1462
        %v1525 = vadd.f32 %v1445, %v1466
        %v1526 = vadd.f32 %v1446, %v1470
        %v1527 = vadd.f32 %v1447, %v1474
        %v1528 = vadd.f32 %v1448, %v1478
        %v1529 = vadd.f32 %v1449, %v1482
        %v1530 = vadd.f32 %v1450, %v1486
        %v1531 = vadd.f32 %v1451, %v1490
        %v1532 = vadd.f32 %v1452, %v1494
        %v1533 = vadd.f32 %v1453, %v1498
        %v1534 = vadd.f32 %v1454, %v1502
        %v1535 = vadd.f32 %v1455, %v1506
        %v1536 = vadd.f32 %v1456, %v1510
        %v1537 = vadd.f32 %v1457, %v1514
        %v1538 = vadd.f32 %v1458, %v1518
        %v1539 = vadd.f32 %v1459, %v1522
        %s1540 = scalar_lea.vmem %s4, 64
        %v1541 = vld [vmem:[%s1540] sm:$0xf]
        %v1542 = vld [vmem:[%s1540 + $0x4] sm:$0xf]
        %v1543 = vld [vmem:[%s1540 + $0x8] sm:$0xf]
        %v1544 = vld [vmem:[%s1540 + $0xc] sm:$0xf]
        %v1545 = vld [vmem:[%s1540 + $0x10] sm:$0xf]
        %v1546 = vld [vmem:[%s1540 + $0x14] sm:$0xf]
        %v1547 = vld [vmem:[%s1540 + $0x18] sm:$0xf]
        %v1548 = vld [vmem:[%s1540 + $0x1c] sm:$0xf]
        %v1549 = vld [vmem:[%s1540 + $0x20] sm:$0xf]
        %v1550 = vld [vmem:[%s1540 + $0x24] sm:$0xf]
        %v1551 = vld [vmem:[%s1540 + $0x28] sm:$0xf]
        %v1552 = vld [vmem:[%s1540 + $0x2c] sm:$0xf]
        %v1553 = vld [vmem:[%s1540 + $0x30] sm:$0xf]
        %v1554 = vld [vmem:[%s1540 + $0x34] sm:$0xf]
        %v1555 = vld [vmem:[%s1540 + $0x38] sm:$0xf]
        %v1556 = vld [vmem:[%s1540 + $0x3c] sm:$0xf]
        %v1557 = vpack.c.bf16 %v1525, %v1524
        %v1558 = vpack.c.bf16 %v1527, %v1526
        %v1559 = vpack.c.bf16 %v1529, %v1528
        %v1560 = vpack.c.bf16 %v1531, %v1530
        %v1561 = vpack.c.bf16 %v1533, %v1532
        %v1562 = vpack.c.bf16 %v1535, %v1534
        %v1563 = vpack.c.bf16 %v1537, %v1536
        %v1564 = vpack.c.bf16 %v1539, %v1538
        %1565 = vset.pattern.permute.xlu0 3
        %1566 = vperm.xlu0 %1565, %v1044
        %v1567 = vpop.permute.xlu0 %1566
        %1569 = vset.pattern.permute.xlu0 3
        %1570 = vperm.xlu0 %1569, %v1045
        %v1571 = vpop.permute.xlu0 %1570
        %1573 = vset.pattern.permute.xlu0 3
        %1574 = vperm.xlu0 %1573, %v1046
        %v1575 = vpop.permute.xlu0 %1574
        %1577 = vset.pattern.permute.xlu0 3
        %1578 = vperm.xlu0 %1577, %v1047
        %v1579 = vpop.permute.xlu0 %1578
        %1581 = vset.pattern.permute.xlu0 3
        %1582 = vperm.xlu0 %1581, %v1048
        %v1583 = vpop.permute.xlu0 %1582
        %1585 = vset.pattern.permute.xlu0 3
        %1586 = vperm.xlu0 %1585, %v1049
        %v1587 = vpop.permute.xlu0 %1586
        %1589 = vset.pattern.permute.xlu0 3
        %1590 = vperm.xlu0 %1589, %v1050
        %v1591 = vpop.permute.xlu0 %1590
        %1593 = vset.pattern.permute.xlu0 3
        %1594 = vperm.xlu0 %1593, %v1051
        %v1595 = vpop.permute.xlu0 %1594
        %1597 = vset.pattern.permute.xlu0 3
        %1598 = vperm.xlu0 %1597, %v1052
        %v1599 = vpop.permute.xlu0 %1598
        %1601 = vset.pattern.permute.xlu0 3
        %1602 = vperm.xlu0 %1601, %v1053
        %v1603 = vpop.permute.xlu0 %1602
        %1605 = vset.pattern.permute.xlu0 3
        %1606 = vperm.xlu0 %1605, %v1054
        %v1607 = vpop.permute.xlu0 %1606
        %1609 = vset.pattern.permute.xlu0 3
        %1610 = vperm.xlu0 %1609, %v1055
        %v1611 = vpop.permute.xlu0 %1610
        %1613 = vset.pattern.permute.xlu0 3
        %1614 = vperm.xlu0 %1613, %v1056
        %v1615 = vpop.permute.xlu0 %1614
        %1617 = vset.pattern.permute.xlu0 3
        %1618 = vperm.xlu0 %1617, %v1057
        %v1619 = vpop.permute.xlu0 %1618
        %1621 = vset.pattern.permute.xlu0 3
        %1622 = vperm.xlu0 %1621, %v1058
        %v1623 = vpop.permute.xlu0 %1622
        %1625 = vset.pattern.permute.xlu0 3
        %1626 = vperm.xlu0 %1625, %v1059
        %v1627 = vpop.permute.xlu0 %1626
        %v1645 = vunpack.c.l.b16 %v1541
        %v1646 = vunpack.c.l.b16 %v1542
        %v1647 = vunpack.c.l.b16 %v1543
        %v1648 = vunpack.c.l.b16 %v1544
        %v1649 = vunpack.c.l.b16 %v1545
        %v1650 = vunpack.c.l.b16 %v1546
        %v1651 = vunpack.c.l.b16 %v1547
        %v1652 = vunpack.c.l.b16 %v1548
        %v1653 = vunpack.c.l.b16 %v1549
        %v1654 = vunpack.c.l.b16 %v1550
        %v1655 = vunpack.c.l.b16 %v1551
        %v1656 = vunpack.c.l.b16 %v1552
        %v1657 = vunpack.c.l.b16 %v1553
        %v1658 = vunpack.c.l.b16 %v1554
        %v1659 = vunpack.c.l.b16 %v1555
        %v1660 = vunpack.c.l.b16 %v1556
        %v1661 = vpack.c.b16 %v1646, %v1645
        %v1662 = vpack.c.b16 %v1648, %v1647
        %v1663 = vpack.c.b16 %v1650, %v1649
        %v1664 = vpack.c.b16 %v1652, %v1651
        %v1665 = vpack.c.b16 %v1654, %v1653
        %v1666 = vpack.c.b16 %v1656, %v1655
        %v1667 = vpack.c.b16 %v1658, %v1657
        %v1668 = vpack.c.b16 %v1660, %v1659
        %1677 = vmatprep.subr.bf16.mxu0 0
        %1678 = vmatpush1.bf16.msra.mxu0 %v1564
        %1679 = vmatprep.subr.bf16.mxu0 0
        %1680 = vmatpush1.bf16.msra.mxu0 %v1563
        %1681 = vmatprep.subr.bf16.mxu0 0
        %1682 = vmatpush1.bf16.msra.mxu0 %v1562
        %1683 = vmatprep.subr.bf16.mxu0 0
        %1684 = vmatpush1.bf16.msra.mxu0 %v1561
        %1685 = vmatprep.subr.bf16.mxu0 0
        %1686 = vmatpush1.bf16.msra.mxu0 %v1560
        %1687 = vmatprep.subr.bf16.mxu0 0
        %1688 = vmatpush1.bf16.msra.mxu0 %v1559
        %1689 = vmatprep.subr.bf16.mxu0 0
        %1690 = vmatpush1.bf16.msra.mxu0 %v1558
        %1691 = vmatprep.subr.bf16.mxu0 0
        %1692 = vmatpush1.bf16.msra.mxu0 %v1557
        %1693 = vmatprep.subr.bf16.mxu0 0
        %1694 = vmatpush2.bf16.msra.mxu0 0
        %1695 = vmatprep.subr.bf16.mxu0 0
        %1696 = vmatpush2.bf16.msra.mxu0 0
        %1697 = vmatprep.subr.bf16.mxu0 0
        %1698 = vmatpush2.bf16.msra.mxu0 0
        %1699 = vmatprep.subr.bf16.mxu0 0
        %1700 = vmatpush2.bf16.msra.mxu0 0
        %1701 = vmatprep.subr.bf16.mxu0 0
        %1702 = vmatpush2.bf16.msra.mxu0 0
        %1703 = vmatprep.subr.bf16.mxu0 0
        %1704 = vmatpush2.bf16.msra.mxu0 0
        %1705 = vmatprep.subr.bf16.mxu0 0
        %1706 = vmatpush2.bf16.msra.mxu0 0
        %1707 = vmatprep.subr.bf16.mxu0 0
        %1708 = vmatpush2.bf16.msra.mxu0 0
        %1709 = vmatprep.mubr.bf16.mxu0 0
        %1710 = vmatmul.mubr.bf16.gmra.mxu0 %v1661
        %v1711 = vpop.f32.mrf.mxu0
        %v1712 = vadd.f32 %v1567, %v1711
        %v1713 = vpop.f32.mrf.mxu0
        %v1714 = vpop.f32.mrf.mxu0
        %v1715 = vadd.f32 %v1571, %v1714
        %v1716 = vpop.f32.mrf.mxu0
        %1717 = vmatprep.mubr.bf16.mxu0 0
        %1718 = vmatmul.mubr.bf16.gmra.mxu0 %v1662
        %v1719 = vpop.f32.mrf.mxu0
        %v1720 = vadd.f32 %v1575, %v1719
        %v1721 = vpop.f32.mrf.mxu0
        %v1722 = vpop.f32.mrf.mxu0
        %v1723 = vadd.f32 %v1579, %v1722
        %v1724 = vpop.f32.mrf.mxu0
        %1725 = vmatprep.mubr.bf16.mxu0 0
        %1726 = vmatmul.mubr.bf16.gmra.mxu0 %v1663
        %v1727 = vpop.f32.mrf.mxu0
        %v1728 = vadd.f32 %v1583, %v1727
        %v1729 = vpop.f32.mrf.mxu0
        %v1730 = vpop.f32.mrf.mxu0
        %v1731 = vadd.f32 %v1587, %v1730
        %v1732 = vpop.f32.mrf.mxu0
        %1733 = vmatprep.mubr.bf16.mxu0 0
        %1734 = vmatmul.mubr.bf16.gmra.mxu0 %v1664
        %v1735 = vpop.f32.mrf.mxu0
        %v1736 = vadd.f32 %v1591, %v1735
        %v1737 = vpop.f32.mrf.mxu0
        %v1738 = vpop.f32.mrf.mxu0
        %v1739 = vadd.f32 %v1595, %v1738
        %v1740 = vpop.f32.mrf.mxu0
        %1741 = vmatprep.mubr.bf16.mxu0 0
        %1742 = vmatmul.mubr.bf16.gmra.mxu0 %v1665
        %v1743 = vpop.f32.mrf.mxu0
        %v1744 = vadd.f32 %v1599, %v1743
        %v1745 = vpop.f32.mrf.mxu0
        %v1746 = vpop.f32.mrf.mxu0
        %v1747 = vadd.f32 %v1603, %v1746
        %v1748 = vpop.f32.mrf.mxu0
        %1749 = vmatprep.mubr.bf16.mxu0 0
        %1750 = vmatmul.mubr.bf16.gmra.mxu0 %v1666
        %v1751 = vpop.f32.mrf.mxu0
        %v1752 = vadd.f32 %v1607, %v1751
        %v1753 = vpop.f32.mrf.mxu0
        %v1754 = vpop.f32.mrf.mxu0
        %v1755 = vadd.f32 %v1611, %v1754
        %v1756 = vpop.f32.mrf.mxu0
        %1757 = vmatprep.mubr.bf16.mxu0 0
        %1758 = vmatmul.mubr.bf16.gmra.mxu0 %v1667
        %v1759 = vpop.f32.mrf.mxu0
        %v1760 = vadd.f32 %v1615, %v1759
        %v1761 = vpop.f32.mrf.mxu0
        %v1762 = vpop.f32.mrf.mxu0
        %v1763 = vadd.f32 %v1619, %v1762
        %v1764 = vpop.f32.mrf.mxu0
        %1765 = vmatprep.mubr.bf16.mxu0 0
        %1766 = vmatmul.mubr.bf16.gmra.mxu0 %v1668
        %v1767 = vpop.f32.mrf.mxu0
        %v1768 = vadd.f32 %v1623, %v1767
        %v1769 = vpop.f32.mrf.mxu0
        %v1770 = vpop.f32.mrf.mxu0
        %v1771 = vadd.f32 %v1627, %v1770
        %v1772 = vpop.f32.mrf.mxu0
        %1773 = vdwg.mxu0
        %v1774 = vadd.f32 %v1712, %v1223
        %v1775 = vadd.f32 %v1715, %v1226
        %v1776 = vadd.f32 %v1720, %v1231
        %v1777 = vadd.f32 %v1723, %v1234
        %v1778 = vadd.f32 %v1728, %v1239
        %v1779 = vadd.f32 %v1731, %v1242
        %v1780 = vadd.f32 %v1736, %v1247
        %v1781 = vadd.f32 %v1739, %v1250
        %v1782 = vadd.f32 %v1744, %v1255
        %v1783 = vadd.f32 %v1747, %v1258
        %v1784 = vadd.f32 %v1752, %v1263
        %v1785 = vadd.f32 %v1755, %v1266
        %v1786 = vadd.f32 %v1760, %v1271
        %v1787 = vadd.f32 %v1763, %v1274
        %v1788 = vadd.f32 %v1768, %v1279
        %v1789 = vadd.f32 %v1771, %v1282
        %v1790 = vadd.f32 %v1774, %v1775
        %v1791 = vadd.f32 %v1790, %v1776
        %v1792 = vadd.f32 %v1791, %v1777
        %v1793 = vadd.f32 %v1792, %v1778
        %v1794 = vadd.f32 %v1793, %v1779
        %v1795 = vadd.f32 %v1794, %v1780
        %v1796 = vadd.f32 %v1795, %v1781
        %v1797 = vadd.f32 %v1796, %v1782
        %v1798 = vadd.f32 %v1797, %v1783
        %v1799 = vadd.f32 %v1798, %v1784
        %v1800 = vadd.f32 %v1799, %v1785
        %v1801 = vadd.f32 %v1800, %v1786
        %v1802 = vadd.f32 %v1801, %v1787
        %v1803 = vadd.f32 %v1802, %v1788
        %v1804 = vadd.f32 %v1803, %v1789
        %v1805 = vrot.slane %v1804, 4
        %v1806 = vadd.f32 %v1804, %v1805
        %v1807 = vrot.slane %v1806, 2
        %v1808 = vadd.f32 %v1806, %v1807
        %v1809 = vrot.slane %v1808, 1
        %v1810 = vadd.f32 %v1808, %v1809
        %v1811 = vmul.f32 %v1810, %v1306
        %v1812 = vsub.f32 %v1774, %v1811
        %v1813 = vsub.f32 %v1775, %v1811
        %v1814 = vsub.f32 %v1776, %v1811
        %v1815 = vsub.f32 %v1777, %v1811
        %v1816 = vsub.f32 %v1778, %v1811
        %v1817 = vsub.f32 %v1779, %v1811
        %v1818 = vsub.f32 %v1780, %v1811
        %v1819 = vsub.f32 %v1781, %v1811
        %v1820 = vsub.f32 %v1782, %v1811
        %v1821 = vsub.f32 %v1783, %v1811
        %v1822 = vsub.f32 %v1784, %v1811
        %v1823 = vsub.f32 %v1785, %v1811
        %v1824 = vsub.f32 %v1786, %v1811
        %v1825 = vsub.f32 %v1787, %v1811
        %v1826 = vsub.f32 %v1788, %v1811
        %v1827 = vsub.f32 %v1789, %v1811
        %v1828 = vmul.f32 %v1812, %v1812
        %v1829 = vmul.f32 %v1813, %v1813
        %v1830 = vmul.f32 %v1814, %v1814
        %v1831 = vmul.f32 %v1815, %v1815
        %v1832 = vmul.f32 %v1816, %v1816
        %v1833 = vmul.f32 %v1817, %v1817
        %v1834 = vmul.f32 %v1818, %v1818
        %v1835 = vmul.f32 %v1819, %v1819
        %v1836 = vmul.f32 %v1820, %v1820
        %v1837 = vmul.f32 %v1821, %v1821
        %v1838 = vmul.f32 %v1822, %v1822
        %v1839 = vmul.f32 %v1823, %v1823
        %v1840 = vmul.f32 %v1824, %v1824
        %v1841 = vmul.f32 %v1825, %v1825
        %v1842 = vmul.f32 %v1826, %v1826
        %v1843 = vmul.f32 %v1827, %v1827
        %v1844 = vadd.f32 %v1828, %v1829
        %v1845 = vadd.f32 %v1844, %v1830
        %v1846 = vadd.f32 %v1845, %v1831
        %v1847 = vadd.f32 %v1846, %v1832
        %v1848 = vadd.f32 %v1847, %v1833
        %v1849 = vadd.f32 %v1848, %v1834
        %v1850 = vadd.f32 %v1849, %v1835
        %v1851 = vadd.f32 %v1850, %v1836
        %v1852 = vadd.f32 %v1851, %v1837
        %v1853 = vadd.f32 %v1852, %v1838
        %v1854 = vadd.f32 %v1853, %v1839
        %v1855 = vadd.f32 %v1854, %v1840
        %v1856 = vadd.f32 %v1855, %v1841
        %v1857 = vadd.f32 %v1856, %v1842
        %v1858 = vadd.f32 %v1857, %v1843
        %v1859 = vrot.slane %v1858, 4
        %v1860 = vadd.f32 %v1858, %v1859
        %v1861 = vrot.slane %v1860, 2
        %v1862 = vadd.f32 %v1860, %v1861
        %v1863 = vrot.slane %v1862, 1
        %v1864 = vadd.f32 %v1862, %v1863
        %v1865 = vmul.f32 %v1864, %v1306
        %v1866 = vadd.f32 %v1865, 1e-05
        %v1867 = vrsqrt.pop %v1866
        %v1868 = vmul.f32 %v1812, %v1867
        %v1869 = vmul.f32 %v1813, %v1867
        %v1870 = vmul.f32 %v1814, %v1867
        %v1871 = vmul.f32 %v1815, %v1867
        %v1872 = vmul.f32 %v1816, %v1867
        %v1873 = vmul.f32 %v1817, %v1867
        %v1874 = vmul.f32 %v1818, %v1867
        %v1875 = vmul.f32 %v1819, %v1867
        %v1876 = vmul.f32 %v1820, %v1867
        %v1877 = vmul.f32 %v1821, %v1867
        %v1878 = vmul.f32 %v1822, %v1867
        %v1879 = vmul.f32 %v1823, %v1867
        %v1880 = vmul.f32 %v1824, %v1867
        %v1881 = vmul.f32 %v1825, %v1867
        %v1882 = vmul.f32 %v1826, %v1867
        %v1883 = vmul.f32 %v1827, %v1867
        %1884 = vset.pattern.permute.xlu0 4
        %1885 = vperm.xlu0 %1884, %v1044
        %v1886 = vpop.permute.xlu0 %1885
        %1888 = vset.pattern.permute.xlu0 4
        %1889 = vperm.xlu0 %1888, %v1045
        %v1890 = vpop.permute.xlu0 %1889
        %1892 = vset.pattern.permute.xlu0 4
        %1893 = vperm.xlu0 %1892, %v1046
        %v1894 = vpop.permute.xlu0 %1893
        %1896 = vset.pattern.permute.xlu0 4
        %1897 = vperm.xlu0 %1896, %v1047
        %v1898 = vpop.permute.xlu0 %1897
        %1900 = vset.pattern.permute.xlu0 4
        %1901 = vperm.xlu0 %1900, %v1048
        %v1902 = vpop.permute.xlu0 %1901
        %1904 = vset.pattern.permute.xlu0 4
        %1905 = vperm.xlu0 %1904, %v1049
        %v1906 = vpop.permute.xlu0 %1905
        %1908 = vset.pattern.permute.xlu0 4
        %1909 = vperm.xlu0 %1908, %v1050
        %v1910 = vpop.permute.xlu0 %1909
        %1912 = vset.pattern.permute.xlu0 4
        %1913 = vperm.xlu0 %1912, %v1051
        %v1914 = vpop.permute.xlu0 %1913
        %1916 = vset.pattern.permute.xlu0 4
        %1917 = vperm.xlu0 %1916, %v1052
        %v1918 = vpop.permute.xlu0 %1917
        %1920 = vset.pattern.permute.xlu0 4
        %1921 = vperm.xlu0 %1920, %v1053
        %v1922 = vpop.permute.xlu0 %1921
        %1924 = vset.pattern.permute.xlu0 4
        %1925 = vperm.xlu0 %1924, %v1054
        %v1926 = vpop.permute.xlu0 %1925
        %1928 = vset.pattern.permute.xlu0 4
        %1929 = vperm.xlu0 %1928, %v1055
        %v1930 = vpop.permute.xlu0 %1929
        %1932 = vset.pattern.permute.xlu0 4
        %1933 = vperm.xlu0 %1932, %v1056
        %v1934 = vpop.permute.xlu0 %1933
        %1936 = vset.pattern.permute.xlu0 4
        %1937 = vperm.xlu0 %1936, %v1057
        %v1938 = vpop.permute.xlu0 %1937
        %1940 = vset.pattern.permute.xlu0 4
        %1941 = vperm.xlu0 %1940, %v1058
        %v1942 = vpop.permute.xlu0 %1941
        %1944 = vset.pattern.permute.xlu0 4
        %1945 = vperm.xlu0 %1944, %v1059
        %v1946 = vpop.permute.xlu0 %1945
        %v1948 = vmul.f32 %v1868, %v1886
        %v1949 = vmul.f32 %v1869, %v1890
        %v1950 = vmul.f32 %v1870, %v1894
        %v1951 = vmul.f32 %v1871, %v1898
        %v1952 = vmul.f32 %v1872, %v1902
        %v1953 = vmul.f32 %v1873, %v1906
        %v1954 = vmul.f32 %v1874, %v1910
        %v1955 = vmul.f32 %v1875, %v1914
        %v1956 = vmul.f32 %v1876, %v1918
        %v1957 = vmul.f32 %v1877, %v1922
        %v1958 = vmul.f32 %v1878, %v1926
        %v1959 = vmul.f32 %v1879, %v1930
        %v1960 = vmul.f32 %v1880, %v1934
        %v1961 = vmul.f32 %v1881, %v1938
        %v1962 = vmul.f32 %v1882, %v1942
        %v1963 = vmul.f32 %v1883, %v1946
        %1964 = vset.pattern.permute.xlu0 5
        %1965 = vperm.xlu0 %1964, %v1044
        %v1966 = vpop.permute.xlu0 %1965
        %1968 = vset.pattern.permute.xlu0 5
        %1969 = vperm.xlu0 %1968, %v1045
        %v1970 = vpop.permute.xlu0 %1969
        %1972 = vset.pattern.permute.xlu0 5
        %1973 = vperm.xlu0 %1972, %v1046
        %v1974 = vpop.permute.xlu0 %1973
        %1976 = vset.pattern.permute.xlu0 5
        %1977 = vperm.xlu0 %1976, %v1047
        %v1978 = vpop.permute.xlu0 %1977
        %1980 = vset.pattern.permute.xlu0 5
        %1981 = vperm.xlu0 %1980, %v1048
        %v1982 = vpop.permute.xlu0 %1981
        %1984 = vset.pattern.permute.xlu0 5
        %1985 = vperm.xlu0 %1984, %v1049
        %v1986 = vpop.permute.xlu0 %1985
        %1988 = vset.pattern.permute.xlu0 5
        %1989 = vperm.xlu0 %1988, %v1050
        %v1990 = vpop.permute.xlu0 %1989
        %1992 = vset.pattern.permute.xlu0 5
        %1993 = vperm.xlu0 %1992, %v1051
        %v1994 = vpop.permute.xlu0 %1993
        %1996 = vset.pattern.permute.xlu0 5
        %1997 = vperm.xlu0 %1996, %v1052
        %v1998 = vpop.permute.xlu0 %1997
        %2000 = vset.pattern.permute.xlu0 5
        %2001 = vperm.xlu0 %2000, %v1053
        %v2002 = vpop.permute.xlu0 %2001
        %2004 = vset.pattern.permute.xlu0 5
        %2005 = vperm.xlu0 %2004, %v1054
        %v2006 = vpop.permute.xlu0 %2005
        %2008 = vset.pattern.permute.xlu0 5
        %2009 = vperm.xlu0 %2008, %v1055
        %v2010 = vpop.permute.xlu0 %2009
        %2012 = vset.pattern.permute.xlu0 5
        %2013 = vperm.xlu0 %2012, %v1056
        %v2014 = vpop.permute.xlu0 %2013
        %2016 = vset.pattern.permute.xlu0 5
        %2017 = vperm.xlu0 %2016, %v1057
        %v2018 = vpop.permute.xlu0 %2017
        %2020 = vset.pattern.permute.xlu0 5
        %2021 = vperm.xlu0 %2020, %v1058
        %v2022 = vpop.permute.xlu0 %2021
        %2024 = vset.pattern.permute.xlu0 5
        %2025 = vperm.xlu0 %2024, %v1059
        %v2026 = vpop.permute.xlu0 %2025
        %v2028 = vadd.f32 %v1948, %v1966
        %v2029 = vadd.f32 %v1949, %v1970
        %v2030 = vadd.f32 %v1950, %v1974
        %v2031 = vadd.f32 %v1951, %v1978
        %v2032 = vadd.f32 %v1952, %v1982
        %v2033 = vadd.f32 %v1953, %v1986
        %v2034 = vadd.f32 %v1954, %v1990
        %v2035 = vadd.f32 %v1955, %v1994
        %v2036 = vadd.f32 %v1956, %v1998
        %v2037 = vadd.f32 %v1957, %v2002
        %v2038 = vadd.f32 %v1958, %v2006
        %v2039 = vadd.f32 %v1959, %v2010
        %v2040 = vadd.f32 %v1960, %v2014
        %v2041 = vadd.f32 %v1961, %v2018
        %v2042 = vadd.f32 %v1962, %v2022
        %v2043 = vadd.f32 %v1963, %v2026
        %s2044 = scalar_lea.vmem %s4, 128
        %v2045 = vld [vmem:[%s2044] sm:$0xf]
        %v2046 = vld [vmem:[%s2044 + $0x4] sm:$0xf]
        %v2047 = vld [vmem:[%s2044 + $0x8] sm:$0xf]
        %v2048 = vld [vmem:[%s2044 + $0xc] sm:$0xf]
        %v2049 = vld [vmem:[%s2044 + $0x10] sm:$0xf]
        %v2050 = vld [vmem:[%s2044 + $0x14] sm:$0xf]
        %v2051 = vld [vmem:[%s2044 + $0x18] sm:$0xf]
        %v2052 = vld [vmem:[%s2044 + $0x1c] sm:$0xf]
        %v2053 = vld [vmem:[%s2044 + $0x20] sm:$0xf]
        %v2054 = vld [vmem:[%s2044 + $0x24] sm:$0xf]
        %v2055 = vld [vmem:[%s2044 + $0x28] sm:$0xf]
        %v2056 = vld [vmem:[%s2044 + $0x2c] sm:$0xf]
        %v2057 = vld [vmem:[%s2044 + $0x30] sm:$0xf]
        %v2058 = vld [vmem:[%s2044 + $0x34] sm:$0xf]
        %v2059 = vld [vmem:[%s2044 + $0x38] sm:$0xf]
        %v2060 = vld [vmem:[%s2044 + $0x3c] sm:$0xf]
        %v2061 = vpack.c.bf16 %v2029, %v2028
        %v2062 = vpack.c.bf16 %v2031, %v2030
        %v2063 = vpack.c.bf16 %v2033, %v2032
        %v2064 = vpack.c.bf16 %v2035, %v2034
        %v2065 = vpack.c.bf16 %v2037, %v2036
        %v2066 = vpack.c.bf16 %v2039, %v2038
        %v2067 = vpack.c.bf16 %v2041, %v2040
        %v2068 = vpack.c.bf16 %v2043, %v2042
        %2069 = vset.pattern.permute.xlu0 6
        %2070 = vperm.xlu0 %2069, %v1044
        %v2071 = vpop.permute.xlu0 %2070
        %2073 = vset.pattern.permute.xlu0 6
        %2074 = vperm.xlu0 %2073, %v1045
        %v2075 = vpop.permute.xlu0 %2074
        %2077 = vset.pattern.permute.xlu0 6
        %2078 = vperm.xlu0 %2077, %v1046
        %v2079 = vpop.permute.xlu0 %2078
        %2081 = vset.pattern.permute.xlu0 6
        %2082 = vperm.xlu0 %2081, %v1047
        %v2083 = vpop.permute.xlu0 %2082
        %2085 = vset.pattern.permute.xlu0 6
        %2086 = vperm.xlu0 %2085, %v1048
        %v2087 = vpop.permute.xlu0 %2086
        %2089 = vset.pattern.permute.xlu0 6
        %2090 = vperm.xlu0 %2089, %v1049
        %v2091 = vpop.permute.xlu0 %2090
        %2093 = vset.pattern.permute.xlu0 6
        %2094 = vperm.xlu0 %2093, %v1050
        %v2095 = vpop.permute.xlu0 %2094
        %2097 = vset.pattern.permute.xlu0 6
        %2098 = vperm.xlu0 %2097, %v1051
        %v2099 = vpop.permute.xlu0 %2098
        %2101 = vset.pattern.permute.xlu0 6
        %2102 = vperm.xlu0 %2101, %v1052
        %v2103 = vpop.permute.xlu0 %2102
        %2105 = vset.pattern.permute.xlu0 6
        %2106 = vperm.xlu0 %2105, %v1053
        %v2107 = vpop.permute.xlu0 %2106
        %2109 = vset.pattern.permute.xlu0 6
        %2110 = vperm.xlu0 %2109, %v1054
        %v2111 = vpop.permute.xlu0 %2110
        %2113 = vset.pattern.permute.xlu0 6
        %2114 = vperm.xlu0 %2113, %v1055
        %v2115 = vpop.permute.xlu0 %2114
        %2117 = vset.pattern.permute.xlu0 6
        %2118 = vperm.xlu0 %2117, %v1056
        %v2119 = vpop.permute.xlu0 %2118
        %2121 = vset.pattern.permute.xlu0 6
        %2122 = vperm.xlu0 %2121, %v1057
        %v2123 = vpop.permute.xlu0 %2122
        %2125 = vset.pattern.permute.xlu0 6
        %2126 = vperm.xlu0 %2125, %v1058
        %v2127 = vpop.permute.xlu0 %2126
        %2129 = vset.pattern.permute.xlu0 6
        %2130 = vperm.xlu0 %2129, %v1059
        %v2131 = vpop.permute.xlu0 %2130
        %v2149 = vunpack.c.l.b16 %v2045
        %v2150 = vunpack.c.l.b16 %v2046
        %v2151 = vunpack.c.l.b16 %v2047
        %v2152 = vunpack.c.l.b16 %v2048
        %v2153 = vunpack.c.l.b16 %v2049
        %v2154 = vunpack.c.l.b16 %v2050
        %v2155 = vunpack.c.l.b16 %v2051
        %v2156 = vunpack.c.l.b16 %v2052
        %v2157 = vunpack.c.l.b16 %v2053
        %v2158 = vunpack.c.l.b16 %v2054
        %v2159 = vunpack.c.l.b16 %v2055
        %v2160 = vunpack.c.l.b16 %v2056
        %v2161 = vunpack.c.l.b16 %v2057
        %v2162 = vunpack.c.l.b16 %v2058
        %v2163 = vunpack.c.l.b16 %v2059
        %v2164 = vunpack.c.l.b16 %v2060
        %v2165 = vpack.c.b16 %v2150, %v2149
        %v2166 = vpack.c.b16 %v2152, %v2151
        %v2167 = vpack.c.b16 %v2154, %v2153
        %v2168 = vpack.c.b16 %v2156, %v2155
        %v2169 = vpack.c.b16 %v2158, %v2157
        %v2170 = vpack.c.b16 %v2160, %v2159
        %v2171 = vpack.c.b16 %v2162, %v2161
        %v2172 = vpack.c.b16 %v2164, %v2163
        %2181 = vmatprep.subr.bf16.mxu0 0
        %2182 = vmatpush1.bf16.msra.mxu0 %v2068
        %2183 = vmatprep.subr.bf16.mxu0 0
        %2184 = vmatpush1.bf16.msra.mxu0 %v2067
        %2185 = vmatprep.subr.bf16.mxu0 0
        %2186 = vmatpush1.bf16.msra.mxu0 %v2066
        %2187 = vmatprep.subr.bf16.mxu0 0
        %2188 = vmatpush1.bf16.msra.mxu0 %v2065
        %2189 = vmatprep.subr.bf16.mxu0 0
        %2190 = vmatpush1.bf16.msra.mxu0 %v2064
        %2191 = vmatprep.subr.bf16.mxu0 0
        %2192 = vmatpush1.bf16.msra.mxu0 %v2063
        %2193 = vmatprep.subr.bf16.mxu0 0
        %2194 = vmatpush1.bf16.msra.mxu0 %v2062
        %2195 = vmatprep.subr.bf16.mxu0 0
        %2196 = vmatpush1.bf16.msra.mxu0 %v2061
        %2197 = vmatprep.subr.bf16.mxu0 0
        %2198 = vmatpush2.bf16.msra.mxu0 0
        %2199 = vmatprep.subr.bf16.mxu0 0
        %2200 = vmatpush2.bf16.msra.mxu0 0
        %2201 = vmatprep.subr.bf16.mxu0 0
        %2202 = vmatpush2.bf16.msra.mxu0 0
        %2203 = vmatprep.subr.bf16.mxu0 0
        %2204 = vmatpush2.bf16.msra.mxu0 0
        %2205 = vmatprep.subr.bf16.mxu0 0
        %2206 = vmatpush2.bf16.msra.mxu0 0
        %2207 = vmatprep.subr.bf16.mxu0 0
        %2208 = vmatpush2.bf16.msra.mxu0 0
        %2209 = vmatprep.subr.bf16.mxu0 0
        %2210 = vmatpush2.bf16.msra.mxu0 0
        %2211 = vmatprep.subr.bf16.mxu0 0
        %2212 = vmatpush2.bf16.msra.mxu0 0
        %2213 = vmatprep.mubr.bf16.mxu0 0
        %2214 = vmatmul.mubr.bf16.gmra.mxu0 %v2165
        %v2215 = vpop.f32.mrf.mxu0
        %v2216 = vadd.f32 %v2071, %v2215
        %v2217 = vpop.f32.mrf.mxu0
        %v2218 = vpop.f32.mrf.mxu0
        %v2219 = vadd.f32 %v2075, %v2218
        %v2220 = vpop.f32.mrf.mxu0
        %2221 = vmatprep.mubr.bf16.mxu0 0
        %2222 = vmatmul.mubr.bf16.gmra.mxu0 %v2166
        %v2223 = vpop.f32.mrf.mxu0
        %v2224 = vadd.f32 %v2079, %v2223
        %v2225 = vpop.f32.mrf.mxu0
        %v2226 = vpop.f32.mrf.mxu0
        %v2227 = vadd.f32 %v2083, %v2226
        %v2228 = vpop.f32.mrf.mxu0
        %2229 = vmatprep.mubr.bf16.mxu0 0
        %2230 = vmatmul.mubr.bf16.gmra.mxu0 %v2167
        %v2231 = vpop.f32.mrf.mxu0
        %v2232 = vadd.f32 %v2087, %v2231
        %v2233 = vpop.f32.mrf.mxu0
        %v2234 = vpop.f32.mrf.mxu0
        %v2235 = vadd.f32 %v2091, %v2234
        %v2236 = vpop.f32.mrf.mxu0
        %2237 = vmatprep.mubr.bf16.mxu0 0
        %2238 = vmatmul.mubr.bf16.gmra.mxu0 %v2168
        %v2239 = vpop.f32.mrf.mxu0
        %v2240 = vadd.f32 %v2095, %v2239
        %v2241 = vpop.f32.mrf.mxu0
        %v2242 = vpop.f32.mrf.mxu0
        %v2243 = vadd.f32 %v2099, %v2242
        %v2244 = vpop.f32.mrf.mxu0
        %2245 = vmatprep.mubr.bf16.mxu0 0
        %2246 = vmatmul.mubr.bf16.gmra.mxu0 %v2169
        %v2247 = vpop.f32.mrf.mxu0
        %v2248 = vadd.f32 %v2103, %v2247
        %v2249 = vpop.f32.mrf.mxu0
        %v2250 = vpop.f32.mrf.mxu0
        %v2251 = vadd.f32 %v2107, %v2250
        %v2252 = vpop.f32.mrf.mxu0
        %2253 = vmatprep.mubr.bf16.mxu0 0
        %2254 = vmatmul.mubr.bf16.gmra.mxu0 %v2170
        %v2255 = vpop.f32.mrf.mxu0
        %v2256 = vadd.f32 %v2111, %v2255
        %v2257 = vpop.f32.mrf.mxu0
        %v2258 = vpop.f32.mrf.mxu0
        %v2259 = vadd.f32 %v2115, %v2258
        %v2260 = vpop.f32.mrf.mxu0
        %2261 = vmatprep.mubr.bf16.mxu0 0
        %2262 = vmatmul.mubr.bf16.gmra.mxu0 %v2171
        %v2263 = vpop.f32.mrf.mxu0
        %v2264 = vadd.f32 %v2119, %v2263
        %v2265 = vpop.f32.mrf.mxu0
        %v2266 = vpop.f32.mrf.mxu0
        %v2267 = vadd.f32 %v2123, %v2266
        %v2268 = vpop.f32.mrf.mxu0
        %2269 = vmatprep.mubr.bf16.mxu0 0
        %2270 = vmatmul.mubr.bf16.gmra.mxu0 %v2172
        %v2271 = vpop.f32.mrf.mxu0
        %v2272 = vadd.f32 %v2127, %v2271
        %v2273 = vpop.f32.mrf.mxu0
        %v2274 = vpop.f32.mrf.mxu0
        %v2275 = vadd.f32 %v2131, %v2274
        %v2276 = vpop.f32.mrf.mxu0
        %2277 = vdwg.mxu0
        %v2278 = vadd.f32 %v2216, %v1774
        %v2279 = vadd.f32 %v2219, %v1775
        %v2280 = vadd.f32 %v2224, %v1776
        %v2281 = vadd.f32 %v2227, %v1777
        %v2282 = vadd.f32 %v2232, %v1778
        %v2283 = vadd.f32 %v2235, %v1779
        %v2284 = vadd.f32 %v2240, %v1780
        %v2285 = vadd.f32 %v2243, %v1781
        %v2286 = vadd.f32 %v2248, %v1782
        %v2287 = vadd.f32 %v2251, %v1783
        %v2288 = vadd.f32 %v2256, %v1784
        %v2289 = vadd.f32 %v2259, %v1785
        %v2290 = vadd.f32 %v2264, %v1786
        %v2291 = vadd.f32 %v2267, %v1787
        %v2292 = vadd.f32 %v2272, %v1788
        %v2293 = vadd.f32 %v2275, %v1789
        %v2294 = vadd.f32 %v2278, %v2279
        %v2295 = vadd.f32 %v2294, %v2280
        %v2296 = vadd.f32 %v2295, %v2281
        %v2297 = vadd.f32 %v2296, %v2282
        %v2298 = vadd.f32 %v2297, %v2283
        %v2299 = vadd.f32 %v2298, %v2284
        %v2300 = vadd.f32 %v2299, %v2285
        %v2301 = vadd.f32 %v2300, %v2286
        %v2302 = vadd.f32 %v2301, %v2287
        %v2303 = vadd.f32 %v2302, %v2288
        %v2304 = vadd.f32 %v2303, %v2289
        %v2305 = vadd.f32 %v2304, %v2290
        %v2306 = vadd.f32 %v2305, %v2291
        %v2307 = vadd.f32 %v2306, %v2292
        %v2308 = vadd.f32 %v2307, %v2293
        %v2309 = vrot.slane %v2308, 4
        %v2310 = vadd.f32 %v2308, %v2309
        %v2311 = vrot.slane %v2310, 2
        %v2312 = vadd.f32 %v2310, %v2311
        %v2313 = vrot.slane %v2312, 1
        %v2314 = vadd.f32 %v2312, %v2313
        %v2315 = vmul.f32 %v2314, %v1306
        %v2316 = vsub.f32 %v2278, %v2315
        %v2317 = vsub.f32 %v2279, %v2315
        %v2318 = vsub.f32 %v2280, %v2315
        %v2319 = vsub.f32 %v2281, %v2315
        %v2320 = vsub.f32 %v2282, %v2315
        %v2321 = vsub.f32 %v2283, %v2315
        %v2322 = vsub.f32 %v2284, %v2315
        %v2323 = vsub.f32 %v2285, %v2315
        %v2324 = vsub.f32 %v2286, %v2315
        %v2325 = vsub.f32 %v2287, %v2315
        %v2326 = vsub.f32 %v2288, %v2315
        %v2327 = vsub.f32 %v2289, %v2315
        %v2328 = vsub.f32 %v2290, %v2315
        %v2329 = vsub.f32 %v2291, %v2315
        %v2330 = vsub.f32 %v2292, %v2315
        %v2331 = vsub.f32 %v2293, %v2315
        %v2332 = vmul.f32 %v2316, %v2316
        %v2333 = vmul.f32 %v2317, %v2317
        %v2334 = vmul.f32 %v2318, %v2318
        %v2335 = vmul.f32 %v2319, %v2319
        %v2336 = vmul.f32 %v2320, %v2320
        %v2337 = vmul.f32 %v2321, %v2321
        %v2338 = vmul.f32 %v2322, %v2322
        %v2339 = vmul.f32 %v2323, %v2323
        %v2340 = vmul.f32 %v2324, %v2324
        %v2341 = vmul.f32 %v2325, %v2325
        %v2342 = vmul.f32 %v2326, %v2326
        %v2343 = vmul.f32 %v2327, %v2327
        %v2344 = vmul.f32 %v2328, %v2328
        %v2345 = vmul.f32 %v2329, %v2329
        %v2346 = vmul.f32 %v2330, %v2330
        %v2347 = vmul.f32 %v2331, %v2331
        %v2348 = vadd.f32 %v2332, %v2333
        %v2349 = vadd.f32 %v2348, %v2334
        %v2350 = vadd.f32 %v2349, %v2335
        %v2351 = vadd.f32 %v2350, %v2336
        %v2352 = vadd.f32 %v2351, %v2337
        %v2353 = vadd.f32 %v2352, %v2338
        %v2354 = vadd.f32 %v2353, %v2339
        %v2355 = vadd.f32 %v2354, %v2340
        %v2356 = vadd.f32 %v2355, %v2341
        %v2357 = vadd.f32 %v2356, %v2342
        %v2358 = vadd.f32 %v2357, %v2343
        %v2359 = vadd.f32 %v2358, %v2344
        %v2360 = vadd.f32 %v2359, %v2345
        %v2361 = vadd.f32 %v2360, %v2346
        %v2362 = vadd.f32 %v2361, %v2347
        %v2363 = vrot.slane %v2362, 4
        %v2364 = vadd.f32 %v2362, %v2363
        %v2365 = vrot.slane %v2364, 2
        %v2366 = vadd.f32 %v2364, %v2365
        %v2367 = vrot.slane %v2366, 1
        %v2368 = vadd.f32 %v2366, %v2367
        %v2369 = vmul.f32 %v2368, %v1306
        %v2370 = vadd.f32 %v2369, 1e-05
        %v2371 = vrsqrt.pop %v2370
        %v2372 = vmul.f32 %v2316, %v2371
        %v2373 = vmul.f32 %v2317, %v2371
        %v2374 = vmul.f32 %v2318, %v2371
        %v2375 = vmul.f32 %v2319, %v2371
        %v2376 = vmul.f32 %v2320, %v2371
        %v2377 = vmul.f32 %v2321, %v2371
        %v2378 = vmul.f32 %v2322, %v2371
        %v2379 = vmul.f32 %v2323, %v2371
        %v2380 = vmul.f32 %v2324, %v2371
        %v2381 = vmul.f32 %v2325, %v2371
        %v2382 = vmul.f32 %v2326, %v2371
        %v2383 = vmul.f32 %v2327, %v2371
        %v2384 = vmul.f32 %v2328, %v2371
        %v2385 = vmul.f32 %v2329, %v2371
        %v2386 = vmul.f32 %v2330, %v2371
        %v2387 = vmul.f32 %v2331, %v2371
        %2388 = vset.pattern.permute.xlu0 7
        %2389 = vperm.xlu0 %2388, %v1044
        %v2390 = vpop.permute.xlu0 %2389
        %2392 = vset.pattern.permute.xlu0 7
        %2393 = vperm.xlu0 %2392, %v1045
        %v2394 = vpop.permute.xlu0 %2393
        %2396 = vset.pattern.permute.xlu0 7
        %2397 = vperm.xlu0 %2396, %v1046
        %v2398 = vpop.permute.xlu0 %2397
        %2400 = vset.pattern.permute.xlu0 7
        %2401 = vperm.xlu0 %2400, %v1047
        %v2402 = vpop.permute.xlu0 %2401
        %2404 = vset.pattern.permute.xlu0 7
        %2405 = vperm.xlu0 %2404, %v1048
        %v2406 = vpop.permute.xlu0 %2405
        %2408 = vset.pattern.permute.xlu0 7
        %2409 = vperm.xlu0 %2408, %v1049
        %v2410 = vpop.permute.xlu0 %2409
        %2412 = vset.pattern.permute.xlu0 7
        %2413 = vperm.xlu0 %2412, %v1050
        %v2414 = vpop.permute.xlu0 %2413
        %2416 = vset.pattern.permute.xlu0 7
        %2417 = vperm.xlu0 %2416, %v1051
        %v2418 = vpop.permute.xlu0 %2417
        %2420 = vset.pattern.permute.xlu0 7
        %2421 = vperm.xlu0 %2420, %v1052
        %v2422 = vpop.permute.xlu0 %2421
        %2424 = vset.pattern.permute.xlu0 7
        %2425 = vperm.xlu0 %2424, %v1053
        %v2426 = vpop.permute.xlu0 %2425
        %2428 = vset.pattern.permute.xlu0 7
        %2429 = vperm.xlu0 %2428, %v1054
        %v2430 = vpop.permute.xlu0 %2429
        %2432 = vset.pattern.permute.xlu0 7
        %2433 = vperm.xlu0 %2432, %v1055
        %v2434 = vpop.permute.xlu0 %2433
        %2436 = vset.pattern.permute.xlu0 7
        %2437 = vperm.xlu0 %2436, %v1056
        %v2438 = vpop.permute.xlu0 %2437
        %2440 = vset.pattern.permute.xlu0 7
        %2441 = vperm.xlu0 %2440, %v1057
        %v2442 = vpop.permute.xlu0 %2441
        %2444 = vset.pattern.permute.xlu0 7
        %2445 = vperm.xlu0 %2444, %v1058
        %v2446 = vpop.permute.xlu0 %2445
        %2448 = vset.pattern.permute.xlu0 7
        %2449 = vperm.xlu0 %2448, %v1059
        %v2450 = vpop.permute.xlu0 %2449
        %v2452 = vmul.f32 %v2372, %v2390
        %v2453 = vmul.f32 %v2373, %v2394
        %v2454 = vmul.f32 %v2374, %v2398
        %v2455 = vmul.f32 %v2375, %v2402
        %v2456 = vmul.f32 %v2376, %v2406
        %v2457 = vmul.f32 %v2377, %v2410
        %v2458 = vmul.f32 %v2378, %v2414
        %v2459 = vmul.f32 %v2379, %v2418
        %v2460 = vmul.f32 %v2380, %v2422
        %v2461 = vmul.f32 %v2381, %v2426
        %v2462 = vmul.f32 %v2382, %v2430
        %v2463 = vmul.f32 %v2383, %v2434
        %v2464 = vmul.f32 %v2384, %v2438
        %v2465 = vmul.f32 %v2385, %v2442
        %v2466 = vmul.f32 %v2386, %v2446
        %v2467 = vmul.f32 %v2387, %v2450
        %2468 = vset.pattern.permute.xlu0 8
        %2469 = vperm.xlu0 %2468, %v1044
        %v2470 = vpop.permute.xlu0 %2469
        %2472 = vset.pattern.permute.xlu0 8
        %2473 = vperm.xlu0 %2472, %v1045
        %v2474 = vpop.permute.xlu0 %2473
        %2476 = vset.pattern.permute.xlu0 8
        %2477 = vperm.xlu0 %2476, %v1046
        %v2478 = vpop.permute.xlu0 %2477
        %2480 = vset.pattern.permute.xlu0 8
        %2481 = vperm.xlu0 %2480, %v1047
        %v2482 = vpop.permute.xlu0 %2481
        %2484 = vset.pattern.permute.xlu0 8
        %2485 = vperm.xlu0 %2484, %v1048
        %v2486 = vpop.permute.xlu0 %2485
        %2488 = vset.pattern.permute.xlu0 8
        %2489 = vperm.xlu0 %2488, %v1049
        %v2490 = vpop.permute.xlu0 %2489
        %2492 = vset.pattern.permute.xlu0 8
        %2493 = vperm.xlu0 %2492, %v1050
        %v2494 = vpop.permute.xlu0 %2493
        %2496 = vset.pattern.permute.xlu0 8
        %2497 = vperm.xlu0 %2496, %v1051
        %v2498 = vpop.permute.xlu0 %2497
        %2500 = vset.pattern.permute.xlu0 8
        %2501 = vperm.xlu0 %2500, %v1052
        %v2502 = vpop.permute.xlu0 %2501
        %2504 = vset.pattern.permute.xlu0 8
        %2505 = vperm.xlu0 %2504, %v1053
        %v2506 = vpop.permute.xlu0 %2505
        %2508 = vset.pattern.permute.xlu0 8
        %2509 = vperm.xlu0 %2508, %v1054
        %v2510 = vpop.permute.xlu0 %2509
        %2512 = vset.pattern.permute.xlu0 8
        %2513 = vperm.xlu0 %2512, %v1055
        %v2514 = vpop.permute.xlu0 %2513
        %2516 = vset.pattern.permute.xlu0 8
        %2517 = vperm.xlu0 %2516, %v1056
        %v2518 = vpop.permute.xlu0 %2517
        %2520 = vset.pattern.permute.xlu0 8
        %2521 = vperm.xlu0 %2520, %v1057
        %v2522 = vpop.permute.xlu0 %2521
        %2524 = vset.pattern.permute.xlu0 8
        %2525 = vperm.xlu0 %2524, %v1058
        %v2526 = vpop.permute.xlu0 %2525
        %2528 = vset.pattern.permute.xlu0 8
        %2529 = vperm.xlu0 %2528, %v1059
        %v2530 = vpop.permute.xlu0 %2529
        %v2532 = vadd.f32 %v2452, %v2470
        %v2533 = vadd.f32 %v2453, %v2474
        %v2534 = vadd.f32 %v2454, %v2478
        %v2535 = vadd.f32 %v2455, %v2482
        %v2536 = vadd.f32 %v2456, %v2486
        %v2537 = vadd.f32 %v2457, %v2490
        %v2538 = vadd.f32 %v2458, %v2494
        %v2539 = vadd.f32 %v2459, %v2498
        %v2540 = vadd.f32 %v2460, %v2502
        %v2541 = vadd.f32 %v2461, %v2506
        %v2542 = vadd.f32 %v2462, %v2510
        %v2543 = vadd.f32 %v2463, %v2514
        %v2544 = vadd.f32 %v2464, %v2518
        %v2545 = vadd.f32 %v2465, %v2522
        %v2546 = vadd.f32 %v2466, %v2526
        %v2547 = vadd.f32 %v2467, %v2530
        %v2548 = vpack.c.bf16 %v2533, %v2532
        %v2549 = vpack.c.bf16 %v2535, %v2534
        %v2550 = vpack.c.bf16 %v2537, %v2536
        %v2551 = vpack.c.bf16 %v2539, %v2538
        %v2552 = vpack.c.bf16 %v2541, %v2540
        %v2553 = vpack.c.bf16 %v2543, %v2542
        %v2554 = vpack.c.bf16 %v2545, %v2544
        %v2555 = vpack.c.bf16 %v2547, %v2546
        %v2556 = vld [vmem:[%s5] sm:$0xf]
        %v2557 = vld [vmem:[%s5 + $0x4] sm:$0xf]
        %v2558 = vld [vmem:[%s5 + $0x8] sm:$0xf]
        %v2559 = vld [vmem:[%s5 + $0xc] sm:$0xf]
        %v2560 = vld [vmem:[%s5 + $0x10] sm:$0xf]
        %v2561 = vld [vmem:[%s5 + $0x14] sm:$0xf]
        %v2562 = vld [vmem:[%s5 + $0x18] sm:$0xf]
        %v2563 = vld [vmem:[%s5 + $0x1c] sm:$0xf]
        %v2564 = vld [vmem:[%s5 + $0x20] sm:$0xf]
        %v2565 = vld [vmem:[%s5 + $0x24] sm:$0xf]
        %v2566 = vld [vmem:[%s5 + $0x28] sm:$0xf]
        %v2567 = vld [vmem:[%s5 + $0x2c] sm:$0xf]
        %v2568 = vld [vmem:[%s5 + $0x30] sm:$0xf]
        %v2569 = vld [vmem:[%s5 + $0x34] sm:$0xf]
        %v2570 = vld [vmem:[%s5 + $0x38] sm:$0xf]
        %v2571 = vld [vmem:[%s5 + $0x3c] sm:$0xf]
        %v2572 = vld [vmem:[%s5 + $0x40] sm:$0xf]
        %v2573 = vld [vmem:[%s5 + $0x44] sm:$0xf]
        %v2574 = vld [vmem:[%s5 + $0x48] sm:$0xf]
        %v2575 = vld [vmem:[%s5 + $0x4c] sm:$0xf]
        %v2576 = vld [vmem:[%s5 + $0x50] sm:$0xf]
        %v2577 = vld [vmem:[%s5 + $0x54] sm:$0xf]
        %v2578 = vld [vmem:[%s5 + $0x58] sm:$0xf]
        %v2579 = vld [vmem:[%s5 + $0x5c] sm:$0xf]
        %v2580 = vld [vmem:[%s5 + $0x60] sm:$0xf]
        %v2581 = vld [vmem:[%s5 + $0x64] sm:$0xf]
        %v2582 = vld [vmem:[%s5 + $0x68] sm:$0xf]
        %v2583 = vld [vmem:[%s5 + $0x6c] sm:$0xf]
        %v2584 = vld [vmem:[%s5 + $0x70] sm:$0xf]
        %v2585 = vld [vmem:[%s5 + $0x74] sm:$0xf]
        %v2586 = vld [vmem:[%s5 + $0x78] sm:$0xf]
        %v2587 = vld [vmem:[%s5 + $0x7c] sm:$0xf]
        %v2588 = vld [vmem:[%s5 + $0x80] sm:$0xf]
        %v2589 = vld [vmem:[%s5 + $0x84] sm:$0xf]
        %v2590 = vld [vmem:[%s5 + $0x88] sm:$0xf]
        %v2591 = vld [vmem:[%s5 + $0x8c] sm:$0xf]
        %v2592 = vld [vmem:[%s5 + $0x90] sm:$0xf]
        %v2593 = vld [vmem:[%s5 + $0x94] sm:$0xf]
        %v2594 = vld [vmem:[%s5 + $0x98] sm:$0xf]
        %v2595 = vld [vmem:[%s5 + $0x9c] sm:$0xf]
        %v2596 = vld [vmem:[%s5 + $0xa0] sm:$0xf]
        %v2597 = vld [vmem:[%s5 + $0xa4] sm:$0xf]
        %v2598 = vld [vmem:[%s5 + $0xa8] sm:$0xf]
        %v2599 = vld [vmem:[%s5 + $0xac] sm:$0xf]
        %v2600 = vld [vmem:[%s5 + $0xb0] sm:$0xf]
        %v2601 = vld [vmem:[%s5 + $0xb4] sm:$0xf]
        %v2602 = vld [vmem:[%s5 + $0xb8] sm:$0xf]
        %v2603 = vld [vmem:[%s5 + $0xbc] sm:$0xf]
        %v2604 = vld [vmem:[%s5 + $0xc0] sm:$0xf]
        %v2605 = vld [vmem:[%s5 + $0xc4] sm:$0xf]
        %v2606 = vld [vmem:[%s5 + $0xc8] sm:$0xf]
        %v2607 = vld [vmem:[%s5 + $0xcc] sm:$0xf]
        %v2608 = vld [vmem:[%s5 + $0xd0] sm:$0xf]
        %v2609 = vld [vmem:[%s5 + $0xd4] sm:$0xf]
        %v2610 = vld [vmem:[%s5 + $0xd8] sm:$0xf]
        %v2611 = vld [vmem:[%s5 + $0xdc] sm:$0xf]
        %v2612 = vld [vmem:[%s5 + $0xe0] sm:$0xf]
        %v2613 = vld [vmem:[%s5 + $0xe4] sm:$0xf]
        %v2614 = vld [vmem:[%s5 + $0xe8] sm:$0xf]
        %v2615 = vld [vmem:[%s5 + $0xec] sm:$0xf]
        %v2616 = vld [vmem:[%s5 + $0xf0] sm:$0xf]
        %v2617 = vld [vmem:[%s5 + $0xf4] sm:$0xf]
        %v2618 = vld [vmem:[%s5 + $0xf8] sm:$0xf]
        %v2619 = vld [vmem:[%s5 + $0xfc] sm:$0xf]
        %v2620 = vld [vmem:[%s3] sm:$0xff]
        %v2621 = vld [vmem:[%s3 + $0x8] sm:$0xff]
        %v2622 = vld [vmem:[%s3 + $0x10] sm:$0xff]
        %v2623 = vld [vmem:[%s3 + $0x18] sm:$0xff]
        %v2624 = vld [vmem:[%s3 + $0x20] sm:$0xff]
        %v2625 = vld [vmem:[%s3 + $0x28] sm:$0xff]
        %v2626 = vld [vmem:[%s3 + $0x30] sm:$0xff]
        %v2627 = vld [vmem:[%s3 + $0x38] sm:$0xff]
        %v2628 = vld [vmem:[%s3 + $0x40] sm:$0xff]
        %v2629 = vld [vmem:[%s3 + $0x48] sm:$0xff]
        %v2630 = vld [vmem:[%s3 + $0x50] sm:$0xff]
        %v2631 = vld [vmem:[%s3 + $0x58] sm:$0xff]
        %v2632 = vld [vmem:[%s3 + $0x60] sm:$0xff]
        %v2633 = vld [vmem:[%s3 + $0x68] sm:$0xff]
        %v2634 = vld [vmem:[%s3 + $0x70] sm:$0xff]
        %v2635 = vld [vmem:[%s3 + $0x78] sm:$0xff]
        %v2636 = vld [vmem:[%s3 + $0x80] sm:$0xff]
        %v2637 = vld [vmem:[%s3 + $0x88] sm:$0xff]
        %v2638 = vld [vmem:[%s3 + $0x90] sm:$0xff]
        %v2639 = vld [vmem:[%s3 + $0x98] sm:$0xff]
        %v2640 = vld [vmem:[%s3 + $0xa0] sm:$0xff]
        %v2641 = vld [vmem:[%s3 + $0xa8] sm:$0xff]
        %v2642 = vld [vmem:[%s3 + $0xb0] sm:$0xff]
        %v2643 = vld [vmem:[%s3 + $0xb8] sm:$0xff]
        %v2644 = vld [vmem:[%s3 + $0xc0] sm:$0xff]
        %v2645 = vld [vmem:[%s3 + $0xc8] sm:$0xff]
        %v2646 = vld [vmem:[%s3 + $0xd0] sm:$0xff]
        %v2647 = vld [vmem:[%s3 + $0xd8] sm:$0xff]
        %v2648 = vld [vmem:[%s3 + $0xe0] sm:$0xff]
        %v2649 = vld [vmem:[%s3 + $0xe8] sm:$0xff]
        %v2650 = vld [vmem:[%s3 + $0xf0] sm:$0xff]
        %v2651 = vld [vmem:[%s3 + $0xf8] sm:$0xff]
        %v2652 = vld [vmem:[%s3 + $0x100] sm:$0xff]
        %v2653 = vld [vmem:[%s3 + $0x108] sm:$0xff]
        %v2654 = vld [vmem:[%s3 + $0x110] sm:$0xff]
        %v2655 = vld [vmem:[%s3 + $0x118] sm:$0xff]
        %v2656 = vld [vmem:[%s3 + $0x120] sm:$0xff]
        %v2657 = vld [vmem:[%s3 + $0x128] sm:$0xff]
        %v2658 = vld [vmem:[%s3 + $0x130] sm:$0xff]
        %v2659 = vld [vmem:[%s3 + $0x138] sm:$0xff]
        %v2660 = vld [vmem:[%s3 + $0x140] sm:$0xff]
        %v2661 = vld [vmem:[%s3 + $0x148] sm:$0xff]
        %v2662 = vld [vmem:[%s3 + $0x150] sm:$0xff]
        %v2663 = vld [vmem:[%s3 + $0x158] sm:$0xff]
        %v2664 = vld [vmem:[%s3 + $0x160] sm:$0xff]
        %v2665 = vld [vmem:[%s3 + $0x168] sm:$0xff]
        %v2666 = vld [vmem:[%s3 + $0x170] sm:$0xff]
        %v2667 = vld [vmem:[%s3 + $0x178] sm:$0xff]
        %v2668 = vld [vmem:[%s3 + $0x180] sm:$0xff]
        %v2669 = vld [vmem:[%s3 + $0x188] sm:$0xff]
        %v2670 = vld [vmem:[%s3 + $0x190] sm:$0xff]
        %v2671 = vld [vmem:[%s3 + $0x198] sm:$0xff]
        %v2672 = vld [vmem:[%s3 + $0x1a0] sm:$0xff]
        %v2673 = vld [vmem:[%s3 + $0x1a8] sm:$0xff]
        %v2674 = vld [vmem:[%s3 + $0x1b0] sm:$0xff]
        %v2675 = vld [vmem:[%s3 + $0x1b8] sm:$0xff]
        %v2676 = vld [vmem:[%s3 + $0x1c0] sm:$0xff]
        %v2677 = vld [vmem:[%s3 + $0x1c8] sm:$0xff]
        %v2678 = vld [vmem:[%s3 + $0x1d0] sm:$0xff]
        %v2679 = vld [vmem:[%s3 + $0x1d8] sm:$0xff]
        %v2680 = vld [vmem:[%s3 + $0x1e0] sm:$0xff]
        %v2681 = vld [vmem:[%s3 + $0x1e8] sm:$0xff]
        %v2682 = vld [vmem:[%s3 + $0x1f0] sm:$0xff]
        %v2683 = vld [vmem:[%s3 + $0x1f8] sm:$0xff]
        %2685 = vset.pattern.permute.xlu0 0
        %2686 = vperm.xlu0 %2685, %v2620
        %v2687 = vpop.permute.xlu0 %2686
        %2690 = vset.pattern.permute.xlu0 0
        %2691 = vperm.xlu0 %2690, %v2621
        %v2692 = vpop.permute.xlu0 %2691
        %2695 = vset.pattern.permute.xlu0 0
        %2696 = vperm.xlu0 %2695, %v2622
        %v2697 = vpop.permute.xlu0 %2696
        %2700 = vset.pattern.permute.xlu0 0
        %2701 = vperm.xlu0 %2700, %v2623
        %v2702 = vpop.permute.xlu0 %2701
        %2705 = vset.pattern.permute.xlu0 0
        %2706 = vperm.xlu0 %2705, %v2624
        %v2707 = vpop.permute.xlu0 %2706
        %2710 = vset.pattern.permute.xlu0 0
        %2711 = vperm.xlu0 %2710, %v2625
        %v2712 = vpop.permute.xlu0 %2711
        %2715 = vset.pattern.permute.xlu0 0
        %2716 = vperm.xlu0 %2715, %v2626
        %v2717 = vpop.permute.xlu0 %2716
        %2720 = vset.pattern.permute.xlu0 0
        %2721 = vperm.xlu0 %2720, %v2627
        %v2722 = vpop.permute.xlu0 %2721
        %2725 = vset.pattern.permute.xlu0 0
        %2726 = vperm.xlu0 %2725, %v2628
        %v2727 = vpop.permute.xlu0 %2726
        %2730 = vset.pattern.permute.xlu0 0
        %2731 = vperm.xlu0 %2730, %v2629
        %v2732 = vpop.permute.xlu0 %2731
        %2735 = vset.pattern.permute.xlu0 0
        %2736 = vperm.xlu0 %2735, %v2630
        %v2737 = vpop.permute.xlu0 %2736
        %2740 = vset.pattern.permute.xlu0 0
        %2741 = vperm.xlu0 %2740, %v2631
        %v2742 = vpop.permute.xlu0 %2741
        %2745 = vset.pattern.permute.xlu0 0
        %2746 = vperm.xlu0 %2745, %v2632
        %v2747 = vpop.permute.xlu0 %2746
        %2750 = vset.pattern.permute.xlu0 0
        %2751 = vperm.xlu0 %2750, %v2633
        %v2752 = vpop.permute.xlu0 %2751
        %2755 = vset.pattern.permute.xlu0 0
        %2756 = vperm.xlu0 %2755, %v2634
        %v2757 = vpop.permute.xlu0 %2756
        %2760 = vset.pattern.permute.xlu0 0
        %2761 = vperm.xlu0 %2760, %v2635
        %v2762 = vpop.permute.xlu0 %2761
        %2765 = vset.pattern.permute.xlu0 0
        %2766 = vperm.xlu0 %2765, %v2636
        %v2767 = vpop.permute.xlu0 %2766
        %2770 = vset.pattern.permute.xlu0 0
        %2771 = vperm.xlu0 %2770, %v2637
        %v2772 = vpop.permute.xlu0 %2771
        %2775 = vset.pattern.permute.xlu0 0
        %2776 = vperm.xlu0 %2775, %v2638
        %v2777 = vpop.permute.xlu0 %2776
        %2780 = vset.pattern.permute.xlu0 0
        %2781 = vperm.xlu0 %2780, %v2639
        %v2782 = vpop.permute.xlu0 %2781
        %2785 = vset.pattern.permute.xlu0 0
        %2786 = vperm.xlu0 %2785, %v2640
        %v2787 = vpop.permute.xlu0 %2786
        %2790 = vset.pattern.permute.xlu0 0
        %2791 = vperm.xlu0 %2790, %v2641
        %v2792 = vpop.permute.xlu0 %2791
        %2795 = vset.pattern.permute.xlu0 0
        %2796 = vperm.xlu0 %2795, %v2642
        %v2797 = vpop.permute.xlu0 %2796
        %2800 = vset.pattern.permute.xlu0 0
        %2801 = vperm.xlu0 %2800, %v2643
        %v2802 = vpop.permute.xlu0 %2801
        %2805 = vset.pattern.permute.xlu0 0
        %2806 = vperm.xlu0 %2805, %v2644
        %v2807 = vpop.permute.xlu0 %2806
        %2810 = vset.pattern.permute.xlu0 0
        %2811 = vperm.xlu0 %2810, %v2645
        %v2812 = vpop.permute.xlu0 %2811
        %2815 = vset.pattern.permute.xlu0 0
        %2816 = vperm.xlu0 %2815, %v2646
        %v2817 = vpop.permute.xlu0 %2816
        %2820 = vset.pattern.permute.xlu0 0
        %2821 = vperm.xlu0 %2820, %v2647
        %v2822 = vpop.permute.xlu0 %2821
        %2825 = vset.pattern.permute.xlu0 0
        %2826 = vperm.xlu0 %2825, %v2648
        %v2827 = vpop.permute.xlu0 %2826
        %2830 = vset.pattern.permute.xlu0 0
        %2831 = vperm.xlu0 %2830, %v2649
        %v2832 = vpop.permute.xlu0 %2831
        %2835 = vset.pattern.permute.xlu0 0
        %2836 = vperm.xlu0 %2835, %v2650
        %v2837 = vpop.permute.xlu0 %2836
        %2840 = vset.pattern.permute.xlu0 0
        %2841 = vperm.xlu0 %2840, %v2651
        %v2842 = vpop.permute.xlu0 %2841
        %2845 = vset.pattern.permute.xlu0 0
        %2846 = vperm.xlu0 %2845, %v2652
        %v2847 = vpop.permute.xlu0 %2846
        %2850 = vset.pattern.permute.xlu0 0
        %2851 = vperm.xlu0 %2850, %v2653
        %v2852 = vpop.permute.xlu0 %2851
        %2855 = vset.pattern.permute.xlu0 0
        %2856 = vperm.xlu0 %2855, %v2654
        %v2857 = vpop.permute.xlu0 %2856
        %2860 = vset.pattern.permute.xlu0 0
        %2861 = vperm.xlu0 %2860, %v2655
        %v2862 = vpop.permute.xlu0 %2861
        %2865 = vset.pattern.permute.xlu0 0
        %2866 = vperm.xlu0 %2865, %v2656
        %v2867 = vpop.permute.xlu0 %2866
        %2870 = vset.pattern.permute.xlu0 0
        %2871 = vperm.xlu0 %2870, %v2657
        %v2872 = vpop.permute.xlu0 %2871
        %2875 = vset.pattern.permute.xlu0 0
        %2876 = vperm.xlu0 %2875, %v2658
        %v2877 = vpop.permute.xlu0 %2876
        %2880 = vset.pattern.permute.xlu0 0
        %2881 = vperm.xlu0 %2880, %v2659
        %v2882 = vpop.permute.xlu0 %2881
        %2885 = vset.pattern.permute.xlu0 0
        %2886 = vperm.xlu0 %2885, %v2660
        %v2887 = vpop.permute.xlu0 %2886
        %2890 = vset.pattern.permute.xlu0 0
        %2891 = vperm.xlu0 %2890, %v2661
        %v2892 = vpop.permute.xlu0 %2891
        %2895 = vset.pattern.permute.xlu0 0
        %2896 = vperm.xlu0 %2895, %v2662
        %v2897 = vpop.permute.xlu0 %2896
        %2900 = vset.pattern.permute.xlu0 0
        %2901 = vperm.xlu0 %2900, %v2663
        %v2902 = vpop.permute.xlu0 %2901
        %2905 = vset.pattern.permute.xlu0 0
        %2906 = vperm.xlu0 %2905, %v2664
        %v2907 = vpop.permute.xlu0 %2906
        %2910 = vset.pattern.permute.xlu0 0
        %2911 = vperm.xlu0 %2910, %v2665
        %v2912 = vpop.permute.xlu0 %2911
        %2915 = vset.pattern.permute.xlu0 0
        %2916 = vperm.xlu0 %2915, %v2666
        %v2917 = vpop.permute.xlu0 %2916
        %2920 = vset.pattern.permute.xlu0 0
        %2921 = vperm.xlu0 %2920, %v2667
        %v2922 = vpop.permute.xlu0 %2921
        %2925 = vset.pattern.permute.xlu0 0
        %2926 = vperm.xlu0 %2925, %v2668
        %v2927 = vpop.permute.xlu0 %2926
        %2930 = vset.pattern.permute.xlu0 0
        %2931 = vperm.xlu0 %2930, %v2669
        %v2932 = vpop.permute.xlu0 %2931
        %2935 = vset.pattern.permute.xlu0 0
        %2936 = vperm.xlu0 %2935, %v2670
        %v2937 = vpop.permute.xlu0 %2936
        %2940 = vset.pattern.permute.xlu0 0
        %2941 = vperm.xlu0 %2940, %v2671
        %v2942 = vpop.permute.xlu0 %2941
        %2945 = vset.pattern.permute.xlu0 0
        %2946 = vperm.xlu0 %2945, %v2672
        %v2947 = vpop.permute.xlu0 %2946
        %2950 = vset.pattern.permute.xlu0 0
        %2951 = vperm.xlu0 %2950, %v2673
        %v2952 = vpop.permute.xlu0 %2951
        %2955 = vset.pattern.permute.xlu0 0
        %2956 = vperm.xlu0 %2955, %v2674
        %v2957 = vpop.permute.xlu0 %2956
        %2960 = vset.pattern.permute.xlu0 0
        %2961 = vperm.xlu0 %2960, %v2675
        %v2962 = vpop.permute.xlu0 %2961
        %2965 = vset.pattern.permute.xlu0 0
        %2966 = vperm.xlu0 %2965, %v2676
        %v2967 = vpop.permute.xlu0 %2966
        %2970 = vset.pattern.permute.xlu0 0
        %2971 = vperm.xlu0 %2970, %v2677
        %v2972 = vpop.permute.xlu0 %2971
        %2975 = vset.pattern.permute.xlu0 0
        %2976 = vperm.xlu0 %2975, %v2678
        %v2977 = vpop.permute.xlu0 %2976
        %2980 = vset.pattern.permute.xlu0 0
        %2981 = vperm.xlu0 %2980, %v2679
        %v2982 = vpop.permute.xlu0 %2981
        %2985 = vset.pattern.permute.xlu0 0
        %2986 = vperm.xlu0 %2985, %v2680
        %v2987 = vpop.permute.xlu0 %2986
        %2990 = vset.pattern.permute.xlu0 0
        %2991 = vperm.xlu0 %2990, %v2681
        %v2992 = vpop.permute.xlu0 %2991
        %2995 = vset.pattern.permute.xlu0 0
        %2996 = vperm.xlu0 %2995, %v2682
        %v2997 = vpop.permute.xlu0 %2996
        %3000 = vset.pattern.permute.xlu0 0
        %3001 = vperm.xlu0 %3000, %v2683
        %v3002 = vpop.permute.xlu0 %3001
        %v3068 = vunpack.c.l.b16 %v2556
        %v3069 = vunpack.c.l.b16 %v2557
        %v3070 = vunpack.c.l.b16 %v2558
        %v3071 = vunpack.c.l.b16 %v2559
        %v3072 = vunpack.c.l.b16 %v2560
        %v3073 = vunpack.c.l.b16 %v2561
        %v3074 = vunpack.c.l.b16 %v2562
        %v3075 = vunpack.c.l.b16 %v2563
        %v3076 = vunpack.c.l.b16 %v2564
        %v3077 = vunpack.c.l.b16 %v2565
        %v3078 = vunpack.c.l.b16 %v2566
        %v3079 = vunpack.c.l.b16 %v2567
        %v3080 = vunpack.c.l.b16 %v2568
        %v3081 = vunpack.c.l.b16 %v2569
        %v3082 = vunpack.c.l.b16 %v2570
        %v3083 = vunpack.c.l.b16 %v2571
        %v3084 = vunpack.c.l.b16 %v2572
        %v3085 = vunpack.c.l.b16 %v2573
        %v3086 = vunpack.c.l.b16 %v2574
        %v3087 = vunpack.c.l.b16 %v2575
        %v3088 = vunpack.c.l.b16 %v2576
        %v3089 = vunpack.c.l.b16 %v2577
        %v3090 = vunpack.c.l.b16 %v2578
        %v3091 = vunpack.c.l.b16 %v2579
        %v3092 = vunpack.c.l.b16 %v2580
        %v3093 = vunpack.c.l.b16 %v2581
        %v3094 = vunpack.c.l.b16 %v2582
        %v3095 = vunpack.c.l.b16 %v2583
        %v3096 = vunpack.c.l.b16 %v2584
        %v3097 = vunpack.c.l.b16 %v2585
        %v3098 = vunpack.c.l.b16 %v2586
        %v3099 = vunpack.c.l.b16 %v2587
        %v3100 = vunpack.c.l.b16 %v2588
        %v3101 = vunpack.c.l.b16 %v2589
        %v3102 = vunpack.c.l.b16 %v2590
        %v3103 = vunpack.c.l.b16 %v2591
        %v3104 = vunpack.c.l.b16 %v2592
        %v3105 = vunpack.c.l.b16 %v2593
        %v3106 = vunpack.c.l.b16 %v2594
        %v3107 = vunpack.c.l.b16 %v2595
        %v3108 = vunpack.c.l.b16 %v2596
        %v3109 = vunpack.c.l.b16 %v2597
        %v3110 = vunpack.c.l.b16 %v2598
        %v3111 = vunpack.c.l.b16 %v2599
        %v3112 = vunpack.c.l.b16 %v2600
        %v3113 = vunpack.c.l.b16 %v2601
        %v3114 = vunpack.c.l.b16 %v2602
        %v3115 = vunpack.c.l.b16 %v2603
        %v3116 = vunpack.c.l.b16 %v2604
        %v3117 = vunpack.c.l.b16 %v2605
        %v3118 = vunpack.c.l.b16 %v2606
        %v3119 = vunpack.c.l.b16 %v2607
        %v3120 = vunpack.c.l.b16 %v2608
        %v3121 = vunpack.c.l.b16 %v2609
        %v3122 = vunpack.c.l.b16 %v2610
        %v3123 = vunpack.c.l.b16 %v2611
        %v3124 = vunpack.c.l.b16 %v2612
        %v3125 = vunpack.c.l.b16 %v2613
        %v3126 = vunpack.c.l.b16 %v2614
        %v3127 = vunpack.c.l.b16 %v2615
        %v3128 = vunpack.c.l.b16 %v2616
        %v3129 = vunpack.c.l.b16 %v2617
        %v3130 = vunpack.c.l.b16 %v2618
        %v3131 = vunpack.c.l.b16 %v2619
        %v3132 = vpack.c.b16 %v3069, %v3068
        %v3133 = vpack.c.b16 %v3071, %v3070
        %v3134 = vpack.c.b16 %v3073, %v3072
        %v3135 = vpack.c.b16 %v3075, %v3074
        %v3136 = vpack.c.b16 %v3077, %v3076
        %v3137 = vpack.c.b16 %v3079, %v3078
        %v3138 = vpack.c.b16 %v3081, %v3080
        %v3139 = vpack.c.b16 %v3083, %v3082
        %v3140 = vpack.c.b16 %v3085, %v3084
        %v3141 = vpack.c.b16 %v3087, %v3086
        %v3142 = vpack.c.b16 %v3089, %v3088
        %v3143 = vpack.c.b16 %v3091, %v3090
        %v3144 = vpack.c.b16 %v3093, %v3092
        %v3145 = vpack.c.b16 %v3095, %v3094
        %v3146 = vpack.c.b16 %v3097, %v3096
        %v3147 = vpack.c.b16 %v3099, %v3098
        %v3148 = vpack.c.b16 %v3101, %v3100
        %v3149 = vpack.c.b16 %v3103, %v3102
        %v3150 = vpack.c.b16 %v3105, %v3104
        %v3151 = vpack.c.b16 %v3107, %v3106
        %v3152 = vpack.c.b16 %v3109, %v3108
        %v3153 = vpack.c.b16 %v3111, %v3110
        %v3154 = vpack.c.b16 %v3113, %v3112
        %v3155 = vpack.c.b16 %v3115, %v3114
        %v3156 = vpack.c.b16 %v3117, %v3116
        %v3157 = vpack.c.b16 %v3119, %v3118
        %v3158 = vpack.c.b16 %v3121, %v3120
        %v3159 = vpack.c.b16 %v3123, %v3122
        %v3160 = vpack.c.b16 %v3125, %v3124
        %v3161 = vpack.c.b16 %v3127, %v3126
        %v3162 = vpack.c.b16 %v3129, %v3128
        %v3163 = vpack.c.b16 %v3131, %v3130
        %3196 = vmatprep.subr.bf16.mxu0 0
        %3197 = vmatpush1.bf16.msra.mxu0 %v2555
        %3198 = vmatprep.subr.bf16.mxu0 0
        %3199 = vmatpush1.bf16.msra.mxu0 %v2554
        %3200 = vmatprep.subr.bf16.mxu0 0
        %3201 = vmatpush1.bf16.msra.mxu0 %v2553
        %3202 = vmatprep.subr.bf16.mxu0 0
        %3203 = vmatpush1.bf16.msra.mxu0 %v2552
        %3204 = vmatprep.subr.bf16.mxu0 0
        %3205 = vmatpush1.bf16.msra.mxu0 %v2551
        %3206 = vmatprep.subr.bf16.mxu0 0
        %3207 = vmatpush1.bf16.msra.mxu0 %v2550
        %3208 = vmatprep.subr.bf16.mxu0 0
        %3209 = vmatpush1.bf16.msra.mxu0 %v2549
        %3210 = vmatprep.subr.bf16.mxu0 0
        %3211 = vmatpush1.bf16.msra.mxu0 %v2548
        %3212 = vmatprep.subr.bf16.mxu0 0
        %3213 = vmatpush2.bf16.msra.mxu0 0
        %3214 = vmatprep.subr.bf16.mxu0 0
        %3215 = vmatpush2.bf16.msra.mxu0 0
        %3216 = vmatprep.subr.bf16.mxu0 0
        %3217 = vmatpush2.bf16.msra.mxu0 0
        %3218 = vmatprep.subr.bf16.mxu0 0
        %3219 = vmatpush2.bf16.msra.mxu0 0
        %3220 = vmatprep.subr.bf16.mxu0 0
        %3221 = vmatpush2.bf16.msra.mxu0 0
        %3222 = vmatprep.subr.bf16.mxu0 0
        %3223 = vmatpush2.bf16.msra.mxu0 0
        %3224 = vmatprep.subr.bf16.mxu0 0
        %3225 = vmatpush2.bf16.msra.mxu0 0
        %3226 = vmatprep.subr.bf16.mxu0 0
        %3227 = vmatpush2.bf16.msra.mxu0 0
        %3228 = vmatprep.mubr.bf16.mxu0 0
        %3229 = vmatmul.mubr.bf16.gmra.mxu0 %v3132
        %v3230 = vpop.f32.mrf.mxu0
        %v3231 = vadd.f32 %v2687, %v3230
        %v3232 = vpop.f32.mrf.mxu0
        %v3233 = vpop.f32.mrf.mxu0
        %v3234 = vadd.f32 %v2692, %v3233
        %v3235 = vpop.f32.mrf.mxu0
        %3236 = vmatprep.mubr.bf16.mxu0 0
        %3237 = vmatmul.mubr.bf16.gmra.mxu0 %v3133
        %v3238 = vpop.f32.mrf.mxu0
        %v3239 = vadd.f32 %v2697, %v3238
        %v3240 = vpop.f32.mrf.mxu0
        %v3241 = vpop.f32.mrf.mxu0
        %v3242 = vadd.f32 %v2702, %v3241
        %v3243 = vpop.f32.mrf.mxu0
        %3244 = vmatprep.mubr.bf16.mxu0 0
        %3245 = vmatmul.mubr.bf16.gmra.mxu0 %v3134
        %v3246 = vpop.f32.mrf.mxu0
        %v3247 = vadd.f32 %v2707, %v3246
        %v3248 = vpop.f32.mrf.mxu0
        %v3249 = vpop.f32.mrf.mxu0
        %v3250 = vadd.f32 %v2712, %v3249
        %v3251 = vpop.f32.mrf.mxu0
        %3252 = vmatprep.mubr.bf16.mxu0 0
        %3253 = vmatmul.mubr.bf16.gmra.mxu0 %v3135
        %v3254 = vpop.f32.mrf.mxu0
        %v3255 = vadd.f32 %v2717, %v3254
        %v3256 = vpop.f32.mrf.mxu0
        %v3257 = vpop.f32.mrf.mxu0
        %v3258 = vadd.f32 %v2722, %v3257
        %v3259 = vpop.f32.mrf.mxu0
        %3260 = vmatprep.mubr.bf16.mxu0 0
        %3261 = vmatmul.mubr.bf16.gmra.mxu0 %v3136
        %v3262 = vpop.f32.mrf.mxu0
        %v3263 = vadd.f32 %v2727, %v3262
        %v3264 = vpop.f32.mrf.mxu0
        %v3265 = vpop.f32.mrf.mxu0
        %v3266 = vadd.f32 %v2732, %v3265
        %v3267 = vpop.f32.mrf.mxu0
        %3268 = vmatprep.mubr.bf16.mxu0 0
        %3269 = vmatmul.mubr.bf16.gmra.mxu0 %v3137
        %v3270 = vpop.f32.mrf.mxu0
        %v3271 = vadd.f32 %v2737, %v3270
        %v3272 = vpop.f32.mrf.mxu0
        %v3273 = vpop.f32.mrf.mxu0
        %v3274 = vadd.f32 %v2742, %v3273
        %v3275 = vpop.f32.mrf.mxu0
        %3276 = vmatprep.mubr.bf16.mxu0 0
        %3277 = vmatmul.mubr.bf16.gmra.mxu0 %v3138
        %v3278 = vpop.f32.mrf.mxu0
        %v3279 = vadd.f32 %v2747, %v3278
        %v3280 = vpop.f32.mrf.mxu0
        %v3281 = vpop.f32.mrf.mxu0
        %v3282 = vadd.f32 %v2752, %v3281
        %v3283 = vpop.f32.mrf.mxu0
        %3284 = vmatprep.mubr.bf16.mxu0 0
        %3285 = vmatmul.mubr.bf16.gmra.mxu0 %v3139
        %v3286 = vpop.f32.mrf.mxu0
        %v3287 = vadd.f32 %v2757, %v3286
        %v3288 = vpop.f32.mrf.mxu0
        %v3289 = vpop.f32.mrf.mxu0
        %v3290 = vadd.f32 %v2762, %v3289
        %v3291 = vpop.f32.mrf.mxu0
        %3292 = vmatprep.mubr.bf16.mxu0 0
        %3293 = vmatmul.mubr.bf16.gmra.mxu0 %v3140
        %v3294 = vpop.f32.mrf.mxu0
        %v3295 = vadd.f32 %v2767, %v3294
        %v3296 = vpop.f32.mrf.mxu0
        %v3297 = vpop.f32.mrf.mxu0
        %v3298 = vadd.f32 %v2772, %v3297
        %v3299 = vpop.f32.mrf.mxu0
        %3300 = vmatprep.mubr.bf16.mxu0 0
        %3301 = vmatmul.mubr.bf16.gmra.mxu0 %v3141
        %v3302 = vpop.f32.mrf.mxu0
        %v3303 = vadd.f32 %v2777, %v3302
        %v3304 = vpop.f32.mrf.mxu0
        %v3305 = vpop.f32.mrf.mxu0
        %v3306 = vadd.f32 %v2782, %v3305
        %v3307 = vpop.f32.mrf.mxu0
        %3308 = vmatprep.mubr.bf16.mxu0 0
        %3309 = vmatmul.mubr.bf16.gmra.mxu0 %v3142
        %v3310 = vpop.f32.mrf.mxu0
        %v3311 = vadd.f32 %v2787, %v3310
        %v3312 = vpop.f32.mrf.mxu0
        %v3313 = vpop.f32.mrf.mxu0
        %v3314 = vadd.f32 %v2792, %v3313
        %v3315 = vpop.f32.mrf.mxu0
        %3316 = vmatprep.mubr.bf16.mxu0 0
        %3317 = vmatmul.mubr.bf16.gmra.mxu0 %v3143
        %v3318 = vpop.f32.mrf.mxu0
        %v3319 = vadd.f32 %v2797, %v3318
        %v3320 = vpop.f32.mrf.mxu0
        %v3321 = vpop.f32.mrf.mxu0
        %v3322 = vadd.f32 %v2802, %v3321
        %v3323 = vpop.f32.mrf.mxu0
        %3324 = vmatprep.mubr.bf16.mxu0 0
        %3325 = vmatmul.mubr.bf16.gmra.mxu0 %v3144
        %v3326 = vpop.f32.mrf.mxu0
        %v3327 = vadd.f32 %v2807, %v3326
        %v3328 = vpop.f32.mrf.mxu0
        %v3329 = vpop.f32.mrf.mxu0
        %v3330 = vadd.f32 %v2812, %v3329
        %v3331 = vpop.f32.mrf.mxu0
        %3332 = vmatprep.mubr.bf16.mxu0 0
        %3333 = vmatmul.mubr.bf16.gmra.mxu0 %v3145
        %v3334 = vpop.f32.mrf.mxu0
        %v3335 = vadd.f32 %v2817, %v3334
        %v3336 = vpop.f32.mrf.mxu0
        %v3337 = vpop.f32.mrf.mxu0
        %v3338 = vadd.f32 %v2822, %v3337
        %v3339 = vpop.f32.mrf.mxu0
        %3340 = vmatprep.mubr.bf16.mxu0 0
        %3341 = vmatmul.mubr.bf16.gmra.mxu0 %v3146
        %v3342 = vpop.f32.mrf.mxu0
        %v3343 = vadd.f32 %v2827, %v3342
        %v3344 = vpop.f32.mrf.mxu0
        %v3345 = vpop.f32.mrf.mxu0
        %v3346 = vadd.f32 %v2832, %v3345
        %v3347 = vpop.f32.mrf.mxu0
        %3348 = vmatprep.mubr.bf16.mxu0 0
        %3349 = vmatmul.mubr.bf16.gmra.mxu0 %v3147
        %v3350 = vpop.f32.mrf.mxu0
        %v3351 = vadd.f32 %v2837, %v3350
        %v3352 = vpop.f32.mrf.mxu0
        %v3353 = vpop.f32.mrf.mxu0
        %v3354 = vadd.f32 %v2842, %v3353
        %v3355 = vpop.f32.mrf.mxu0
        %3356 = vmatprep.mubr.bf16.mxu0 0
        %3357 = vmatmul.mubr.bf16.gmra.mxu0 %v3148
        %v3358 = vpop.f32.mrf.mxu0
        %v3359 = vadd.f32 %v2847, %v3358
        %v3360 = vpop.f32.mrf.mxu0
        %v3361 = vpop.f32.mrf.mxu0
        %v3362 = vadd.f32 %v2852, %v3361
        %v3363 = vpop.f32.mrf.mxu0
        %3364 = vmatprep.mubr.bf16.mxu0 0
        %3365 = vmatmul.mubr.bf16.gmra.mxu0 %v3149
        %v3366 = vpop.f32.mrf.mxu0
        %v3367 = vadd.f32 %v2857, %v3366
        %v3368 = vpop.f32.mrf.mxu0
        %v3369 = vpop.f32.mrf.mxu0
        %v3370 = vadd.f32 %v2862, %v3369
        %v3371 = vpop.f32.mrf.mxu0
        %3372 = vmatprep.mubr.bf16.mxu0 0
        %3373 = vmatmul.mubr.bf16.gmra.mxu0 %v3150
        %v3374 = vpop.f32.mrf.mxu0
        %v3375 = vadd.f32 %v2867, %v3374
        %v3376 = vpop.f32.mrf.mxu0
        %v3377 = vpop.f32.mrf.mxu0
        %v3378 = vadd.f32 %v2872, %v3377
        %v3379 = vpop.f32.mrf.mxu0
        %3380 = vmatprep.mubr.bf16.mxu0 0
        %3381 = vmatmul.mubr.bf16.gmra.mxu0 %v3151
        %v3382 = vpop.f32.mrf.mxu0
        %v3383 = vadd.f32 %v2877, %v3382
        %v3384 = vpop.f32.mrf.mxu0
        %v3385 = vpop.f32.mrf.mxu0
        %v3386 = vadd.f32 %v2882, %v3385
        %v3387 = vpop.f32.mrf.mxu0
        %3388 = vmatprep.mubr.bf16.mxu0 0
        %3389 = vmatmul.mubr.bf16.gmra.mxu0 %v3152
        %v3390 = vpop.f32.mrf.mxu0
        %v3391 = vadd.f32 %v2887, %v3390
        %v3392 = vpop.f32.mrf.mxu0
        %v3393 = vpop.f32.mrf.mxu0
        %v3394 = vadd.f32 %v2892, %v3393
        %v3395 = vpop.f32.mrf.mxu0
        %3396 = vmatprep.mubr.bf16.mxu0 0
        %3397 = vmatmul.mubr.bf16.gmra.mxu0 %v3153
        %v3398 = vpop.f32.mrf.mxu0
        %v3399 = vadd.f32 %v2897, %v3398
        %v3400 = vpop.f32.mrf.mxu0
        %v3401 = vpop.f32.mrf.mxu0
        %v3402 = vadd.f32 %v2902, %v3401
        %v3403 = vpop.f32.mrf.mxu0
        %3404 = vmatprep.mubr.bf16.mxu0 0
        %3405 = vmatmul.mubr.bf16.gmra.mxu0 %v3154
        %v3406 = vpop.f32.mrf.mxu0
        %v3407 = vadd.f32 %v2907, %v3406
        %v3408 = vpop.f32.mrf.mxu0
        %v3409 = vpop.f32.mrf.mxu0
        %v3410 = vadd.f32 %v2912, %v3409
        %v3411 = vpop.f32.mrf.mxu0
        %3412 = vmatprep.mubr.bf16.mxu0 0
        %3413 = vmatmul.mubr.bf16.gmra.mxu0 %v3155
        %v3414 = vpop.f32.mrf.mxu0
        %v3415 = vadd.f32 %v2917, %v3414
        %v3416 = vpop.f32.mrf.mxu0
        %v3417 = vpop.f32.mrf.mxu0
        %v3418 = vadd.f32 %v2922, %v3417
        %v3419 = vpop.f32.mrf.mxu0
        %3420 = vmatprep.mubr.bf16.mxu0 0
        %3421 = vmatmul.mubr.bf16.gmra.mxu0 %v3156
        %v3422 = vpop.f32.mrf.mxu0
        %v3423 = vadd.f32 %v2927, %v3422
        %v3424 = vpop.f32.mrf.mxu0
        %v3425 = vpop.f32.mrf.mxu0
        %v3426 = vadd.f32 %v2932, %v3425
        %v3427 = vpop.f32.mrf.mxu0
        %3428 = vmatprep.mubr.bf16.mxu0 0
        %3429 = vmatmul.mubr.bf16.gmra.mxu0 %v3157
        %v3430 = vpop.f32.mrf.mxu0
        %v3431 = vadd.f32 %v2937, %v3430
        %v3432 = vpop.f32.mrf.mxu0
        %v3433 = vpop.f32.mrf.mxu0
        %v3434 = vadd.f32 %v2942, %v3433
        %v3435 = vpop.f32.mrf.mxu0
        %3436 = vmatprep.mubr.bf16.mxu0 0
        %3437 = vmatmul.mubr.bf16.gmra.mxu0 %v3158
        %v3438 = vpop.f32.mrf.mxu0
        %v3439 = vadd.f32 %v2947, %v3438
        %v3440 = vpop.f32.mrf.mxu0
        %v3441 = vpop.f32.mrf.mxu0
        %v3442 = vadd.f32 %v2952, %v3441
        %v3443 = vpop.f32.mrf.mxu0
        %3444 = vmatprep.mubr.bf16.mxu0 0
        %3445 = vmatmul.mubr.bf16.gmra.mxu0 %v3159
        %v3446 = vpop.f32.mrf.mxu0
        %v3447 = vadd.f32 %v2957, %v3446
        %v3448 = vpop.f32.mrf.mxu0
        %v3449 = vpop.f32.mrf.mxu0
        %v3450 = vadd.f32 %v2962, %v3449
        %v3451 = vpop.f32.mrf.mxu0
        %3452 = vmatprep.mubr.bf16.mxu0 0
        %3453 = vmatmul.mubr.bf16.gmra.mxu0 %v3160
        %v3454 = vpop.f32.mrf.mxu0
        %v3455 = vadd.f32 %v2967, %v3454
        %v3456 = vpop.f32.mrf.mxu0
        %v3457 = vpop.f32.mrf.mxu0
        %v3458 = vadd.f32 %v2972, %v3457
        %v3459 = vpop.f32.mrf.mxu0
        %3460 = vmatprep.mubr.bf16.mxu0 0
        %3461 = vmatmul.mubr.bf16.gmra.mxu0 %v3161
        %v3462 = vpop.f32.mrf.mxu0
        %v3463 = vadd.f32 %v2977, %v3462
        %v3464 = vpop.f32.mrf.mxu0
        %v3465 = vpop.f32.mrf.mxu0
        %v3466 = vadd.f32 %v2982, %v3465
        %v3467 = vpop.f32.mrf.mxu0
        %3468 = vmatprep.mubr.bf16.mxu0 0
        %3469 = vmatmul.mubr.bf16.gmra.mxu0 %v3162
        %v3470 = vpop.f32.mrf.mxu0
        %v3471 = vadd.f32 %v2987, %v3470
        %v3472 = vpop.f32.mrf.mxu0
        %v3473 = vpop.f32.mrf.mxu0
        %v3474 = vadd.f32 %v2992, %v3473
        %v3475 = vpop.f32.mrf.mxu0
        %3476 = vmatprep.mubr.bf16.mxu0 0
        %3477 = vmatmul.mubr.bf16.gmra.mxu0 %v3163
        %v3478 = vpop.f32.mrf.mxu0
        %v3479 = vadd.f32 %v2997, %v3478
        %v3480 = vpop.f32.mrf.mxu0
        %v3481 = vpop.f32.mrf.mxu0
        %v3482 = vadd.f32 %v3002, %v3481
        %v3483 = vpop.f32.mrf.mxu0
        %3484 = vdwg.mxu0
        %s3485 = scalar_lea.vmem %s5, 256
        %v3486 = vld [vmem:[%s3485] sm:$0xf]
        %v3487 = vld [vmem:[%s3485 + $0x4] sm:$0xf]
        %v3488 = vld [vmem:[%s3485 + $0x8] sm:$0xf]
        %v3489 = vld [vmem:[%s3485 + $0xc] sm:$0xf]
        %v3490 = vld [vmem:[%s3485 + $0x10] sm:$0xf]
        %v3491 = vld [vmem:[%s3485 + $0x14] sm:$0xf]
        %v3492 = vld [vmem:[%s3485 + $0x18] sm:$0xf]
        %v3493 = vld [vmem:[%s3485 + $0x1c] sm:$0xf]
        %v3494 = vld [vmem:[%s3485 + $0x20] sm:$0xf]
        %v3495 = vld [vmem:[%s3485 + $0x24] sm:$0xf]
        %v3496 = vld [vmem:[%s3485 + $0x28] sm:$0xf]
        %v3497 = vld [vmem:[%s3485 + $0x2c] sm:$0xf]
        %v3498 = vld [vmem:[%s3485 + $0x30] sm:$0xf]
        %v3499 = vld [vmem:[%s3485 + $0x34] sm:$0xf]
        %v3500 = vld [vmem:[%s3485 + $0x38] sm:$0xf]
        %v3501 = vld [vmem:[%s3485 + $0x3c] sm:$0xf]
        %v3502 = vld [vmem:[%s3485 + $0x40] sm:$0xf]
        %v3503 = vld [vmem:[%s3485 + $0x44] sm:$0xf]
        %v3504 = vld [vmem:[%s3485 + $0x48] sm:$0xf]
        %v3505 = vld [vmem:[%s3485 + $0x4c] sm:$0xf]
        %v3506 = vld [vmem:[%s3485 + $0x50] sm:$0xf]
        %v3507 = vld [vmem:[%s3485 + $0x54] sm:$0xf]
        %v3508 = vld [vmem:[%s3485 + $0x58] sm:$0xf]
        %v3509 = vld [vmem:[%s3485 + $0x5c] sm:$0xf]
        %v3510 = vld [vmem:[%s3485 + $0x60] sm:$0xf]
        %v3511 = vld [vmem:[%s3485 + $0x64] sm:$0xf]
        %v3512 = vld [vmem:[%s3485 + $0x68] sm:$0xf]
        %v3513 = vld [vmem:[%s3485 + $0x6c] sm:$0xf]
        %v3514 = vld [vmem:[%s3485 + $0x70] sm:$0xf]
        %v3515 = vld [vmem:[%s3485 + $0x74] sm:$0xf]
        %v3516 = vld [vmem:[%s3485 + $0x78] sm:$0xf]
        %v3517 = vld [vmem:[%s3485 + $0x7c] sm:$0xf]
        %v3518 = vld [vmem:[%s3485 + $0x80] sm:$0xf]
        %v3519 = vld [vmem:[%s3485 + $0x84] sm:$0xf]
        %v3520 = vld [vmem:[%s3485 + $0x88] sm:$0xf]
        %v3521 = vld [vmem:[%s3485 + $0x8c] sm:$0xf]
        %v3522 = vld [vmem:[%s3485 + $0x90] sm:$0xf]
        %v3523 = vld [vmem:[%s3485 + $0x94] sm:$0xf]
        %v3524 = vld [vmem:[%s3485 + $0x98] sm:$0xf]
        %v3525 = vld [vmem:[%s3485 + $0x9c] sm:$0xf]
        %v3526 = vld [vmem:[%s3485 + $0xa0] sm:$0xf]
        %v3527 = vld [vmem:[%s3485 + $0xa4] sm:$0xf]
        %v3528 = vld [vmem:[%s3485 + $0xa8] sm:$0xf]
        %v3529 = vld [vmem:[%s3485 + $0xac] sm:$0xf]
        %v3530 = vld [vmem:[%s3485 + $0xb0] sm:$0xf]
        %v3531 = vld [vmem:[%s3485 + $0xb4] sm:$0xf]
        %v3532 = vld [vmem:[%s3485 + $0xb8] sm:$0xf]
        %v3533 = vld [vmem:[%s3485 + $0xbc] sm:$0xf]
        %v3534 = vld [vmem:[%s3485 + $0xc0] sm:$0xf]
        %v3535 = vld [vmem:[%s3485 + $0xc4] sm:$0xf]
        %v3536 = vld [vmem:[%s3485 + $0xc8] sm:$0xf]
        %v3537 = vld [vmem:[%s3485 + $0xcc] sm:$0xf]
        %v3538 = vld [vmem:[%s3485 + $0xd0] sm:$0xf]
        %v3539 = vld [vmem:[%s3485 + $0xd4] sm:$0xf]
        %v3540 = vld [vmem:[%s3485 + $0xd8] sm:$0xf]
        %v3541 = vld [vmem:[%s3485 + $0xdc] sm:$0xf]
        %v3542 = vld [vmem:[%s3485 + $0xe0] sm:$0xf]
        %v3543 = vld [vmem:[%s3485 + $0xe4] sm:$0xf]
        %v3544 = vld [vmem:[%s3485 + $0xe8] sm:$0xf]
        %v3545 = vld [vmem:[%s3485 + $0xec] sm:$0xf]
        %v3546 = vld [vmem:[%s3485 + $0xf0] sm:$0xf]
        %v3547 = vld [vmem:[%s3485 + $0xf4] sm:$0xf]
        %v3548 = vld [vmem:[%s3485 + $0xf8] sm:$0xf]
        %v3549 = vld [vmem:[%s3485 + $0xfc] sm:$0xf]
        %3550 = vset.pattern.permute.xlu0 1
        %3551 = vperm.xlu0 %3550, %v2620
        %v3552 = vpop.permute.xlu0 %3551
        %3554 = vset.pattern.permute.xlu0 1
        %3555 = vperm.xlu0 %3554, %v2621
        %v3556 = vpop.permute.xlu0 %3555
        %3558 = vset.pattern.permute.xlu0 1
        %3559 = vperm.xlu0 %3558, %v2622
        %v3560 = vpop.permute.xlu0 %3559
        %3562 = vset.pattern.permute.xlu0 1
        %3563 = vperm.xlu0 %3562, %v2623
        %v3564 = vpop.permute.xlu0 %3563
        %3566 = vset.pattern.permute.xlu0 1
        %3567 = vperm.xlu0 %3566, %v2624
        %v3568 = vpop.permute.xlu0 %3567
        %3570 = vset.pattern.permute.xlu0 1
        %3571 = vperm.xlu0 %3570, %v2625
        %v3572 = vpop.permute.xlu0 %3571
        %3574 = vset.pattern.permute.xlu0 1
        %3575 = vperm.xlu0 %3574, %v2626
        %v3576 = vpop.permute.xlu0 %3575
        %3578 = vset.pattern.permute.xlu0 1
        %3579 = vperm.xlu0 %3578, %v2627
        %v3580 = vpop.permute.xlu0 %3579
        %3582 = vset.pattern.permute.xlu0 1
        %3583 = vperm.xlu0 %3582, %v2628
        %v3584 = vpop.permute.xlu0 %3583
        %3586 = vset.pattern.permute.xlu0 1
        %3587 = vperm.xlu0 %3586, %v2629
        %v3588 = vpop.permute.xlu0 %3587
        %3590 = vset.pattern.permute.xlu0 1
        %3591 = vperm.xlu0 %3590, %v2630
        %v3592 = vpop.permute.xlu0 %3591
        %3594 = vset.pattern.permute.xlu0 1
        %3595 = vperm.xlu0 %3594, %v2631
        %v3596 = vpop.permute.xlu0 %3595
        %3598 = vset.pattern.permute.xlu0 1
        %3599 = vperm.xlu0 %3598, %v2632
        %v3600 = vpop.permute.xlu0 %3599
        %3602 = vset.pattern.permute.xlu0 1
        %3603 = vperm.xlu0 %3602, %v2633
        %v3604 = vpop.permute.xlu0 %3603
        %3606 = vset.pattern.permute.xlu0 1
        %3607 = vperm.xlu0 %3606, %v2634
        %v3608 = vpop.permute.xlu0 %3607
        %3610 = vset.pattern.permute.xlu0 1
        %3611 = vperm.xlu0 %3610, %v2635
        %v3612 = vpop.permute.xlu0 %3611
        %3614 = vset.pattern.permute.xlu0 1
        %3615 = vperm.xlu0 %3614, %v2636
        %v3616 = vpop.permute.xlu0 %3615
        %3618 = vset.pattern.permute.xlu0 1
        %3619 = vperm.xlu0 %3618, %v2637
        %v3620 = vpop.permute.xlu0 %3619
        %3622 = vset.pattern.permute.xlu0 1
        %3623 = vperm.xlu0 %3622, %v2638
        %v3624 = vpop.permute.xlu0 %3623
        %3626 = vset.pattern.permute.xlu0 1
        %3627 = vperm.xlu0 %3626, %v2639
        %v3628 = vpop.permute.xlu0 %3627
        %3630 = vset.pattern.permute.xlu0 1
        %3631 = vperm.xlu0 %3630, %v2640
        %v3632 = vpop.permute.xlu0 %3631
        %3634 = vset.pattern.permute.xlu0 1
        %3635 = vperm.xlu0 %3634, %v2641
        %v3636 = vpop.permute.xlu0 %3635
        %3638 = vset.pattern.permute.xlu0 1
        %3639 = vperm.xlu0 %3638, %v2642
        %v3640 = vpop.permute.xlu0 %3639
        %3642 = vset.pattern.permute.xlu0 1
        %3643 = vperm.xlu0 %3642, %v2643
        %v3644 = vpop.permute.xlu0 %3643
        %3646 = vset.pattern.permute.xlu0 1
        %3647 = vperm.xlu0 %3646, %v2644
        %v3648 = vpop.permute.xlu0 %3647
        %3650 = vset.pattern.permute.xlu0 1
        %3651 = vperm.xlu0 %3650, %v2645
        %v3652 = vpop.permute.xlu0 %3651
        %3654 = vset.pattern.permute.xlu0 1
        %3655 = vperm.xlu0 %3654, %v2646
        %v3656 = vpop.permute.xlu0 %3655
        %3658 = vset.pattern.permute.xlu0 1
        %3659 = vperm.xlu0 %3658, %v2647
        %v3660 = vpop.permute.xlu0 %3659
        %3662 = vset.pattern.permute.xlu0 1
        %3663 = vperm.xlu0 %3662, %v2648
        %v3664 = vpop.permute.xlu0 %3663
        %3666 = vset.pattern.permute.xlu0 1
        %3667 = vperm.xlu0 %3666, %v2649
        %v3668 = vpop.permute.xlu0 %3667
        %3670 = vset.pattern.permute.xlu0 1
        %3671 = vperm.xlu0 %3670, %v2650
        %v3672 = vpop.permute.xlu0 %3671
        %3674 = vset.pattern.permute.xlu0 1
        %3675 = vperm.xlu0 %3674, %v2651
        %v3676 = vpop.permute.xlu0 %3675
        %3678 = vset.pattern.permute.xlu0 1
        %3679 = vperm.xlu0 %3678, %v2652
        %v3680 = vpop.permute.xlu0 %3679
        %3682 = vset.pattern.permute.xlu0 1
        %3683 = vperm.xlu0 %3682, %v2653
        %v3684 = vpop.permute.xlu0 %3683
        %3686 = vset.pattern.permute.xlu0 1
        %3687 = vperm.xlu0 %3686, %v2654
        %v3688 = vpop.permute.xlu0 %3687
        %3690 = vset.pattern.permute.xlu0 1
        %3691 = vperm.xlu0 %3690, %v2655
        %v3692 = vpop.permute.xlu0 %3691
        %3694 = vset.pattern.permute.xlu0 1
        %3695 = vperm.xlu0 %3694, %v2656
        %v3696 = vpop.permute.xlu0 %3695
        %3698 = vset.pattern.permute.xlu0 1
        %3699 = vperm.xlu0 %3698, %v2657
        %v3700 = vpop.permute.xlu0 %3699
        %3702 = vset.pattern.permute.xlu0 1
        %3703 = vperm.xlu0 %3702, %v2658
        %v3704 = vpop.permute.xlu0 %3703
        %3706 = vset.pattern.permute.xlu0 1
        %3707 = vperm.xlu0 %3706, %v2659
        %v3708 = vpop.permute.xlu0 %3707
        %3710 = vset.pattern.permute.xlu0 1
        %3711 = vperm.xlu0 %3710, %v2660
        %v3712 = vpop.permute.xlu0 %3711
        %3714 = vset.pattern.permute.xlu0 1
        %3715 = vperm.xlu0 %3714, %v2661
        %v3716 = vpop.permute.xlu0 %3715
        %3718 = vset.pattern.permute.xlu0 1
        %3719 = vperm.xlu0 %3718, %v2662
        %v3720 = vpop.permute.xlu0 %3719
        %3722 = vset.pattern.permute.xlu0 1
        %3723 = vperm.xlu0 %3722, %v2663
        %v3724 = vpop.permute.xlu0 %3723
        %3726 = vset.pattern.permute.xlu0 1
        %3727 = vperm.xlu0 %3726, %v2664
        %v3728 = vpop.permute.xlu0 %3727
        %3730 = vset.pattern.permute.xlu0 1
        %3731 = vperm.xlu0 %3730, %v2665
        %v3732 = vpop.permute.xlu0 %3731
        %3734 = vset.pattern.permute.xlu0 1
        %3735 = vperm.xlu0 %3734, %v2666
        %v3736 = vpop.permute.xlu0 %3735
        %3738 = vset.pattern.permute.xlu0 1
        %3739 = vperm.xlu0 %3738, %v2667
        %v3740 = vpop.permute.xlu0 %3739
        %3742 = vset.pattern.permute.xlu0 1
        %3743 = vperm.xlu0 %3742, %v2668
        %v3744 = vpop.permute.xlu0 %3743
        %3746 = vset.pattern.permute.xlu0 1
        %3747 = vperm.xlu0 %3746, %v2669
        %v3748 = vpop.permute.xlu0 %3747
        %3750 = vset.pattern.permute.xlu0 1
        %3751 = vperm.xlu0 %3750, %v2670
        %v3752 = vpop.permute.xlu0 %3751
        %3754 = vset.pattern.permute.xlu0 1
        %3755 = vperm.xlu0 %3754, %v2671
        %v3756 = vpop.permute.xlu0 %3755
        %3758 = vset.pattern.permute.xlu0 1
        %3759 = vperm.xlu0 %3758, %v2672
        %v3760 = vpop.permute.xlu0 %3759
        %3762 = vset.pattern.permute.xlu0 1
        %3763 = vperm.xlu0 %3762, %v2673
        %v3764 = vpop.permute.xlu0 %3763
        %3766 = vset.pattern.permute.xlu0 1
        %3767 = vperm.xlu0 %3766, %v2674
        %v3768 = vpop.permute.xlu0 %3767
        %3770 = vset.pattern.permute.xlu0 1
        %3771 = vperm.xlu0 %3770, %v2675
        %v3772 = vpop.permute.xlu0 %3771
        %3774 = vset.pattern.permute.xlu0 1
        %3775 = vperm.xlu0 %3774, %v2676
        %v3776 = vpop.permute.xlu0 %3775
        %3778 = vset.pattern.permute.xlu0 1
        %3779 = vperm.xlu0 %3778, %v2677
        %v3780 = vpop.permute.xlu0 %3779
        %3782 = vset.pattern.permute.xlu0 1
        %3783 = vperm.xlu0 %3782, %v2678
        %v3784 = vpop.permute.xlu0 %3783
        %3786 = vset.pattern.permute.xlu0 1
        %3787 = vperm.xlu0 %3786, %v2679
        %v3788 = vpop.permute.xlu0 %3787
        %3790 = vset.pattern.permute.xlu0 1
        %3791 = vperm.xlu0 %3790, %v2680
        %v3792 = vpop.permute.xlu0 %3791
        %3794 = vset.pattern.permute.xlu0 1
        %3795 = vperm.xlu0 %3794, %v2681
        %v3796 = vpop.permute.xlu0 %3795
        %3798 = vset.pattern.permute.xlu0 1
        %3799 = vperm.xlu0 %3798, %v2682
        %v3800 = vpop.permute.xlu0 %3799
        %3802 = vset.pattern.permute.xlu0 1
        %3803 = vperm.xlu0 %3802, %v2683
        %v3804 = vpop.permute.xlu0 %3803
        %v3870 = vunpack.c.l.b16 %v3486
        %v3871 = vunpack.c.l.b16 %v3487
        %v3872 = vunpack.c.l.b16 %v3488
        %v3873 = vunpack.c.l.b16 %v3489
        %v3874 = vunpack.c.l.b16 %v3490
        %v3875 = vunpack.c.l.b16 %v3491
        %v3876 = vunpack.c.l.b16 %v3492
        %v3877 = vunpack.c.l.b16 %v3493
        %v3878 = vunpack.c.l.b16 %v3494
        %v3879 = vunpack.c.l.b16 %v3495
        %v3880 = vunpack.c.l.b16 %v3496
        %v3881 = vunpack.c.l.b16 %v3497
        %v3882 = vunpack.c.l.b16 %v3498
        %v3883 = vunpack.c.l.b16 %v3499
        %v3884 = vunpack.c.l.b16 %v3500
        %v3885 = vunpack.c.l.b16 %v3501
        %v3886 = vunpack.c.l.b16 %v3502
        %v3887 = vunpack.c.l.b16 %v3503
        %v3888 = vunpack.c.l.b16 %v3504
        %v3889 = vunpack.c.l.b16 %v3505
        %v3890 = vunpack.c.l.b16 %v3506
        %v3891 = vunpack.c.l.b16 %v3507
        %v3892 = vunpack.c.l.b16 %v3508
        %v3893 = vunpack.c.l.b16 %v3509
        %v3894 = vunpack.c.l.b16 %v3510
        %v3895 = vunpack.c.l.b16 %v3511
        %v3896 = vunpack.c.l.b16 %v3512
        %v3897 = vunpack.c.l.b16 %v3513
        %v3898 = vunpack.c.l.b16 %v3514
        %v3899 = vunpack.c.l.b16 %v3515
        %v3900 = vunpack.c.l.b16 %v3516
        %v3901 = vunpack.c.l.b16 %v3517
        %v3902 = vunpack.c.l.b16 %v3518
        %v3903 = vunpack.c.l.b16 %v3519
        %v3904 = vunpack.c.l.b16 %v3520
        %v3905 = vunpack.c.l.b16 %v3521
        %v3906 = vunpack.c.l.b16 %v3522
        %v3907 = vunpack.c.l.b16 %v3523
        %v3908 = vunpack.c.l.b16 %v3524
        %v3909 = vunpack.c.l.b16 %v3525
        %v3910 = vunpack.c.l.b16 %v3526
        %v3911 = vunpack.c.l.b16 %v3527
        %v3912 = vunpack.c.l.b16 %v3528
        %v3913 = vunpack.c.l.b16 %v3529
        %v3914 = vunpack.c.l.b16 %v3530
        %v3915 = vunpack.c.l.b16 %v3531
        %v3916 = vunpack.c.l.b16 %v3532
        %v3917 = vunpack.c.l.b16 %v3533
        %v3918 = vunpack.c.l.b16 %v3534
        %v3919 = vunpack.c.l.b16 %v3535
        %v3920 = vunpack.c.l.b16 %v3536
        %v3921 = vunpack.c.l.b16 %v3537
        %v3922 = vunpack.c.l.b16 %v3538
        %v3923 = vunpack.c.l.b16 %v3539
        %v3924 = vunpack.c.l.b16 %v3540
        %v3925 = vunpack.c.l.b16 %v3541
        %v3926 = vunpack.c.l.b16 %v3542
        %v3927 = vunpack.c.l.b16 %v3543
        %v3928 = vunpack.c.l.b16 %v3544
        %v3929 = vunpack.c.l.b16 %v3545
        %v3930 = vunpack.c.l.b16 %v3546
        %v3931 = vunpack.c.l.b16 %v3547
        %v3932 = vunpack.c.l.b16 %v3548
        %v3933 = vunpack.c.l.b16 %v3549
        %v3934 = vpack.c.b16 %v3871, %v3870
        %v3935 = vpack.c.b16 %v3873, %v3872
        %v3936 = vpack.c.b16 %v3875, %v3874
        %v3937 = vpack.c.b16 %v3877, %v3876
        %v3938 = vpack.c.b16 %v3879, %v3878
        %v3939 = vpack.c.b16 %v3881, %v3880
        %v3940 = vpack.c.b16 %v3883, %v3882
        %v3941 = vpack.c.b16 %v3885, %v3884
        %v3942 = vpack.c.b16 %v3887, %v3886
        %v3943 = vpack.c.b16 %v3889, %v3888
        %v3944 = vpack.c.b16 %v3891, %v3890
        %v3945 = vpack.c.b16 %v3893, %v3892
        %v3946 = vpack.c.b16 %v3895, %v3894
        %v3947 = vpack.c.b16 %v3897, %v3896
        %v3948 = vpack.c.b16 %v3899, %v3898
        %v3949 = vpack.c.b16 %v3901, %v3900
        %v3950 = vpack.c.b16 %v3903, %v3902
        %v3951 = vpack.c.b16 %v3905, %v3904
        %v3952 = vpack.c.b16 %v3907, %v3906
        %v3953 = vpack.c.b16 %v3909, %v3908
        %v3954 = vpack.c.b16 %v3911, %v3910
        %v3955 = vpack.c.b16 %v3913, %v3912
        %v3956 = vpack.c.b16 %v3915, %v3914
        %v3957 = vpack.c.b16 %v3917, %v3916
        %v3958 = vpack.c.b16 %v3919, %v3918
        %v3959 = vpack.c.b16 %v3921, %v3920
        %v3960 = vpack.c.b16 %v3923, %v3922
        %v3961 = vpack.c.b16 %v3925, %v3924
        %v3962 = vpack.c.b16 %v3927, %v3926
        %v3963 = vpack.c.b16 %v3929, %v3928
        %v3964 = vpack.c.b16 %v3931, %v3930
        %v3965 = vpack.c.b16 %v3933, %v3932
        %3998 = vmatprep.subr.bf16.mxu0 0
        %3999 = vmatpush1.bf16.msra.mxu0 %v2555
        %4000 = vmatprep.subr.bf16.mxu0 0
        %4001 = vmatpush1.bf16.msra.mxu0 %v2554
        %4002 = vmatprep.subr.bf16.mxu0 0
        %4003 = vmatpush1.bf16.msra.mxu0 %v2553
        %4004 = vmatprep.subr.bf16.mxu0 0
        %4005 = vmatpush1.bf16.msra.mxu0 %v2552
        %4006 = vmatprep.subr.bf16.mxu0 0
        %4007 = vmatpush1.bf16.msra.mxu0 %v2551
        %4008 = vmatprep.subr.bf16.mxu0 0
        %4009 = vmatpush1.bf16.msra.mxu0 %v2550
        %4010 = vmatprep.subr.bf16.mxu0 0
        %4011 = vmatpush1.bf16.msra.mxu0 %v2549
        %4012 = vmatprep.subr.bf16.mxu0 0
        %4013 = vmatpush1.bf16.msra.mxu0 %v2548
        %4014 = vmatprep.subr.bf16.mxu0 0
        %4015 = vmatpush2.bf16.msra.mxu0 0
        %4016 = vmatprep.subr.bf16.mxu0 0
        %4017 = vmatpush2.bf16.msra.mxu0 0
        %4018 = vmatprep.subr.bf16.mxu0 0
        %4019 = vmatpush2.bf16.msra.mxu0 0
        %4020 = vmatprep.subr.bf16.mxu0 0
        %4021 = vmatpush2.bf16.msra.mxu0 0
        %4022 = vmatprep.subr.bf16.mxu0 0
        %4023 = vmatpush2.bf16.msra.mxu0 0
        %4024 = vmatprep.subr.bf16.mxu0 0
        %4025 = vmatpush2.bf16.msra.mxu0 0
        %4026 = vmatprep.subr.bf16.mxu0 0
        %4027 = vmatpush2.bf16.msra.mxu0 0
        %4028 = vmatprep.subr.bf16.mxu0 0
        %4029 = vmatpush2.bf16.msra.mxu0 0
        %4030 = vmatprep.mubr.bf16.mxu0 0
        %4031 = vmatmul.mubr.bf16.gmra.mxu0 %v3934
        %v4032 = vpop.f32.mrf.mxu0
        %v4033 = vadd.f32 %v3552, %v4032
        %v4034 = vpop.f32.mrf.mxu0
        %v4035 = vpop.f32.mrf.mxu0
        %v4036 = vadd.f32 %v3556, %v4035
        %v4037 = vpop.f32.mrf.mxu0
        %4038 = vmatprep.mubr.bf16.mxu0 0
        %4039 = vmatmul.mubr.bf16.gmra.mxu0 %v3935
        %v4040 = vpop.f32.mrf.mxu0
        %v4041 = vadd.f32 %v3560, %v4040
        %v4042 = vpop.f32.mrf.mxu0
        %v4043 = vpop.f32.mrf.mxu0
        %v4044 = vadd.f32 %v3564, %v4043
        %v4045 = vpop.f32.mrf.mxu0
        %4046 = vmatprep.mubr.bf16.mxu0 0
        %4047 = vmatmul.mubr.bf16.gmra.mxu0 %v3936
        %v4048 = vpop.f32.mrf.mxu0
        %v4049 = vadd.f32 %v3568, %v4048
        %v4050 = vpop.f32.mrf.mxu0
        %v4051 = vpop.f32.mrf.mxu0
        %v4052 = vadd.f32 %v3572, %v4051
        %v4053 = vpop.f32.mrf.mxu0
        %4054 = vmatprep.mubr.bf16.mxu0 0
        %4055 = vmatmul.mubr.bf16.gmra.mxu0 %v3937
        %v4056 = vpop.f32.mrf.mxu0
        %v4057 = vadd.f32 %v3576, %v4056
        %v4058 = vpop.f32.mrf.mxu0
        %v4059 = vpop.f32.mrf.mxu0
        %v4060 = vadd.f32 %v3580, %v4059
        %v4061 = vpop.f32.mrf.mxu0
        %4062 = vmatprep.mubr.bf16.mxu0 0
        %4063 = vmatmul.mubr.bf16.gmra.mxu0 %v3938
        %v4064 = vpop.f32.mrf.mxu0
        %v4065 = vadd.f32 %v3584, %v4064
        %v4066 = vpop.f32.mrf.mxu0
        %v4067 = vpop.f32.mrf.mxu0
        %v4068 = vadd.f32 %v3588, %v4067
        %v4069 = vpop.f32.mrf.mxu0
        %4070 = vmatprep.mubr.bf16.mxu0 0
        %4071 = vmatmul.mubr.bf16.gmra.mxu0 %v3939
        %v4072 = vpop.f32.mrf.mxu0
        %v4073 = vadd.f32 %v3592, %v4072
        %v4074 = vpop.f32.mrf.mxu0
        %v4075 = vpop.f32.mrf.mxu0
        %v4076 = vadd.f32 %v3596, %v4075
        %v4077 = vpop.f32.mrf.mxu0
        %4078 = vmatprep.mubr.bf16.mxu0 0
        %4079 = vmatmul.mubr.bf16.gmra.mxu0 %v3940
        %v4080 = vpop.f32.mrf.mxu0
        %v4081 = vadd.f32 %v3600, %v4080
        %v4082 = vpop.f32.mrf.mxu0
        %v4083 = vpop.f32.mrf.mxu0
        %v4084 = vadd.f32 %v3604, %v4083
        %v4085 = vpop.f32.mrf.mxu0
        %4086 = vmatprep.mubr.bf16.mxu0 0
        %4087 = vmatmul.mubr.bf16.gmra.mxu0 %v3941
        %v4088 = vpop.f32.mrf.mxu0
        %v4089 = vadd.f32 %v3608, %v4088
        %v4090 = vpop.f32.mrf.mxu0
        %v4091 = vpop.f32.mrf.mxu0
        %v4092 = vadd.f32 %v3612, %v4091
        %v4093 = vpop.f32.mrf.mxu0
        %4094 = vmatprep.mubr.bf16.mxu0 0
        %4095 = vmatmul.mubr.bf16.gmra.mxu0 %v3942
        %v4096 = vpop.f32.mrf.mxu0
        %v4097 = vadd.f32 %v3616, %v4096
        %v4098 = vpop.f32.mrf.mxu0
        %v4099 = vpop.f32.mrf.mxu0
        %v4100 = vadd.f32 %v3620, %v4099
        %v4101 = vpop.f32.mrf.mxu0
        %4102 = vmatprep.mubr.bf16.mxu0 0
        %4103 = vmatmul.mubr.bf16.gmra.mxu0 %v3943
        %v4104 = vpop.f32.mrf.mxu0
        %v4105 = vadd.f32 %v3624, %v4104
        %v4106 = vpop.f32.mrf.mxu0
        %v4107 = vpop.f32.mrf.mxu0
        %v4108 = vadd.f32 %v3628, %v4107
        %v4109 = vpop.f32.mrf.mxu0
        %4110 = vmatprep.mubr.bf16.mxu0 0
        %4111 = vmatmul.mubr.bf16.gmra.mxu0 %v3944
        %v4112 = vpop.f32.mrf.mxu0
        %v4113 = vadd.f32 %v3632, %v4112
        %v4114 = vpop.f32.mrf.mxu0
        %v4115 = vpop.f32.mrf.mxu0
        %v4116 = vadd.f32 %v3636, %v4115
        %v4117 = vpop.f32.mrf.mxu0
        %4118 = vmatprep.mubr.bf16.mxu0 0
        %4119 = vmatmul.mubr.bf16.gmra.mxu0 %v3945
        %v4120 = vpop.f32.mrf.mxu0
        %v4121 = vadd.f32 %v3640, %v4120
        %v4122 = vpop.f32.mrf.mxu0
        %v4123 = vpop.f32.mrf.mxu0
        %v4124 = vadd.f32 %v3644, %v4123
        %v4125 = vpop.f32.mrf.mxu0
        %4126 = vmatprep.mubr.bf16.mxu0 0
        %4127 = vmatmul.mubr.bf16.gmra.mxu0 %v3946
        %v4128 = vpop.f32.mrf.mxu0
        %v4129 = vadd.f32 %v3648, %v4128
        %v4130 = vpop.f32.mrf.mxu0
        %v4131 = vpop.f32.mrf.mxu0
        %v4132 = vadd.f32 %v3652, %v4131
        %v4133 = vpop.f32.mrf.mxu0
        %4134 = vmatprep.mubr.bf16.mxu0 0
        %4135 = vmatmul.mubr.bf16.gmra.mxu0 %v3947
        %v4136 = vpop.f32.mrf.mxu0
        %v4137 = vadd.f32 %v3656, %v4136
        %v4138 = vpop.f32.mrf.mxu0
        %v4139 = vpop.f32.mrf.mxu0
        %v4140 = vadd.f32 %v3660, %v4139
        %v4141 = vpop.f32.mrf.mxu0
        %4142 = vmatprep.mubr.bf16.mxu0 0
        %4143 = vmatmul.mubr.bf16.gmra.mxu0 %v3948
        %v4144 = vpop.f32.mrf.mxu0
        %v4145 = vadd.f32 %v3664, %v4144
        %v4146 = vpop.f32.mrf.mxu0
        %v4147 = vpop.f32.mrf.mxu0
        %v4148 = vadd.f32 %v3668, %v4147
        %v4149 = vpop.f32.mrf.mxu0
        %4150 = vmatprep.mubr.bf16.mxu0 0
        %4151 = vmatmul.mubr.bf16.gmra.mxu0 %v3949
        %v4152 = vpop.f32.mrf.mxu0
        %v4153 = vadd.f32 %v3672, %v4152
        %v4154 = vpop.f32.mrf.mxu0
        %v4155 = vpop.f32.mrf.mxu0
        %v4156 = vadd.f32 %v3676, %v4155
        %v4157 = vpop.f32.mrf.mxu0
        %4158 = vmatprep.mubr.bf16.mxu0 0
        %4159 = vmatmul.mubr.bf16.gmra.mxu0 %v3950
        %v4160 = vpop.f32.mrf.mxu0
        %v4161 = vadd.f32 %v3680, %v4160
        %v4162 = vpop.f32.mrf.mxu0
        %v4163 = vpop.f32.mrf.mxu0
        %v4164 = vadd.f32 %v3684, %v4163
        %v4165 = vpop.f32.mrf.mxu0
        %4166 = vmatprep.mubr.bf16.mxu0 0
        %4167 = vmatmul.mubr.bf16.gmra.mxu0 %v3951
        %v4168 = vpop.f32.mrf.mxu0
        %v4169 = vadd.f32 %v3688, %v4168
        %v4170 = vpop.f32.mrf.mxu0
        %v4171 = vpop.f32.mrf.mxu0
        %v4172 = vadd.f32 %v3692, %v4171
        %v4173 = vpop.f32.mrf.mxu0
        %4174 = vmatprep.mubr.bf16.mxu0 0
        %4175 = vmatmul.mubr.bf16.gmra.mxu0 %v3952
        %v4176 = vpop.f32.mrf.mxu0
        %v4177 = vadd.f32 %v3696, %v4176
        %v4178 = vpop.f32.mrf.mxu0
        %v4179 = vpop.f32.mrf.mxu0
        %v4180 = vadd.f32 %v3700, %v4179
        %v4181 = vpop.f32.mrf.mxu0
        %4182 = vmatprep.mubr.bf16.mxu0 0
        %4183 = vmatmul.mubr.bf16.gmra.mxu0 %v3953
        %v4184 = vpop.f32.mrf.mxu0
        %v4185 = vadd.f32 %v3704, %v4184
        %v4186 = vpop.f32.mrf.mxu0
        %v4187 = vpop.f32.mrf.mxu0
        %v4188 = vadd.f32 %v3708, %v4187
        %v4189 = vpop.f32.mrf.mxu0
        %4190 = vmatprep.mubr.bf16.mxu0 0
        %4191 = vmatmul.mubr.bf16.gmra.mxu0 %v3954
        %v4192 = vpop.f32.mrf.mxu0
        %v4193 = vadd.f32 %v3712, %v4192
        %v4194 = vpop.f32.mrf.mxu0
        %v4195 = vpop.f32.mrf.mxu0
        %v4196 = vadd.f32 %v3716, %v4195
        %v4197 = vpop.f32.mrf.mxu0
        %4198 = vmatprep.mubr.bf16.mxu0 0
        %4199 = vmatmul.mubr.bf16.gmra.mxu0 %v3955
        %v4200 = vpop.f32.mrf.mxu0
        %v4201 = vadd.f32 %v3720, %v4200
        %v4202 = vpop.f32.mrf.mxu0
        %v4203 = vpop.f32.mrf.mxu0
        %v4204 = vadd.f32 %v3724, %v4203
        %v4205 = vpop.f32.mrf.mxu0
        %4206 = vmatprep.mubr.bf16.mxu0 0
        %4207 = vmatmul.mubr.bf16.gmra.mxu0 %v3956
        %v4208 = vpop.f32.mrf.mxu0
        %v4209 = vadd.f32 %v3728, %v4208
        %v4210 = vpop.f32.mrf.mxu0
        %v4211 = vpop.f32.mrf.mxu0
        %v4212 = vadd.f32 %v3732, %v4211
        %v4213 = vpop.f32.mrf.mxu0
        %4214 = vmatprep.mubr.bf16.mxu0 0
        %4215 = vmatmul.mubr.bf16.gmra.mxu0 %v3957
        %v4216 = vpop.f32.mrf.mxu0
        %v4217 = vadd.f32 %v3736, %v4216
        %v4218 = vpop.f32.mrf.mxu0
        %v4219 = vpop.f32.mrf.mxu0
        %v4220 = vadd.f32 %v3740, %v4219
        %v4221 = vpop.f32.mrf.mxu0
        %4222 = vmatprep.mubr.bf16.mxu0 0
        %4223 = vmatmul.mubr.bf16.gmra.mxu0 %v3958
        %v4224 = vpop.f32.mrf.mxu0
        %v4225 = vadd.f32 %v3744, %v4224
        %v4226 = vpop.f32.mrf.mxu0
        %v4227 = vpop.f32.mrf.mxu0
        %v4228 = vadd.f32 %v3748, %v4227
        %v4229 = vpop.f32.mrf.mxu0
        %4230 = vmatprep.mubr.bf16.mxu0 0
        %4231 = vmatmul.mubr.bf16.gmra.mxu0 %v3959
        %v4232 = vpop.f32.mrf.mxu0
        %v4233 = vadd.f32 %v3752, %v4232
        %v4234 = vpop.f32.mrf.mxu0
        %v4235 = vpop.f32.mrf.mxu0
        %v4236 = vadd.f32 %v3756, %v4235
        %v4237 = vpop.f32.mrf.mxu0
        %4238 = vmatprep.mubr.bf16.mxu0 0
        %4239 = vmatmul.mubr.bf16.gmra.mxu0 %v3960
        %v4240 = vpop.f32.mrf.mxu0
        %v4241 = vadd.f32 %v3760, %v4240
        %v4242 = vpop.f32.mrf.mxu0
        %v4243 = vpop.f32.mrf.mxu0
        %v4244 = vadd.f32 %v3764, %v4243
        %v4245 = vpop.f32.mrf.mxu0
        %4246 = vmatprep.mubr.bf16.mxu0 0
        %4247 = vmatmul.mubr.bf16.gmra.mxu0 %v3961
        %v4248 = vpop.f32.mrf.mxu0
        %v4249 = vadd.f32 %v3768, %v4248
        %v4250 = vpop.f32.mrf.mxu0
        %v4251 = vpop.f32.mrf.mxu0
        %v4252 = vadd.f32 %v3772, %v4251
        %v4253 = vpop.f32.mrf.mxu0
        %4254 = vmatprep.mubr.bf16.mxu0 0
        %4255 = vmatmul.mubr.bf16.gmra.mxu0 %v3962
        %v4256 = vpop.f32.mrf.mxu0
        %v4257 = vadd.f32 %v3776, %v4256
        %v4258 = vpop.f32.mrf.mxu0
        %v4259 = vpop.f32.mrf.mxu0
        %v4260 = vadd.f32 %v3780, %v4259
        %v4261 = vpop.f32.mrf.mxu0
        %4262 = vmatprep.mubr.bf16.mxu0 0
        %4263 = vmatmul.mubr.bf16.gmra.mxu0 %v3963
        %v4264 = vpop.f32.mrf.mxu0
        %v4265 = vadd.f32 %v3784, %v4264
        %v4266 = vpop.f32.mrf.mxu0
        %v4267 = vpop.f32.mrf.mxu0
        %v4268 = vadd.f32 %v3788, %v4267
        %v4269 = vpop.f32.mrf.mxu0
        %4270 = vmatprep.mubr.bf16.mxu0 0
        %4271 = vmatmul.mubr.bf16.gmra.mxu0 %v3964
        %v4272 = vpop.f32.mrf.mxu0
        %v4273 = vadd.f32 %v3792, %v4272
        %v4274 = vpop.f32.mrf.mxu0
        %v4275 = vpop.f32.mrf.mxu0
        %v4276 = vadd.f32 %v3796, %v4275
        %v4277 = vpop.f32.mrf.mxu0
        %4278 = vmatprep.mubr.bf16.mxu0 0
        %4279 = vmatmul.mubr.bf16.gmra.mxu0 %v3965
        %v4280 = vpop.f32.mrf.mxu0
        %v4281 = vadd.f32 %v3800, %v4280
        %v4282 = vpop.f32.mrf.mxu0
        %v4283 = vpop.f32.mrf.mxu0
        %v4284 = vadd.f32 %v3804, %v4283
        %v4285 = vpop.f32.mrf.mxu0
        %4286 = vdwg.mxu0
        %v4287 = vmul.f32 %v4033, 0.5
        %v4288 = vmul.f32 %v4036, 0.5
        %v4289 = vmul.f32 %v4041, 0.5
        %v4290 = vmul.f32 %v4044, 0.5
        %v4291 = vmul.f32 %v4049, 0.5
        %v4292 = vmul.f32 %v4052, 0.5
        %v4293 = vmul.f32 %v4057, 0.5
        %v4294 = vmul.f32 %v4060, 0.5
        %v4295 = vmul.f32 %v4065, 0.5
        %v4296 = vmul.f32 %v4068, 0.5
        %v4297 = vmul.f32 %v4073, 0.5
        %v4298 = vmul.f32 %v4076, 0.5
        %v4299 = vmul.f32 %v4081, 0.5
        %v4300 = vmul.f32 %v4084, 0.5
        %v4301 = vmul.f32 %v4089, 0.5
        %v4302 = vmul.f32 %v4092, 0.5
        %v4303 = vmul.f32 %v4097, 0.5
        %v4304 = vmul.f32 %v4100, 0.5
        %v4305 = vmul.f32 %v4105, 0.5
        %v4306 = vmul.f32 %v4108, 0.5
        %v4307 = vmul.f32 %v4113, 0.5
        %v4308 = vmul.f32 %v4116, 0.5
        %v4309 = vmul.f32 %v4121, 0.5
        %v4310 = vmul.f32 %v4124, 0.5
        %v4311 = vmul.f32 %v4129, 0.5
        %v4312 = vmul.f32 %v4132, 0.5
        %v4313 = vmul.f32 %v4137, 0.5
        %v4314 = vmul.f32 %v4140, 0.5
        %v4315 = vmul.f32 %v4145, 0.5
        %v4316 = vmul.f32 %v4148, 0.5
        %v4317 = vmul.f32 %v4153, 0.5
        %v4318 = vmul.f32 %v4156, 0.5
        %v4319 = vmul.f32 %v4161, 0.5
        %v4320 = vmul.f32 %v4164, 0.5
        %v4321 = vmul.f32 %v4169, 0.5
        %v4322 = vmul.f32 %v4172, 0.5
        %v4323 = vmul.f32 %v4177, 0.5
        %v4324 = vmul.f32 %v4180, 0.5
        %v4325 = vmul.f32 %v4185, 0.5
        %v4326 = vmul.f32 %v4188, 0.5
        %v4327 = vmul.f32 %v4193, 0.5
        %v4328 = vmul.f32 %v4196, 0.5
        %v4329 = vmul.f32 %v4201, 0.5
        %v4330 = vmul.f32 %v4204, 0.5
        %v4331 = vmul.f32 %v4209, 0.5
        %v4332 = vmul.f32 %v4212, 0.5
        %v4333 = vmul.f32 %v4217, 0.5
        %v4334 = vmul.f32 %v4220, 0.5
        %v4335 = vmul.f32 %v4225, 0.5
        %v4336 = vmul.f32 %v4228, 0.5
        %v4337 = vmul.f32 %v4233, 0.5
        %v4338 = vmul.f32 %v4236, 0.5
        %v4339 = vmul.f32 %v4241, 0.5
        %v4340 = vmul.f32 %v4244, 0.5
        %v4341 = vmul.f32 %v4249, 0.5
        %v4342 = vmul.f32 %v4252, 0.5
        %v4343 = vmul.f32 %v4257, 0.5
        %v4344 = vmul.f32 %v4260, 0.5
        %v4345 = vmul.f32 %v4265, 0.5
        %v4346 = vmul.f32 %v4268, 0.5
        %v4347 = vmul.f32 %v4273, 0.5
        %v4348 = vmul.f32 %v4276, 0.5
        %v4349 = vmul.f32 %v4281, 0.5
        %v4350 = vmul.f32 %v4284, 0.5
        %v4351 = vmul.f32 %v4033, 0.70710677
        %v4352 = vmul.f32 %v4036, 0.70710677
        %v4353 = vmul.f32 %v4041, 0.70710677
        %v4354 = vmul.f32 %v4044, 0.70710677
        %v4355 = vmul.f32 %v4049, 0.70710677
        %v4356 = vmul.f32 %v4052, 0.70710677
        %v4357 = vmul.f32 %v4057, 0.70710677
        %v4358 = vmul.f32 %v4060, 0.70710677
        %v4359 = vmul.f32 %v4065, 0.70710677
        %v4360 = vmul.f32 %v4068, 0.70710677
        %v4361 = vmul.f32 %v4073, 0.70710677
        %v4362 = vmul.f32 %v4076, 0.70710677
        %v4363 = vmul.f32 %v4081, 0.70710677
        %v4364 = vmul.f32 %v4084, 0.70710677
        %v4365 = vmul.f32 %v4089, 0.70710677
        %v4366 = vmul.f32 %v4092, 0.70710677
        %v4367 = vmul.f32 %v4097, 0.70710677
        %v4368 = vmul.f32 %v4100, 0.70710677
        %v4369 = vmul.f32 %v4105, 0.70710677
        %v4370 = vmul.f32 %v4108, 0.70710677
        %v4371 = vmul.f32 %v4113, 0.70710677
        %v4372 = vmul.f32 %v4116, 0.70710677
        %v4373 = vmul.f32 %v4121, 0.70710677
        %v4374 = vmul.f32 %v4124, 0.70710677
        %v4375 = vmul.f32 %v4129, 0.70710677
        %v4376 = vmul.f32 %v4132, 0.70710677
        %v4377 = vmul.f32 %v4137, 0.70710677
        %v4378 = vmul.f32 %v4140, 0.70710677
        %v4379 = vmul.f32 %v4145, 0.70710677
        %v4380 = vmul.f32 %v4148, 0.70710677
        %v4381 = vmul.f32 %v4153, 0.70710677
        %v4382 = vmul.f32 %v4156, 0.70710677
        %v4383 = vmul.f32 %v4161, 0.70710677
        %v4384 = vmul.f32 %v4164, 0.70710677
        %v4385 = vmul.f32 %v4169, 0.70710677
        %v4386 = vmul.f32 %v4172, 0.70710677
        %v4387 = vmul.f32 %v4177, 0.70710677
        %v4388 = vmul.f32 %v4180, 0.70710677
        %v4389 = vmul.f32 %v4185, 0.70710677
        %v4390 = vmul.f32 %v4188, 0.70710677
        %v4391 = vmul.f32 %v4193, 0.70710677
        %v4392 = vmul.f32 %v4196, 0.70710677
        %v4393 = vmul.f32 %v4201, 0.70710677
        %v4394 = vmul.f32 %v4204, 0.70710677
        %v4395 = vmul.f32 %v4209, 0.70710677
        %v4396 = vmul.f32 %v4212, 0.70710677
        %v4397 = vmul.f32 %v4217, 0.70710677
        %v4398 = vmul.f32 %v4220, 0.70710677
        %v4399 = vmul.f32 %v4225, 0.70710677
        %v4400 = vmul.f32 %v4228, 0.70710677
        %v4401 = vmul.f32 %v4233, 0.70710677
        %v4402 = vmul.f32 %v4236, 0.70710677
        %v4403 = vmul.f32 %v4241, 0.70710677
        %v4404 = vmul.f32 %v4244, 0.70710677
        %v4405 = vmul.f32 %v4249, 0.70710677
        %v4406 = vmul.f32 %v4252, 0.70710677
        %v4407 = vmul.f32 %v4257, 0.70710677
        %v4408 = vmul.f32 %v4260, 0.70710677
        %v4409 = vmul.f32 %v4265, 0.70710677
        %v4410 = vmul.f32 %v4268, 0.70710677
        %v4411 = vmul.f32 %v4273, 0.70710677
        %v4412 = vmul.f32 %v4276, 0.70710677
        %v4413 = vmul.f32 %v4281, 0.70710677
        %v4414 = vmul.f32 %v4284, 0.70710677
        %v4415 = verf.f32.pop %v4351
        %v4416 = verf.f32.pop %v4352
        %v4417 = verf.f32.pop %v4353
        %v4418 = verf.f32.pop %v4354
        %v4419 = verf.f32.pop %v4355
        %v4420 = verf.f32.pop %v4356
        %v4421 = verf.f32.pop %v4357
        %v4422 = verf.f32.pop %v4358
        %v4423 = verf.f32.pop %v4359
        %v4424 = verf.f32.pop %v4360
        %v4425 = verf.f32.pop %v4361
        %v4426 = verf.f32.pop %v4362
        %v4427 = verf.f32.pop %v4363
        %v4428 = verf.f32.pop %v4364
        %v4429 = verf.f32.pop %v4365
        %v4430 = verf.f32.pop %v4366
        %v4431 = verf.f32.pop %v4367
        %v4432 = verf.f32.pop %v4368
        %v4433 = verf.f32.pop %v4369
        %v4434 = verf.f32.pop %v4370
        %v4435 = verf.f32.pop %v4371
        %v4436 = verf.f32.pop %v4372
        %v4437 = verf.f32.pop %v4373
        %v4438 = verf.f32.pop %v4374
        %v4439 = verf.f32.pop %v4375
        %v4440 = verf.f32.pop %v4376
        %v4441 = verf.f32.pop %v4377
        %v4442 = verf.f32.pop %v4378
        %v4443 = verf.f32.pop %v4379
        %v4444 = verf.f32.pop %v4380
        %v4445 = verf.f32.pop %v4381
        %v4446 = verf.f32.pop %v4382
        %v4447 = verf.f32.pop %v4383
        %v4448 = verf.f32.pop %v4384
        %v4449 = verf.f32.pop %v4385
        %v4450 = verf.f32.pop %v4386
        %v4451 = verf.f32.pop %v4387
        %v4452 = verf.f32.pop %v4388
        %v4453 = verf.f32.pop %v4389
        %v4454 = verf.f32.pop %v4390
        %v4455 = verf.f32.pop %v4391
        %v4456 = verf.f32.pop %v4392
        %v4457 = verf.f32.pop %v4393
        %v4458 = verf.f32.pop %v4394
        %v4459 = verf.f32.pop %v4395
        %v4460 = verf.f32.pop %v4396
        %v4461 = verf.f32.pop %v4397
        %v4462 = verf.f32.pop %v4398
        %v4463 = verf.f32.pop %v4399
        %v4464 = verf.f32.pop %v4400
        %v4465 = verf.f32.pop %v4401
        %v4466 = verf.f32.pop %v4402
        %v4467 = verf.f32.pop %v4403
        %v4468 = verf.f32.pop %v4404
        %v4469 = verf.f32.pop %v4405
        %v4470 = verf.f32.pop %v4406
        %v4471 = verf.f32.pop %v4407
        %v4472 = verf.f32.pop %v4408
        %v4473 = verf.f32.pop %v4409
        %v4474 = verf.f32.pop %v4410
        %v4475 = verf.f32.pop %v4411
        %v4476 = verf.f32.pop %v4412
        %v4477 = verf.f32.pop %v4413
        %v4478 = verf.f32.pop %v4414
        %v4479 = vadd.f32 %v4415, 1.0
        %v4480 = vadd.f32 %v4416, 1.0
        %v4481 = vadd.f32 %v4417, 1.0
        %v4482 = vadd.f32 %v4418, 1.0
        %v4483 = vadd.f32 %v4419, 1.0
        %v4484 = vadd.f32 %v4420, 1.0
        %v4485 = vadd.f32 %v4421, 1.0
        %v4486 = vadd.f32 %v4422, 1.0
        %v4487 = vadd.f32 %v4423, 1.0
        %v4488 = vadd.f32 %v4424, 1.0
        %v4489 = vadd.f32 %v4425, 1.0
        %v4490 = vadd.f32 %v4426, 1.0
        %v4491 = vadd.f32 %v4427, 1.0
        %v4492 = vadd.f32 %v4428, 1.0
        %v4493 = vadd.f32 %v4429, 1.0
        %v4494 = vadd.f32 %v4430, 1.0
        %v4495 = vadd.f32 %v4431, 1.0
        %v4496 = vadd.f32 %v4432, 1.0
        %v4497 = vadd.f32 %v4433, 1.0
        %v4498 = vadd.f32 %v4434, 1.0
        %v4499 = vadd.f32 %v4435, 1.0
        %v4500 = vadd.f32 %v4436, 1.0
        %v4501 = vadd.f32 %v4437, 1.0
        %v4502 = vadd.f32 %v4438, 1.0
        %v4503 = vadd.f32 %v4439, 1.0
        %v4504 = vadd.f32 %v4440, 1.0
        %v4505 = vadd.f32 %v4441, 1.0
        %v4506 = vadd.f32 %v4442, 1.0
        %v4507 = vadd.f32 %v4443, 1.0
        %v4508 = vadd.f32 %v4444, 1.0
        %v4509 = vadd.f32 %v4445, 1.0
        %v4510 = vadd.f32 %v4446, 1.0
        %v4511 = vadd.f32 %v4447, 1.0
        %v4512 = vadd.f32 %v4448, 1.0
        %v4513 = vadd.f32 %v4449, 1.0
        %v4514 = vadd.f32 %v4450, 1.0
        %v4515 = vadd.f32 %v4451, 1.0
        %v4516 = vadd.f32 %v4452, 1.0
        %v4517 = vadd.f32 %v4453, 1.0
        %v4518 = vadd.f32 %v4454, 1.0
        %v4519 = vadd.f32 %v4455, 1.0
        %v4520 = vadd.f32 %v4456, 1.0
        %v4521 = vadd.f32 %v4457, 1.0
        %v4522 = vadd.f32 %v4458, 1.0
        %v4523 = vadd.f32 %v4459, 1.0
        %v4524 = vadd.f32 %v4460, 1.0
        %v4525 = vadd.f32 %v4461, 1.0
        %v4526 = vadd.f32 %v4462, 1.0
        %v4527 = vadd.f32 %v4463, 1.0
        %v4528 = vadd.f32 %v4464, 1.0
        %v4529 = vadd.f32 %v4465, 1.0
        %v4530 = vadd.f32 %v4466, 1.0
        %v4531 = vadd.f32 %v4467, 1.0
        %v4532 = vadd.f32 %v4468, 1.0
        %v4533 = vadd.f32 %v4469, 1.0
        %v4534 = vadd.f32 %v4470, 1.0
        %v4535 = vadd.f32 %v4471, 1.0
        %v4536 = vadd.f32 %v4472, 1.0
        %v4537 = vadd.f32 %v4473, 1.0
        %v4538 = vadd.f32 %v4474, 1.0
        %v4539 = vadd.f32 %v4475, 1.0
        %v4540 = vadd.f32 %v4476, 1.0
        %v4541 = vadd.f32 %v4477, 1.0
        %v4542 = vadd.f32 %v4478, 1.0
        %v4543 = vmul.f32 %v4287, %v4479
        %v4544 = vmul.f32 %v4288, %v4480
        %v4545 = vmul.f32 %v4289, %v4481
        %v4546 = vmul.f32 %v4290, %v4482
        %v4547 = vmul.f32 %v4291, %v4483
        %v4548 = vmul.f32 %v4292, %v4484
        %v4549 = vmul.f32 %v4293, %v4485
        %v4550 = vmul.f32 %v4294, %v4486
        %v4551 = vmul.f32 %v4295, %v4487
        %v4552 = vmul.f32 %v4296, %v4488
        %v4553 = vmul.f32 %v4297, %v4489
        %v4554 = vmul.f32 %v4298, %v4490
        %v4555 = vmul.f32 %v4299, %v4491
        %v4556 = vmul.f32 %v4300, %v4492
        %v4557 = vmul.f32 %v4301, %v4493
        %v4558 = vmul.f32 %v4302, %v4494
        %v4559 = vmul.f32 %v4303, %v4495
        %v4560 = vmul.f32 %v4304, %v4496
        %v4561 = vmul.f32 %v4305, %v4497
        %v4562 = vmul.f32 %v4306, %v4498
        %v4563 = vmul.f32 %v4307, %v4499
        %v4564 = vmul.f32 %v4308, %v4500
        %v4565 = vmul.f32 %v4309, %v4501
        %v4566 = vmul.f32 %v4310, %v4502
        %v4567 = vmul.f32 %v4311, %v4503
        %v4568 = vmul.f32 %v4312, %v4504
        %v4569 = vmul.f32 %v4313, %v4505
        %v4570 = vmul.f32 %v4314, %v4506
        %v4571 = vmul.f32 %v4315, %v4507
        %v4572 = vmul.f32 %v4316, %v4508
        %v4573 = vmul.f32 %v4317, %v4509
        %v4574 = vmul.f32 %v4318, %v4510
        %v4575 = vmul.f32 %v4319, %v4511
        %v4576 = vmul.f32 %v4320, %v4512
        %v4577 = vmul.f32 %v4321, %v4513
        %v4578 = vmul.f32 %v4322, %v4514
        %v4579 = vmul.f32 %v4323, %v4515
        %v4580 = vmul.f32 %v4324, %v4516
        %v4581 = vmul.f32 %v4325, %v4517
        %v4582 = vmul.f32 %v4326, %v4518
        %v4583 = vmul.f32 %v4327, %v4519
        %v4584 = vmul.f32 %v4328, %v4520
        %v4585 = vmul.f32 %v4329, %v4521
        %v4586 = vmul.f32 %v4330, %v4522
        %v4587 = vmul.f32 %v4331, %v4523
        %v4588 = vmul.f32 %v4332, %v4524
        %v4589 = vmul.f32 %v4333, %v4525
        %v4590 = vmul.f32 %v4334, %v4526
        %v4591 = vmul.f32 %v4335, %v4527
        %v4592 = vmul.f32 %v4336, %v4528
        %v4593 = vmul.f32 %v4337, %v4529
        %v4594 = vmul.f32 %v4338, %v4530
        %v4595 = vmul.f32 %v4339, %v4531
        %v4596 = vmul.f32 %v4340, %v4532
        %v4597 = vmul.f32 %v4341, %v4533
        %v4598 = vmul.f32 %v4342, %v4534
        %v4599 = vmul.f32 %v4343, %v4535
        %v4600 = vmul.f32 %v4344, %v4536
        %v4601 = vmul.f32 %v4345, %v4537
        %v4602 = vmul.f32 %v4346, %v4538
        %v4603 = vmul.f32 %v4347, %v4539
        %v4604 = vmul.f32 %v4348, %v4540
        %v4605 = vmul.f32 %v4349, %v4541
        %v4606 = vmul.f32 %v4350, %v4542
        %v4607 = vmul.f32 %v3231, %v4543
        %v4608 = vmul.f32 %v3234, %v4544
        %v4609 = vmul.f32 %v3239, %v4545
        %v4610 = vmul.f32 %v3242, %v4546
        %v4611 = vmul.f32 %v3247, %v4547
        %v4612 = vmul.f32 %v3250, %v4548
        %v4613 = vmul.f32 %v3255, %v4549
        %v4614 = vmul.f32 %v3258, %v4550
        %v4615 = vmul.f32 %v3263, %v4551
        %v4616 = vmul.f32 %v3266, %v4552
        %v4617 = vmul.f32 %v3271, %v4553
        %v4618 = vmul.f32 %v3274, %v4554
        %v4619 = vmul.f32 %v3279, %v4555
        %v4620 = vmul.f32 %v3282, %v4556
        %v4621 = vmul.f32 %v3287, %v4557
        %v4622 = vmul.f32 %v3290, %v4558
        %v4623 = vmul.f32 %v3295, %v4559
        %v4624 = vmul.f32 %v3298, %v4560
        %v4625 = vmul.f32 %v3303, %v4561
        %v4626 = vmul.f32 %v3306, %v4562
        %v4627 = vmul.f32 %v3311, %v4563
        %v4628 = vmul.f32 %v3314, %v4564
        %v4629 = vmul.f32 %v3319, %v4565
        %v4630 = vmul.f32 %v3322, %v4566
        %v4631 = vmul.f32 %v3327, %v4567
        %v4632 = vmul.f32 %v3330, %v4568
        %v4633 = vmul.f32 %v3335, %v4569
        %v4634 = vmul.f32 %v3338, %v4570
        %v4635 = vmul.f32 %v3343, %v4571
        %v4636 = vmul.f32 %v3346, %v4572
        %v4637 = vmul.f32 %v3351, %v4573
        %v4638 = vmul.f32 %v3354, %v4574
        %v4639 = vmul.f32 %v3359, %v4575
        %v4640 = vmul.f32 %v3362, %v4576
        %v4641 = vmul.f32 %v3367, %v4577
        %v4642 = vmul.f32 %v3370, %v4578
        %v4643 = vmul.f32 %v3375, %v4579
        %v4644 = vmul.f32 %v3378, %v4580
        %v4645 = vmul.f32 %v3383, %v4581
        %v4646 = vmul.f32 %v3386, %v4582
        %v4647 = vmul.f32 %v3391, %v4583
        %v4648 = vmul.f32 %v3394, %v4584
        %v4649 = vmul.f32 %v3399, %v4585
        %v4650 = vmul.f32 %v3402, %v4586
        %v4651 = vmul.f32 %v3407, %v4587
        %v4652 = vmul.f32 %v3410, %v4588
        %v4653 = vmul.f32 %v3415, %v4589
        %v4654 = vmul.f32 %v3418, %v4590
        %v4655 = vmul.f32 %v3423, %v4591
        %v4656 = vmul.f32 %v3426, %v4592
        %v4657 = vmul.f32 %v3431, %v4593
        %v4658 = vmul.f32 %v3434, %v4594
        %v4659 = vmul.f32 %v3439, %v4595
        %v4660 = vmul.f32 %v3442, %v4596
        %v4661 = vmul.f32 %v3447, %v4597
        %v4662 = vmul.f32 %v3450, %v4598
        %v4663 = vmul.f32 %v3455, %v4599
        %v4664 = vmul.f32 %v3458, %v4600
        %v4665 = vmul.f32 %v3463, %v4601
        %v4666 = vmul.f32 %v3466, %v4602
        %v4667 = vmul.f32 %v3471, %v4603
        %v4668 = vmul.f32 %v3474, %v4604
        %v4669 = vmul.f32 %v3479, %v4605
        %v4670 = vmul.f32 %v3482, %v4606
        %v4671 = vld [vmem:[%s6] sm:$0xff]
        %v4672 = vld [vmem:[%s6 + $0x8] sm:$0xff]
        %v4673 = vld [vmem:[%s6 + $0x10] sm:$0xff]
        %v4674 = vld [vmem:[%s6 + $0x18] sm:$0xff]
        %v4675 = vld [vmem:[%s6 + $0x20] sm:$0xff]
        %v4676 = vld [vmem:[%s6 + $0x28] sm:$0xff]
        %v4677 = vld [vmem:[%s6 + $0x30] sm:$0xff]
        %v4678 = vld [vmem:[%s6 + $0x38] sm:$0xff]
        %v4679 = vld [vmem:[%s6 + $0x40] sm:$0xff]
        %v4680 = vld [vmem:[%s6 + $0x48] sm:$0xff]
        %v4681 = vld [vmem:[%s6 + $0x50] sm:$0xff]
        %v4682 = vld [vmem:[%s6 + $0x58] sm:$0xff]
        %v4683 = vld [vmem:[%s6 + $0x60] sm:$0xff]
        %v4684 = vld [vmem:[%s6 + $0x68] sm:$0xff]
        %v4685 = vld [vmem:[%s6 + $0x70] sm:$0xff]
        %v4686 = vld [vmem:[%s6 + $0x78] sm:$0xff]
        %v4687 = vld [vmem:[%s6 + $0x80] sm:$0xff]
        %v4688 = vld [vmem:[%s6 + $0x88] sm:$0xff]
        %v4689 = vld [vmem:[%s6 + $0x90] sm:$0xff]
        %v4690 = vld [vmem:[%s6 + $0x98] sm:$0xff]
        %v4691 = vld [vmem:[%s6 + $0xa0] sm:$0xff]
        %v4692 = vld [vmem:[%s6 + $0xa8] sm:$0xff]
        %v4693 = vld [vmem:[%s6 + $0xb0] sm:$0xff]
        %v4694 = vld [vmem:[%s6 + $0xb8] sm:$0xff]
        %v4695 = vld [vmem:[%s6 + $0xc0] sm:$0xff]
        %v4696 = vld [vmem:[%s6 + $0xc8] sm:$0xff]
        %v4697 = vld [vmem:[%s6 + $0xd0] sm:$0xff]
        %v4698 = vld [vmem:[%s6 + $0xd8] sm:$0xff]
        %v4699 = vld [vmem:[%s6 + $0xe0] sm:$0xff]
        %v4700 = vld [vmem:[%s6 + $0xe8] sm:$0xff]
        %v4701 = vld [vmem:[%s6 + $0xf0] sm:$0xff]
        %v4702 = vld [vmem:[%s6 + $0xf8] sm:$0xff]
        %v4703 = vpack.c.bf16 %v4608, %v4607
        %v4704 = vpack.c.bf16 %v4610, %v4609
        %v4705 = vpack.c.bf16 %v4612, %v4611
        %v4706 = vpack.c.bf16 %v4614, %v4613
        %v4707 = vpack.c.bf16 %v4616, %v4615
        %v4708 = vpack.c.bf16 %v4618, %v4617
        %v4709 = vpack.c.bf16 %v4620, %v4619
        %v4710 = vpack.c.bf16 %v4622, %v4621
        %v4711 = vpack.c.bf16 %v4624, %v4623
        %v4712 = vpack.c.bf16 %v4626, %v4625
        %v4713 = vpack.c.bf16 %v4628, %v4627
        %v4714 = vpack.c.bf16 %v4630, %v4629
        %v4715 = vpack.c.bf16 %v4632, %v4631
        %v4716 = vpack.c.bf16 %v4634, %v4633
        %v4717 = vpack.c.bf16 %v4636, %v4635
        %v4718 = vpack.c.bf16 %v4638, %v4637
        %v4719 = vpack.c.bf16 %v4640, %v4639
        %v4720 = vpack.c.bf16 %v4642, %v4641
        %v4721 = vpack.c.bf16 %v4644, %v4643
        %v4722 = vpack.c.bf16 %v4646, %v4645
        %v4723 = vpack.c.bf16 %v4648, %v4647
        %v4724 = vpack.c.bf16 %v4650, %v4649
        %v4725 = vpack.c.bf16 %v4652, %v4651
        %v4726 = vpack.c.bf16 %v4654, %v4653
        %v4727 = vpack.c.bf16 %v4656, %v4655
        %v4728 = vpack.c.bf16 %v4658, %v4657
        %v4729 = vpack.c.bf16 %v4660, %v4659
        %v4730 = vpack.c.bf16 %v4662, %v4661
        %v4731 = vpack.c.bf16 %v4664, %v4663
        %v4732 = vpack.c.bf16 %v4666, %v4665
        %v4733 = vpack.c.bf16 %v4668, %v4667
        %v4734 = vpack.c.bf16 %v4670, %v4669
        %4735 = vset.pattern.permute.xlu0 9
        %4736 = vperm.xlu0 %4735, %v1044
        %v4737 = vpop.permute.xlu0 %4736
        %4739 = vset.pattern.permute.xlu0 9
        %4740 = vperm.xlu0 %4739, %v1045
        %v4741 = vpop.permute.xlu0 %4740
        %4743 = vset.pattern.permute.xlu0 9
        %4744 = vperm.xlu0 %4743, %v1046
        %v4745 = vpop.permute.xlu0 %4744
        %4747 = vset.pattern.permute.xlu0 9
        %4748 = vperm.xlu0 %4747, %v1047
        %v4749 = vpop.permute.xlu0 %4748
        %4751 = vset.pattern.permute.xlu0 9
        %4752 = vperm.xlu0 %4751, %v1048
        %v4753 = vpop.permute.xlu0 %4752
        %4755 = vset.pattern.permute.xlu0 9
        %4756 = vperm.xlu0 %4755, %v1049
        %v4757 = vpop.permute.xlu0 %4756
        %4759 = vset.pattern.permute.xlu0 9
        %4760 = vperm.xlu0 %4759, %v1050
        %v4761 = vpop.permute.xlu0 %4760
        %4763 = vset.pattern.permute.xlu0 9
        %4764 = vperm.xlu0 %4763, %v1051
        %v4765 = vpop.permute.xlu0 %4764
        %4767 = vset.pattern.permute.xlu0 9
        %4768 = vperm.xlu0 %4767, %v1052
        %v4769 = vpop.permute.xlu0 %4768
        %4771 = vset.pattern.permute.xlu0 9
        %4772 = vperm.xlu0 %4771, %v1053
        %v4773 = vpop.permute.xlu0 %4772
        %4775 = vset.pattern.permute.xlu0 9
        %4776 = vperm.xlu0 %4775, %v1054
        %v4777 = vpop.permute.xlu0 %4776
        %4779 = vset.pattern.permute.xlu0 9
        %4780 = vperm.xlu0 %4779, %v1055
        %v4781 = vpop.permute.xlu0 %4780
        %4783 = vset.pattern.permute.xlu0 9
        %4784 = vperm.xlu0 %4783, %v1056
        %v4785 = vpop.permute.xlu0 %4784
        %4787 = vset.pattern.permute.xlu0 9
        %4788 = vperm.xlu0 %4787, %v1057
        %v4789 = vpop.permute.xlu0 %4788
        %4791 = vset.pattern.permute.xlu0 9
        %4792 = vperm.xlu0 %4791, %v1058
        %v4793 = vpop.permute.xlu0 %4792
        %4795 = vset.pattern.permute.xlu0 9
        %4796 = vperm.xlu0 %4795, %v1059
        %v4797 = vpop.permute.xlu0 %4796
        %v4831 = vunpack.c.l.b16 %v4671
        %v4832 = vunpack.c.h.b16 %v4671
        %v4833 = vunpack.c.l.b16 %v4672
        %v4834 = vunpack.c.h.b16 %v4672
        %v4835 = vunpack.c.l.b16 %v4673
        %v4836 = vunpack.c.h.b16 %v4673
        %v4837 = vunpack.c.l.b16 %v4674
        %v4838 = vunpack.c.h.b16 %v4674
        %v4839 = vunpack.c.l.b16 %v4675
        %v4840 = vunpack.c.h.b16 %v4675
        %v4841 = vunpack.c.l.b16 %v4676
        %v4842 = vunpack.c.h.b16 %v4676
        %v4843 = vunpack.c.l.b16 %v4677
        %v4844 = vunpack.c.h.b16 %v4677
        %v4845 = vunpack.c.l.b16 %v4678
        %v4846 = vunpack.c.h.b16 %v4678
        %v4847 = vunpack.c.l.b16 %v4679
        %v4848 = vunpack.c.h.b16 %v4679
        %v4849 = vunpack.c.l.b16 %v4680
        %v4850 = vunpack.c.h.b16 %v4680
        %v4851 = vunpack.c.l.b16 %v4681
        %v4852 = vunpack.c.h.b16 %v4681
        %v4853 = vunpack.c.l.b16 %v4682
        %v4854 = vunpack.c.h.b16 %v4682
        %v4855 = vunpack.c.l.b16 %v4683
        %v4856 = vunpack.c.h.b16 %v4683
        %v4857 = vunpack.c.l.b16 %v4684
        %v4858 = vunpack.c.h.b16 %v4684
        %v4859 = vunpack.c.l.b16 %v4685
        %v4860 = vunpack.c.h.b16 %v4685
        %v4861 = vunpack.c.l.b16 %v4686
        %v4862 = vunpack.c.h.b16 %v4686
        %v4863 = vunpack.c.l.b16 %v4687
        %v4864 = vunpack.c.h.b16 %v4687
        %v4865 = vunpack.c.l.b16 %v4688
        %v4866 = vunpack.c.h.b16 %v4688
        %v4867 = vunpack.c.l.b16 %v4689
        %v4868 = vunpack.c.h.b16 %v4689
        %v4869 = vunpack.c.l.b16 %v4690
        %v4870 = vunpack.c.h.b16 %v4690
        %v4871 = vunpack.c.l.b16 %v4691
        %v4872 = vunpack.c.h.b16 %v4691
        %v4873 = vunpack.c.l.b16 %v4692
        %v4874 = vunpack.c.h.b16 %v4692
        %v4875 = vunpack.c.l.b16 %v4693
        %v4876 = vunpack.c.h.b16 %v4693
        %v4877 = vunpack.c.l.b16 %v4694
        %v4878 = vunpack.c.h.b16 %v4694
        %v4879 = vunpack.c.l.b16 %v4695
        %v4880 = vunpack.c.h.b16 %v4695
        %v4881 = vunpack.c.l.b16 %v4696
        %v4882 = vunpack.c.h.b16 %v4696
        %v4883 = vunpack.c.l.b16 %v4697
        %v4884 = vunpack.c.h.b16 %v4697
        %v4885 = vunpack.c.l.b16 %v4698
        %v4886 = vunpack.c.h.b16 %v4698
        %v4887 = vunpack.c.l.b16 %v4699
        %v4888 = vunpack.c.h.b16 %v4699
        %v4889 = vunpack.c.l.b16 %v4700
        %v4890 = vunpack.c.h.b16 %v4700
        %v4891 = vunpack.c.l.b16 %v4701
        %v4892 = vunpack.c.h.b16 %v4701
        %v4893 = vunpack.c.l.b16 %v4702
        %v4894 = vunpack.c.h.b16 %v4702
        %v4895 = vpack.c.b16 %v4835, %v4831
        %v4896 = vpack.c.b16 %v4836, %v4832
        %v4897 = vpack.c.b16 %v4837, %v4833
        %v4898 = vpack.c.b16 %v4838, %v4834
        %v4899 = vpack.c.b16 %v4843, %v4839
        %v4900 = vpack.c.b16 %v4844, %v4840
        %v4901 = vpack.c.b16 %v4845, %v4841
        %v4902 = vpack.c.b16 %v4846, %v4842
        %v4903 = vpack.c.b16 %v4851, %v4847
        %v4904 = vpack.c.b16 %v4852, %v4848
        %v4905 = vpack.c.b16 %v4853, %v4849
        %v4906 = vpack.c.b16 %v4854, %v4850
        %v4907 = vpack.c.b16 %v4859, %v4855
        %v4908 = vpack.c.b16 %v4860, %v4856
        %v4909 = vpack.c.b16 %v4861, %v4857
        %v4910 = vpack.c.b16 %v4862, %v4858
        %v4911 = vpack.c.b16 %v4867, %v4863
        %v4912 = vpack.c.b16 %v4868, %v4864
        %v4913 = vpack.c.b16 %v4869, %v4865
        %v4914 = vpack.c.b16 %v4870, %v4866
        %v4915 = vpack.c.b16 %v4875, %v4871
        %v4916 = vpack.c.b16 %v4876, %v4872
        %v4917 = vpack.c.b16 %v4877, %v4873
        %v4918 = vpack.c.b16 %v4878, %v4874
        %v4919 = vpack.c.b16 %v4883, %v4879
        %v4920 = vpack.c.b16 %v4884, %v4880
        %v4921 = vpack.c.b16 %v4885, %v4881
        %v4922 = vpack.c.b16 %v4886, %v4882
        %v4923 = vpack.c.b16 %v4891, %v4887
        %v4924 = vpack.c.b16 %v4892, %v4888
        %v4925 = vpack.c.b16 %v4893, %v4889
        %v4926 = vpack.c.b16 %v4894, %v4890
        %4959 = vmatprep.subr.bf16.mxu0 0
        %4960 = vmatpush1.bf16.msra.mxu0 %v4710
        %4961 = vmatprep.subr.bf16.mxu0 0
        %4962 = vmatpush1.bf16.msra.mxu0 %v4709
        %4963 = vmatprep.subr.bf16.mxu0 0
        %4964 = vmatpush1.bf16.msra.mxu0 %v4708
        %4965 = vmatprep.subr.bf16.mxu0 0
        %4966 = vmatpush1.bf16.msra.mxu0 %v4707
        %4967 = vmatprep.subr.bf16.mxu0 0
        %4968 = vmatpush1.bf16.msra.mxu0 %v4706
        %4969 = vmatprep.subr.bf16.mxu0 0
        %4970 = vmatpush1.bf16.msra.mxu0 %v4705
        %4971 = vmatprep.subr.bf16.mxu0 0
        %4972 = vmatpush1.bf16.msra.mxu0 %v4704
        %4973 = vmatprep.subr.bf16.mxu0 0
        %4974 = vmatpush1.bf16.msra.mxu0 %v4703
        %4975 = vmatprep.subr.bf16.mxu0 0
        %4976 = vmatpush2.bf16.msra.mxu0 %v4718
        %4977 = vmatprep.subr.bf16.mxu0 0
        %4978 = vmatpush2.bf16.msra.mxu0 %v4717
        %4979 = vmatprep.subr.bf16.mxu0 0
        %4980 = vmatpush2.bf16.msra.mxu0 %v4716
        %4981 = vmatprep.subr.bf16.mxu0 0
        %4982 = vmatpush2.bf16.msra.mxu0 %v4715
        %4983 = vmatprep.subr.bf16.mxu0 0
        %4984 = vmatpush2.bf16.msra.mxu0 %v4714
        %4985 = vmatprep.subr.bf16.mxu0 0
        %4986 = vmatpush2.bf16.msra.mxu0 %v4713
        %4987 = vmatprep.subr.bf16.mxu0 0
        %4988 = vmatpush2.bf16.msra.mxu0 %v4712
        %4989 = vmatprep.subr.bf16.mxu0 0
        %4990 = vmatpush2.bf16.msra.mxu0 %v4711
        %4991 = vmatprep.mubr.bf16.mxu0 %v4896
        %4992 = vmatmul.mubr.bf16.gmra.mxu0 %v4895
        %v4993 = vpop.f32.mrf.mxu0
        %v4994 = vadd.f32 %v4737, %v4993
        %v4995 = vpop.f32.mrf.mxu0
        %v4996 = vpop.f32.mrf.mxu0
        %v4997 = vadd.f32 %v4741, %v4996
        %v4998 = vpop.f32.mrf.mxu0
        %4999 = vmatprep.mubr.bf16.mxu0 %v4900
        %5000 = vmatmul.mubr.bf16.gmra.mxu0 %v4899
        %v5001 = vpop.f32.mrf.mxu0
        %v5002 = vadd.f32 %v4745, %v5001
        %v5003 = vpop.f32.mrf.mxu0
        %v5004 = vpop.f32.mrf.mxu0
        %v5005 = vadd.f32 %v4749, %v5004
        %v5006 = vpop.f32.mrf.mxu0
        %5007 = vmatprep.mubr.bf16.mxu0 %v4904
        %5008 = vmatmul.mubr.bf16.gmra.mxu0 %v4903
        %v5009 = vpop.f32.mrf.mxu0
        %v5010 = vadd.f32 %v4753, %v5009
        %v5011 = vpop.f32.mrf.mxu0
        %v5012 = vpop.f32.mrf.mxu0
        %v5013 = vadd.f32 %v4757, %v5012
        %v5014 = vpop.f32.mrf.mxu0
        %5015 = vmatprep.mubr.bf16.mxu0 %v4908
        %5016 = vmatmul.mubr.bf16.gmra.mxu0 %v4907
        %v5017 = vpop.f32.mrf.mxu0
        %v5018 = vadd.f32 %v4761, %v5017
        %v5019 = vpop.f32.mrf.mxu0
        %v5020 = vpop.f32.mrf.mxu0
        %v5021 = vadd.f32 %v4765, %v5020
        %v5022 = vpop.f32.mrf.mxu0
        %5023 = vmatprep.mubr.bf16.mxu0 %v4912
        %5024 = vmatmul.mubr.bf16.gmra.mxu0 %v4911
        %v5025 = vpop.f32.mrf.mxu0
        %v5026 = vadd.f32 %v4769, %v5025
        %v5027 = vpop.f32.mrf.mxu0
        %v5028 = vpop.f32.mrf.mxu0
        %v5029 = vadd.f32 %v4773, %v5028
        %v5030 = vpop.f32.mrf.mxu0
        %5031 = vmatprep.mubr.bf16.mxu0 %v4916
        %5032 = vmatmul.mubr.bf16.gmra.mxu0 %v4915
        %v5033 = vpop.f32.mrf.mxu0
        %v5034 = vadd.f32 %v4777, %v5033
        %v5035 = vpop.f32.mrf.mxu0
        %v5036 = vpop.f32.mrf.mxu0
        %v5037 = vadd.f32 %v4781, %v5036
        %v5038 = vpop.f32.mrf.mxu0
        %5039 = vmatprep.mubr.bf16.mxu0 %v4920
        %5040 = vmatmul.mubr.bf16.gmra.mxu0 %v4919
        %v5041 = vpop.f32.mrf.mxu0
        %v5042 = vadd.f32 %v4785, %v5041
        %v5043 = vpop.f32.mrf.mxu0
        %v5044 = vpop.f32.mrf.mxu0
        %v5045 = vadd.f32 %v4789, %v5044
        %v5046 = vpop.f32.mrf.mxu0
        %5047 = vmatprep.mubr.bf16.mxu0 %v4924
        %5048 = vmatmul.mubr.bf16.gmra.mxu0 %v4923
        %v5049 = vpop.f32.mrf.mxu0
        %v5050 = vadd.f32 %v4793, %v5049
        %v5051 = vpop.f32.mrf.mxu0
        %v5052 = vpop.f32.mrf.mxu0
        %v5053 = vadd.f32 %v4797, %v5052
        %v5054 = vpop.f32.mrf.mxu0
        %5055 = vdwg.mxu0
        %5056 = vmatprep.subr.bf16.mxu0 0
        %5057 = vmatpush1.bf16.msra.mxu0 %v4726
        %5058 = vmatprep.subr.bf16.mxu0 0
        %5059 = vmatpush1.bf16.msra.mxu0 %v4725
        %5060 = vmatprep.subr.bf16.mxu0 0
        %5061 = vmatpush1.bf16.msra.mxu0 %v4724
        %5062 = vmatprep.subr.bf16.mxu0 0
        %5063 = vmatpush1.bf16.msra.mxu0 %v4723
        %5064 = vmatprep.subr.bf16.mxu0 0
        %5065 = vmatpush1.bf16.msra.mxu0 %v4722
        %5066 = vmatprep.subr.bf16.mxu0 0
        %5067 = vmatpush1.bf16.msra.mxu0 %v4721
        %5068 = vmatprep.subr.bf16.mxu0 0
        %5069 = vmatpush1.bf16.msra.mxu0 %v4720
        %5070 = vmatprep.subr.bf16.mxu0 0
        %5071 = vmatpush1.bf16.msra.mxu0 %v4719
        %5072 = vmatprep.subr.bf16.mxu0 0
        %5073 = vmatpush2.bf16.msra.mxu0 %v4734
        %5074 = vmatprep.subr.bf16.mxu0 0
        %5075 = vmatpush2.bf16.msra.mxu0 %v4733
        %5076 = vmatprep.subr.bf16.mxu0 0
        %5077 = vmatpush2.bf16.msra.mxu0 %v4732
        %5078 = vmatprep.subr.bf16.mxu0 0
        %5079 = vmatpush2.bf16.msra.mxu0 %v4731
        %5080 = vmatprep.subr.bf16.mxu0 0
        %5081 = vmatpush2.bf16.msra.mxu0 %v4730
        %5082 = vmatprep.subr.bf16.mxu0 0
        %5083 = vmatpush2.bf16.msra.mxu0 %v4729
        %5084 = vmatprep.subr.bf16.mxu0 0
        %5085 = vmatpush2.bf16.msra.mxu0 %v4728
        %5086 = vmatprep.subr.bf16.mxu0 0
        %5087 = vmatpush2.bf16.msra.mxu0 %v4727
        %5088 = vmatprep.mubr.bf16.mxu0 %v4898
        %5089 = vmatmul.mubr.bf16.gmra.mxu0 %v4897
        %v5090 = vpop.f32.mrf.mxu0
        %v5091 = vadd.f32 %v4994, %v5090
        %v5092 = vpop.f32.mrf.mxu0
        %v5093 = vpop.f32.mrf.mxu0
        %v5094 = vadd.f32 %v4997, %v5093
        %v5095 = vpop.f32.mrf.mxu0
        %5096 = vmatprep.mubr.bf16.mxu0 %v4902
        %5097 = vmatmul.mubr.bf16.gmra.mxu0 %v4901
        %v5098 = vpop.f32.mrf.mxu0
        %v5099 = vadd.f32 %v5002, %v5098
        %v5100 = vpop.f32.mrf.mxu0
        %v5101 = vpop.f32.mrf.mxu0
        %v5102 = vadd.f32 %v5005, %v5101
        %v5103 = vpop.f32.mrf.mxu0
        %5104 = vmatprep.mubr.bf16.mxu0 %v4906
        %5105 = vmatmul.mubr.bf16.gmra.mxu0 %v4905
        %v5106 = vpop.f32.mrf.mxu0
        %v5107 = vadd.f32 %v5010, %v5106
        %v5108 = vpop.f32.mrf.mxu0
        %v5109 = vpop.f32.mrf.mxu0
        %v5110 = vadd.f32 %v5013, %v5109
        %v5111 = vpop.f32.mrf.mxu0
        %5112 = vmatprep.mubr.bf16.mxu0 %v4910
        %5113 = vmatmul.mubr.bf16.gmra.mxu0 %v4909
        %v5114 = vpop.f32.mrf.mxu0
        %v5115 = vadd.f32 %v5018, %v5114
        %v5116 = vpop.f32.mrf.mxu0
        %v5117 = vpop.f32.mrf.mxu0
        %v5118 = vadd.f32 %v5021, %v5117
        %v5119 = vpop.f32.mrf.mxu0
        %5120 = vmatprep.mubr.bf16.mxu0 %v4914
        %5121 = vmatmul.mubr.bf16.gmra.mxu0 %v4913
        %v5122 = vpop.f32.mrf.mxu0
        %v5123 = vadd.f32 %v5026, %v5122
        %v5124 = vpop.f32.mrf.mxu0
        %v5125 = vpop.f32.mrf.mxu0
        %v5126 = vadd.f32 %v5029, %v5125
        %v5127 = vpop.f32.mrf.mxu0
        %5128 = vmatprep.mubr.bf16.mxu0 %v4918
        %5129 = vmatmul.mubr.bf16.gmra.mxu0 %v4917
        %v5130 = vpop.f32.mrf.mxu0
        %v5131 = vadd.f32 %v5034, %v5130
        %v5132 = vpop.f32.mrf.mxu0
        %v5133 = vpop.f32.mrf.mxu0
        %v5134 = vadd.f32 %v5037, %v5133
        %v5135 = vpop.f32.mrf.mxu0
        %5136 = vmatprep.mubr.bf16.mxu0 %v4922
        %5137 = vmatmul.mubr.bf16.gmra.mxu0 %v4921
        %v5138 = vpop.f32.mrf.mxu0
        %v5139 = vadd.f32 %v5042, %v5138
        %v5140 = vpop.f32.mrf.mxu0
        %v5141 = vpop.f32.mrf.mxu0
        %v5142 = vadd.f32 %v5045, %v5141
        %v5143 = vpop.f32.mrf.mxu0
        %5144 = vmatprep.mubr.bf16.mxu0 %v4926
        %5145 = vmatmul.mubr.bf16.gmra.mxu0 %v4925
        %v5146 = vpop.f32.mrf.mxu0
        %v5147 = vadd.f32 %v5050, %v5146
        %v5148 = vpop.f32.mrf.mxu0
        %v5149 = vpop.f32.mrf.mxu0
        %v5150 = vadd.f32 %v5053, %v5149
        %v5151 = vpop.f32.mrf.mxu0
        %5152 = vdwg.mxu0
        %v5153 = vadd.f32 %v5091, %v2278
        %v5154 = vadd.f32 %v5094, %v2279
        %v5155 = vadd.f32 %v5099, %v2280
        %v5156 = vadd.f32 %v5102, %v2281
        %v5157 = vadd.f32 %v5107, %v2282
        %v5158 = vadd.f32 %v5110, %v2283
        %v5159 = vadd.f32 %v5115, %v2284
        %v5160 = vadd.f32 %v5118, %v2285
        %v5161 = vadd.f32 %v5123, %v2286
        %v5162 = vadd.f32 %v5126, %v2287
        %v5163 = vadd.f32 %v5131, %v2288
        %v5164 = vadd.f32 %v5134, %v2289
        %v5165 = vadd.f32 %v5139, %v2290
        %v5166 = vadd.f32 %v5142, %v2291
        %v5167 = vadd.f32 %v5147, %v2292
        %v5168 = vadd.f32 %v5150, %v2293
        %s5169 = scalar_lea.vmem %s4, 192
        %v5170 = vld [vmem:[%s5169] sm:$0xf]
        %v5171 = vld [vmem:[%s5169 + $0x4] sm:$0xf]
        %v5172 = vld [vmem:[%s5169 + $0x8] sm:$0xf]
        %v5173 = vld [vmem:[%s5169 + $0xc] sm:$0xf]
        %v5174 = vld [vmem:[%s5169 + $0x10] sm:$0xf]
        %v5175 = vld [vmem:[%s5169 + $0x14] sm:$0xf]
        %v5176 = vld [vmem:[%s5169 + $0x18] sm:$0xf]
        %v5177 = vld [vmem:[%s5169 + $0x1c] sm:$0xf]
        %v5178 = vld [vmem:[%s5169 + $0x20] sm:$0xf]
        %v5179 = vld [vmem:[%s5169 + $0x24] sm:$0xf]
        %v5180 = vld [vmem:[%s5169 + $0x28] sm:$0xf]
        %v5181 = vld [vmem:[%s5169 + $0x2c] sm:$0xf]
        %v5182 = vld [vmem:[%s5169 + $0x30] sm:$0xf]
        %v5183 = vld [vmem:[%s5169 + $0x34] sm:$0xf]
        %v5184 = vld [vmem:[%s5169 + $0x38] sm:$0xf]
        %v5185 = vld [vmem:[%s5169 + $0x3c] sm:$0xf]
        %v5186 = vpack.c.bf16 %v5154, %v5153
        %v5187 = vpack.c.bf16 %v5156, %v5155
        %v5188 = vpack.c.bf16 %v5158, %v5157
        %v5189 = vpack.c.bf16 %v5160, %v5159
        %v5190 = vpack.c.bf16 %v5162, %v5161
        %v5191 = vpack.c.bf16 %v5164, %v5163
        %v5192 = vpack.c.bf16 %v5166, %v5165
        %v5193 = vpack.c.bf16 %v5168, %v5167
        %5194 = vset.pattern.permute.xlu0 10
        %5195 = vperm.xlu0 %5194, %v1044
        %v5196 = vpop.permute.xlu0 %5195
        %5198 = vset.pattern.permute.xlu0 10
        %5199 = vperm.xlu0 %5198, %v1045
        %v5200 = vpop.permute.xlu0 %5199
        %5202 = vset.pattern.permute.xlu0 10
        %5203 = vperm.xlu0 %5202, %v1046
        %v5204 = vpop.permute.xlu0 %5203
        %5206 = vset.pattern.permute.xlu0 10
        %5207 = vperm.xlu0 %5206, %v1047
        %v5208 = vpop.permute.xlu0 %5207
        %5210 = vset.pattern.permute.xlu0 10
        %5211 = vperm.xlu0 %5210, %v1048
        %v5212 = vpop.permute.xlu0 %5211
        %5214 = vset.pattern.permute.xlu0 10
        %5215 = vperm.xlu0 %5214, %v1049
        %v5216 = vpop.permute.xlu0 %5215
        %5218 = vset.pattern.permute.xlu0 10
        %5219 = vperm.xlu0 %5218, %v1050
        %v5220 = vpop.permute.xlu0 %5219
        %5222 = vset.pattern.permute.xlu0 10
        %5223 = vperm.xlu0 %5222, %v1051
        %v5224 = vpop.permute.xlu0 %5223
        %5226 = vset.pattern.permute.xlu0 10
        %5227 = vperm.xlu0 %5226, %v1052
        %v5228 = vpop.permute.xlu0 %5227
        %5230 = vset.pattern.permute.xlu0 10
        %5231 = vperm.xlu0 %5230, %v1053
        %v5232 = vpop.permute.xlu0 %5231
        %5234 = vset.pattern.permute.xlu0 10
        %5235 = vperm.xlu0 %5234, %v1054
        %v5236 = vpop.permute.xlu0 %5235
        %5238 = vset.pattern.permute.xlu0 10
        %5239 = vperm.xlu0 %5238, %v1055
        %v5240 = vpop.permute.xlu0 %5239
        %5242 = vset.pattern.permute.xlu0 10
        %5243 = vperm.xlu0 %5242, %v1056
        %v5244 = vpop.permute.xlu0 %5243
        %5246 = vset.pattern.permute.xlu0 10
        %5247 = vperm.xlu0 %5246, %v1057
        %v5248 = vpop.permute.xlu0 %5247
        %5250 = vset.pattern.permute.xlu0 10
        %5251 = vperm.xlu0 %5250, %v1058
        %v5252 = vpop.permute.xlu0 %5251
        %5254 = vset.pattern.permute.xlu0 10
        %5255 = vperm.xlu0 %5254, %v1059
        %v5256 = vpop.permute.xlu0 %5255
        %v5274 = vunpack.c.l.b16 %v5170
        %v5275 = vunpack.c.l.b16 %v5171
        %v5276 = vunpack.c.l.b16 %v5172
        %v5277 = vunpack.c.l.b16 %v5173
        %v5278 = vunpack.c.l.b16 %v5174
        %v5279 = vunpack.c.l.b16 %v5175
        %v5280 = vunpack.c.l.b16 %v5176
        %v5281 = vunpack.c.l.b16 %v5177
        %v5282 = vunpack.c.l.b16 %v5178
        %v5283 = vunpack.c.l.b16 %v5179
        %v5284 = vunpack.c.l.b16 %v5180
        %v5285 = vunpack.c.l.b16 %v5181
        %v5286 = vunpack.c.l.b16 %v5182
        %v5287 = vunpack.c.l.b16 %v5183
        %v5288 = vunpack.c.l.b16 %v5184
        %v5289 = vunpack.c.l.b16 %v5185
        %v5290 = vpack.c.b16 %v5275, %v5274
        %v5291 = vpack.c.b16 %v5277, %v5276
        %v5292 = vpack.c.b16 %v5279, %v5278
        %v5293 = vpack.c.b16 %v5281, %v5280
        %v5294 = vpack.c.b16 %v5283, %v5282
        %v5295 = vpack.c.b16 %v5285, %v5284
        %v5296 = vpack.c.b16 %v5287, %v5286
        %v5297 = vpack.c.b16 %v5289, %v5288
        %5306 = vmatprep.subr.bf16.mxu0 0
        %5307 = vmatpush1.bf16.msra.mxu0 %v5193
        %5308 = vmatprep.subr.bf16.mxu0 0
        %5309 = vmatpush1.bf16.msra.mxu0 %v5192
        %5310 = vmatprep.subr.bf16.mxu0 0
        %5311 = vmatpush1.bf16.msra.mxu0 %v5191
        %5312 = vmatprep.subr.bf16.mxu0 0
        %5313 = vmatpush1.bf16.msra.mxu0 %v5190
        %5314 = vmatprep.subr.bf16.mxu0 0
        %5315 = vmatpush1.bf16.msra.mxu0 %v5189
        %5316 = vmatprep.subr.bf16.mxu0 0
        %5317 = vmatpush1.bf16.msra.mxu0 %v5188
        %5318 = vmatprep.subr.bf16.mxu0 0
        %5319 = vmatpush1.bf16.msra.mxu0 %v5187
        %5320 = vmatprep.subr.bf16.mxu0 0
        %5321 = vmatpush1.bf16.msra.mxu0 %v5186
        %5322 = vmatprep.subr.bf16.mxu0 0
        %5323 = vmatpush2.bf16.msra.mxu0 0
        %5324 = vmatprep.subr.bf16.mxu0 0
        %5325 = vmatpush2.bf16.msra.mxu0 0
        %5326 = vmatprep.subr.bf16.mxu0 0
        %5327 = vmatpush2.bf16.msra.mxu0 0
        %5328 = vmatprep.subr.bf16.mxu0 0
        %5329 = vmatpush2.bf16.msra.mxu0 0
        %5330 = vmatprep.subr.bf16.mxu0 0
        %5331 = vmatpush2.bf16.msra.mxu0 0
        %5332 = vmatprep.subr.bf16.mxu0 0
        %5333 = vmatpush2.bf16.msra.mxu0 0
        %5334 = vmatprep.subr.bf16.mxu0 0
        %5335 = vmatpush2.bf16.msra.mxu0 0
        %5336 = vmatprep.subr.bf16.mxu0 0
        %5337 = vmatpush2.bf16.msra.mxu0 0
        %5338 = vmatprep.mubr.bf16.mxu0 0
        %5339 = vmatmul.mubr.bf16.gmra.mxu0 %v5290
        %v5340 = vpop.f32.mrf.mxu0
        %v5341 = vadd.f32 %v5196, %v5340
        %v5342 = vpop.f32.mrf.mxu0
        %v5343 = vpop.f32.mrf.mxu0
        %v5344 = vadd.f32 %v5200, %v5343
        %v5345 = vpop.f32.mrf.mxu0
        %5346 = vmatprep.mubr.bf16.mxu0 0
        %5347 = vmatmul.mubr.bf16.gmra.mxu0 %v5291
        %v5348 = vpop.f32.mrf.mxu0
        %v5349 = vadd.f32 %v5204, %v5348
        %v5350 = vpop.f32.mrf.mxu0
        %v5351 = vpop.f32.mrf.mxu0
        %v5352 = vadd.f32 %v5208, %v5351
        %v5353 = vpop.f32.mrf.mxu0
        %5354 = vmatprep.mubr.bf16.mxu0 0
        %5355 = vmatmul.mubr.bf16.gmra.mxu0 %v5292
        %v5356 = vpop.f32.mrf.mxu0
        %v5357 = vadd.f32 %v5212, %v5356
        %v5358 = vpop.f32.mrf.mxu0
        %v5359 = vpop.f32.mrf.mxu0
        %v5360 = vadd.f32 %v5216, %v5359
        %v5361 = vpop.f32.mrf.mxu0
        %5362 = vmatprep.mubr.bf16.mxu0 0
        %5363 = vmatmul.mubr.bf16.gmra.mxu0 %v5293
        %v5364 = vpop.f32.mrf.mxu0
        %v5365 = vadd.f32 %v5220, %v5364
        %v5366 = vpop.f32.mrf.mxu0
        %v5367 = vpop.f32.mrf.mxu0
        %v5368 = vadd.f32 %v5224, %v5367
        %v5369 = vpop.f32.mrf.mxu0
        %5370 = vmatprep.mubr.bf16.mxu0 0
        %5371 = vmatmul.mubr.bf16.gmra.mxu0 %v5294
        %v5372 = vpop.f32.mrf.mxu0
        %v5373 = vadd.f32 %v5228, %v5372
        %v5374 = vpop.f32.mrf.mxu0
        %v5375 = vpop.f32.mrf.mxu0
        %v5376 = vadd.f32 %v5232, %v5375
        %v5377 = vpop.f32.mrf.mxu0
        %5378 = vmatprep.mubr.bf16.mxu0 0
        %5379 = vmatmul.mubr.bf16.gmra.mxu0 %v5295
        %v5380 = vpop.f32.mrf.mxu0
        %v5381 = vadd.f32 %v5236, %v5380
        %v5382 = vpop.f32.mrf.mxu0
        %v5383 = vpop.f32.mrf.mxu0
        %v5384 = vadd.f32 %v5240, %v5383
        %v5385 = vpop.f32.mrf.mxu0
        %5386 = vmatprep.mubr.bf16.mxu0 0
        %5387 = vmatmul.mubr.bf16.gmra.mxu0 %v5296
        %v5388 = vpop.f32.mrf.mxu0
        %v5389 = vadd.f32 %v5244, %v5388
        %v5390 = vpop.f32.mrf.mxu0
        %v5391 = vpop.f32.mrf.mxu0
        %v5392 = vadd.f32 %v5248, %v5391
        %v5393 = vpop.f32.mrf.mxu0
        %5394 = vmatprep.mubr.bf16.mxu0 0
        %5395 = vmatmul.mubr.bf16.gmra.mxu0 %v5297
        %v5396 = vpop.f32.mrf.mxu0
        %v5397 = vadd.f32 %v5252, %v5396
        %v5398 = vpop.f32.mrf.mxu0
        %v5399 = vpop.f32.mrf.mxu0
        %v5400 = vadd.f32 %v5256, %v5399
        %v5401 = vpop.f32.mrf.mxu0
        %5402 = vdwg.mxu0
        %v5403 = vadd.f32 %v5341, %v828
        %v5404 = vadd.f32 %v5344, %v829
        %v5405 = vadd.f32 %v5349, %v830
        %v5406 = vadd.f32 %v5352, %v831
        %v5407 = vadd.f32 %v5357, %v832
        %v5408 = vadd.f32 %v5360, %v833
        %v5409 = vadd.f32 %v5365, %v834
        %v5410 = vadd.f32 %v5368, %v835
        %v5411 = vadd.f32 %v5373, %v836
        %v5412 = vadd.f32 %v5376, %v837
        %v5413 = vadd.f32 %v5381, %v838
        %v5414 = vadd.f32 %v5384, %v839
        %v5415 = vadd.f32 %v5389, %v840
        %v5416 = vadd.f32 %v5392, %v841
        %v5417 = vadd.f32 %v5397, %v842
        %v5418 = vadd.f32 %v5400, %v843
        %5419 = vst [vmem:[%s281] sm:$0xff] %v5403
        %5420 = vst [vmem:[%s281 + $0x8] sm:$0xff] %v5404
        %5421 = vst [vmem:[%s281 + $0x10] sm:$0xff] %v5405
        %5422 = vst [vmem:[%s281 + $0x18] sm:$0xff] %v5406
        %5423 = vst [vmem:[%s281 + $0x20] sm:$0xff] %v5407
        %5424 = vst [vmem:[%s281 + $0x28] sm:$0xff] %v5408
        %5425 = vst [vmem:[%s281 + $0x30] sm:$0xff] %v5409
        %5426 = vst [vmem:[%s281 + $0x38] sm:$0xff] %v5410
        %5427 = vst [vmem:[%s281 + $0x40] sm:$0xff] %v5411
        %5428 = vst [vmem:[%s281 + $0x48] sm:$0xff] %v5412
        %5429 = vst [vmem:[%s281 + $0x50] sm:$0xff] %v5413
        %5430 = vst [vmem:[%s281 + $0x58] sm:$0xff] %v5414
        %5431 = vst [vmem:[%s281 + $0x60] sm:$0xff] %v5415
        %5432 = vst [vmem:[%s281 + $0x68] sm:$0xff] %v5416
        %5433 = vst [vmem:[%s281 + $0x70] sm:$0xff] %v5417
        %5434 = vst [vmem:[%s281 + $0x78] sm:$0xff] %v5418
        %s5435 = sand.u32 %s192, 1
        %s5436 = sand.u32 %s192, 1
        %s5437 = smul.addr %s5436, 128
        %s5438 = scalar_lea.vmem [#allocation3], %s5437
        // Predicated region
        $region53: #{contextual_attention_block.1} parent=47 // pred_check
          %p5439 = pneg %p202
        $region54: #{contextual_attention_block.1} parent=47 // pred_check_branch
          %5441 = sbr.rel (%p5439) target = $region56
        $region55: #{contextual_attention_block.1} parent=47 // pred_region
          %s5442 = smul.addr %s22, 32
          %s5443 = sadd.s32 %s23, %s5442
          %s5444 = smul.addr %s5443, 8
          %s5445 = scalar_lea.vmem %s7, %s5444
          // Predicated region
          $region57: #{contextual_attention_block.1} parent=55 // pred_check
            _
          $region58: #{contextual_attention_block.1} parent=55 // pred_check_branch
            %5447 = sbr.rel (0) target = $region60
          $region59: #{contextual_attention_block.1} parent=55 // pred_region
            // Predicated region
            $region61: #{contextual_attention_block.1} parent=59 // pred_check
              _
            $region62: #{contextual_attention_block.1} parent=59 // pred_check_branch
              %5449 = sbr.rel (0) target = $region64
            $region63: #{contextual_attention_block.1} parent=59 // pred_region
              // Predicated region
              $region76: #{contextual_attention_block.1} parent=63 // pred_check
                _
              $region77: #{contextual_attention_block.1} parent=63 // pred_check_branch
                %5495 = sbr.rel (0) target = $region79
              $region78: #{contextual_attention_block.1} parent=63 // pred_region
                loop: start=0, step=1, limit=1
                $region80: #{contextual_attention_block.1} parent=78 // loop_pre_header
                  _
                $region81: #{contextual_attention_block.1} parent=78 // loop_header
                  %s5497 = sphi 0, %s5501
                  %p5498 = scmp.ge.s32.totalorder %s5497, 1
                  %s5502 = sphi %s5438, %s5438
                  %s5503 = sphi %s5445, %s5445
                $region82: #{contextual_attention_block.1} parent=78 // loop_header_branch
                  %5500 = sbr.rel (%p5498) target = $region86
                $region83: #{contextual_attention_block.1} parent=78 // loop_body
                  %v5504 = vld [vmem:[%s5502] sm:$0xff]
                  %5505 = vst [vmem:[%s5503] sm:$0xff] %v5504
                  %v5506 = vld [vmem:[%s5502 + $0x8] sm:$0xff]
                  %5507 = vst [vmem:[%s5503 + $0x10] sm:$0xff] %v5506
                  %v5508 = vld [vmem:[%s5502 + $0x10] sm:$0xff]
                  %5509 = vst [vmem:[%s5503 + $0x20] sm:$0xff] %v5508
                  %v5510 = vld [vmem:[%s5502 + $0x18] sm:$0xff]
                  %5511 = vst [vmem:[%s5503 + $0x30] sm:$0xff] %v5510
                  %v5512 = vld [vmem:[%s5502 + $0x20] sm:$0xff]
                  %5513 = vst [vmem:[%s5503 + $0x40] sm:$0xff] %v5512
                  %v5514 = vld [vmem:[%s5502 + $0x28] sm:$0xff]
                  %5515 = vst [vmem:[%s5503 + $0x50] sm:$0xff] %v5514
                  %v5516 = vld [vmem:[%s5502 + $0x30] sm:$0xff]
                  %5517 = vst [vmem:[%s5503 + $0x60] sm:$0xff] %v5516
                  %v5518 = vld [vmem:[%s5502 + $0x38] sm:$0xff]
                  %5519 = vst [vmem:[%s5503 + $0x70] sm:$0xff] %v5518
                  %v5520 = vld [vmem:[%s5502 + $0x40] sm:$0xff]
                  %5521 = vst [vmem:[%s5503 + $0x80] sm:$0xff] %v5520
                  %v5522 = vld [vmem:[%s5502 + $0x48] sm:$0xff]
                  %5523 = vst [vmem:[%s5503 + $0x90] sm:$0xff] %v5522
                  %v5524 = vld [vmem:[%s5502 + $0x50] sm:$0xff]
                  %5525 = vst [vmem:[%s5503 + $0xa0] sm:$0xff] %v5524
                  %v5526 = vld [vmem:[%s5502 + $0x58] sm:$0xff]
                  %5527 = vst [vmem:[%s5503 + $0xb0] sm:$0xff] %v5526
                  %v5528 = vld [vmem:[%s5502 + $0x60] sm:$0xff]
                  %5529 = vst [vmem:[%s5503 + $0xc0] sm:$0xff] %v5528
                  %v5530 = vld [vmem:[%s5502 + $0x68] sm:$0xff]
                  %5531 = vst [vmem:[%s5503 + $0xd0] sm:$0xff] %v5530
                  %v5532 = vld [vmem:[%s5502 + $0x70] sm:$0xff]
                  %5533 = vst [vmem:[%s5503 + $0xe0] sm:$0xff] %v5532
                  %v5534 = vld [vmem:[%s5502 + $0x78] sm:$0xff]
                  %5535 = vst [vmem:[%s5503 + $0xf0] sm:$0xff] %v5534
                $region84: #{contextual_attention_block.1} parent=78 // loop_footer
                  %s5501 = sadd.s32 1, %s5497
                $region85: #{contextual_attention_block.1} parent=78 // loop_footer_branch
                  %5496 = sbr.rel target = $region81
                $region86: #{contextual_attention_block.1} parent=78 // loop_exit
                  _
              $region79: #{contextual_attention_block.1} parent=63 // pred_fallthru
                _
              // Predicated region
              $region87: #{contextual_attention_block.1} parent=63 // pred_check
                _
              $region88: #{contextual_attention_block.1} parent=63 // pred_check_branch
                %5537 = sbr.rel target = $region90
              $region89: #{contextual_attention_block.1} parent=63 // pred_region
                _
              $region90: #{contextual_attention_block.1} parent=63 // pred_fallthru
                _
            $region64: #{contextual_attention_block.1} parent=59 // pred_fallthru
              _
            // Predicated region
            $region65: #{contextual_attention_block.1} parent=59 // pred_check
              _
            $region66: #{contextual_attention_block.1} parent=59 // pred_check_branch
              %5451 = sbr.rel target = $region68
            $region67: #{contextual_attention_block.1} parent=59 // pred_region
              %s5453 = ssub.s32 256, 1
              loop: start=0, step=1, limit=1
              $region69: #{contextual_attention_block.1} parent=67 // loop_pre_header
                _
              $region70: #{contextual_attention_block.1} parent=67 // loop_header
                %s5455 = sphi 0, %s5459
                %p5456 = scmp.ge.s32.totalorder %s5455, 1
                %s5460 = sphi %s5438, %s5438
                %s5461 = sphi %s5445, %s5445
              $region71: #{contextual_attention_block.1} parent=67 // loop_header_branch
                %5458 = sbr.rel (%p5456) target = $region75
              $region72: #{contextual_attention_block.1} parent=67 // loop_body
                %v5462 = vld [vmem:[%s5460] sm:%s5453]
                %5463 = vst [vmem:[%s5461] sm:%s5453] %v5462
                %v5464 = vld [vmem:[%s5460 + $0x8] sm:%s5453]
                %5465 = vst [vmem:[%s5461 + $0x10] sm:%s5453] %v5464
                %v5466 = vld [vmem:[%s5460 + $0x10] sm:%s5453]
                %5467 = vst [vmem:[%s5461 + $0x20] sm:%s5453] %v5466
                %v5468 = vld [vmem:[%s5460 + $0x18] sm:%s5453]
                %5469 = vst [vmem:[%s5461 + $0x30] sm:%s5453] %v5468
                %v5470 = vld [vmem:[%s5460 + $0x20] sm:%s5453]
                %5471 = vst [vmem:[%s5461 + $0x40] sm:%s5453] %v5470
                %v5472 = vld [vmem:[%s5460 + $0x28] sm:%s5453]
                %5473 = vst [vmem:[%s5461 + $0x50] sm:%s5453] %v5472
                %v5474 = vld [vmem:[%s5460 + $0x30] sm:%s5453]
                %5475 = vst [vmem:[%s5461 + $0x60] sm:%s5453] %v5474
                %v5476 = vld [vmem:[%s5460 + $0x38] sm:%s5453]
                %5477 = vst [vmem:[%s5461 + $0x70] sm:%s5453] %v5476
                %v5478 = vld [vmem:[%s5460 + $0x40] sm:%s5453]
                %5479 = vst [vmem:[%s5461 + $0x80] sm:%s5453] %v5478
                %v5480 = vld [vmem:[%s5460 + $0x48] sm:%s5453]
                %5481 = vst [vmem:[%s5461 + $0x90] sm:%s5453] %v5480
                %v5482 = vld [vmem:[%s5460 + $0x50] sm:%s5453]
                %5483 = vst [vmem:[%s5461 + $0xa0] sm:%s5453] %v5482
                %v5484 = vld [vmem:[%s5460 + $0x58] sm:%s5453]
                %5485 = vst [vmem:[%s5461 + $0xb0] sm:%s5453] %v5484
                %v5486 = vld [vmem:[%s5460 + $0x60] sm:%s5453]
                %5487 = vst [vmem:[%s5461 + $0xc0] sm:%s5453] %v5486
                %v5488 = vld [vmem:[%s5460 + $0x68] sm:%s5453]
                %5489 = vst [vmem:[%s5461 + $0xd0] sm:%s5453] %v5488
                %v5490 = vld [vmem:[%s5460 + $0x70] sm:%s5453]
                %5491 = vst [vmem:[%s5461 + $0xe0] sm:%s5453] %v5490
                %v5492 = vld [vmem:[%s5460 + $0x78] sm:%s5453]
                %5493 = vst [vmem:[%s5461 + $0xf0] sm:%s5453] %v5492
              $region73: #{contextual_attention_block.1} parent=67 // loop_footer
                %s5459 = sadd.s32 1, %s5455
              $region74: #{contextual_attention_block.1} parent=67 // loop_footer_branch
                %5454 = sbr.rel target = $region70
              $region75: #{contextual_attention_block.1} parent=67 // loop_exit
                _
            $region68: #{contextual_attention_block.1} parent=59 // pred_fallthru
              _
          $region60: #{contextual_attention_block.1} parent=55 // pred_fallthru
            _
          %5538 = vnop
        $region56: #{contextual_attention_block.1} parent=47 // pred_fallthru
          _
      $region48: #{contextual_attention_block.1} parent=5 // pred_fallthru
        _
      %p5539 = scmp.le.s32.totalorder 2, %s13
      // Predicated region
      $region91: #{contextual_attention_block.1} parent=5 // pred_check
        %p5540 = pneg %p5539
      $region92: #{contextual_attention_block.1} parent=5 // pred_check_branch
        %5542 = sbr.rel (%p5540) target = $region94
      $region93: #{contextual_attention_block.1} parent=5 // pred_region
        %s5543 = ssub.s32 %s13, 2
        // Predicated region
        $region95: #{contextual_attention_block.1} parent=93 // pred_check
          %p5544 = pneg %p208
        $region96: #{contextual_attention_block.1} parent=93 // pred_check_branch
          %5546 = sbr.rel (%p5544) target = $region98
        $region97: #{contextual_attention_block.1} parent=93 // pred_region
          %s5547 = sand.u32 %s193, 1
          %s5548 = sand.u32 %s193, 1
          %s5549 = smul.addr %s5548, 128
          %s5550 = scalar_lea.vmem [#allocation3], %s5549
        $region98: #{contextual_attention_block.1} parent=93 // pred_fallthru
          _
      $region94: #{contextual_attention_block.1} parent=5 // pred_fallthru
        _
    $region6: #{contextual_attention_block.1} parent=1 // loop_footer
      %s17 = sadd.s32 1, %s13
    $region7: #{contextual_attention_block.1} parent=1 // loop_footer_branch
      %12 = sbr.rel target = $region3
    $region8: #{contextual_attention_block.1} parent=1 // loop_exit
      _

</llo_original>
